<compile_context>
chip_gen: v7x
topology: tpu7x:2x2x1
jax: 0.10.0
libtpu: 0.0.40
codegen_flags: <defaults>
</compile_context>

<pallas_src>
import jax
import jax.numpy as jnp
from jax import lax
from jax.experimental import pallas as pl
from jax.experimental.pallas import tpu as pltpu

NUM_STEPS = 2  # self.num_steps in the module


def _softmax_last(x):
    m = jnp.max(x, axis=-1, keepdims=True)
    e = jnp.exp(x - m)
    return e * pl.reciprocal(jnp.sum(e, axis=-1, keepdims=True), approx=True)


def _ceil_mult(x, m):
    return ((x + m - 1) // m) * m


def _pad2(x, rows, cols):
    r, c = x.shape
    if r == rows and c == cols:
        return x
    return jnp.pad(x, ((0, rows - r), (0, cols - c)))


# --------------------------------------------------------------------------
# One fused kernel: both hops + follow + hop attention.  State kept in VMEM.
# --------------------------------------------------------------------------
def gfc_fused_kernel(qwh2_ref, mask_ref, heads_ref, msubj_ref, mrel_ref, mobj_ref,
                     wk_ref, bk_ref, whw_ref, bhw_ref, wrel_ref, brel_ref,
                     whop_ref, bhop_ref,
                     escore_ref,
                     hop_ref, dctx_ref, ctx_ref):
    B, _, L = mask_ref.shape

    qwh2 = qwh2_ref[...]                                  # (B*L, H)
    wk, bk = wk_ref[...], bk_ref[...]
    whw, bhw = whw_ref[...], bhw_ref[...]
    wrel, brel = wrel_ref[...], brel_ref[...]
    msubj = msubj_ref[...]                                # (Tp, Ep) bf16
    mrel_m = mrel_ref[...]                                # (Tp, Rp) bf16
    mobj = mobj_ref[...]                                  # (Tp, Ep) bf16

    hop_ref[...] = qwh2                                   # q_word_h_hop <- q_word_h
    last_e = heads_ref[...]                               # (B, Ep) f32

    ctx_list, ent_list = [], []
    for t in range(NUM_STEPS):                            # static unroll (num_steps == 2)
        hop2 = hop_ref[...]                               # old hop, (B*L, H)
        # key_layer over all B*L rows at once (single MXU matmul)
        h_key2 = jnp.dot(hop2, wk, preferred_element_type=jnp.float32) + bk
        if t > 0:
            # highway gate on previous dist-ctx; skipped at t == 0 where z == 0
            dctx2 = dctx_ref[...]
            z2 = jax.nn.sigmoid(
                jnp.dot(dctx2, whw, preferred_element_type=jnp.float32) + bhw)
            zd2 = z2 * dctx2

        for b in range(B):  # TODO(synk): static unroll; use a grid/fori for large B
            lo, hi = b * L, (b + 1) * L
            sl = pl.ds(lo, L)
            qwh_b = qwh2[lo:hi, :]                        # (L, H)
            hop_b = hop2[lo:hi, :]
            hkey_b = h_key2[lo:hi, :]
            mask_b = mask_ref[b]                          # (1, L)

            # q_logits[i, j] = q_word_h[i] . h_key[j]
            logits = lax.dot_general(qwh_b, hkey_b, (((1,), (1,)), ((), ())),
                                     preferred_element_type=jnp.float32)  # (L, L)
            q_dist = _softmax_last(logits)
            q_dist = q_dist * mask_b                      # mask over keys (dim 2)
            q_dist = q_dist * pl.reciprocal(
                jnp.sum(q_dist, axis=-1, keepdims=True) + 1e-6, approx=True)

            hop_ctx = jnp.dot(q_dist, hop_b, preferred_element_type=jnp.float32)
            if t == 0:
                new_hop_b = qwh_b + hop_ctx
                new_dctx_b = hop_ctx
            else:
                zd_b = zd2[lo:hi, :]
                new_hop_b = qwh_b + hop_ctx + zd_b
                new_dctx_b = hop_ctx + zd_b
            hop_ref[sl, :] = new_hop_b
            dctx_ref[sl, :] = new_dctx_b

            # q_word_att: sum over queries, softmax over keys, mask, renormalize
            att = jnp.sum(q_dist, axis=0, keepdims=True)  # (1, L)
            att = _softmax_last(att)
            att = att * mask_b
            att = att * pl.reciprocal(
                jnp.sum(att, axis=-1, keepdims=True) + 1e-6, approx=True)
            ctx_ref[pl.ds(b, 1), :] = jnp.dot(
                att, new_hop_b, preferred_element_type=jnp.float32)       # (1, H)

        ctx_h = ctx_ref[...]                              # (B, H)
        ctx_list.append(ctx_h)
        rel = jax.nn.sigmoid(
            jnp.dot(ctx_h, wrel, preferred_element_type=jnp.float32) + brel)  # (B, Rp)

        # follow(e, r): one-hot matmuls on the MXU, bf16 operands / f32 accumulate.
        e_sub = lax.dot_general(last_e.astype(jnp.bfloat16), msubj,
                                (((1,), (1,)), ((), ())),
                                preferred_element_type=jnp.float32)        # (B, Tp)
        r_rel = lax.dot_general(rel.astype(jnp.bfloat16), mrel_m,
                                (((1,), (1,)), ((), ())),
                                preferred_element_type=jnp.float32)        # (B, Tp)
        x = (e_sub * r_rel).astype(jnp.bfloat16)
        out = jnp.dot(x, mobj, preferred_element_type=jnp.float32)         # (B, Ep)
        # out >= 0 (one-hot matrices x sigmoid probs), so the gt(1)
        # normalization out / (m*out + (1-m)) is exactly a clamp at 1.
        last_e = jnp.minimum(out, 1.0)
        ent_list.append(last_e)

    # Final hop attention: hop_att_layer(ctx_h_history^T), softmax over hops.
    whop, bhop = whop_ref[...], bhop_ref[...]             # (1, H), (1, 1)
    logits = [jnp.sum(c * whop, axis=-1, keepdims=True) + bhop for c in ctx_list]
    lmax = logits[0]
    for lg in logits[1:]:
        lmax = jnp.maximum(lmax, lg)
    exps = [jnp.exp(lg - lmax) for lg in logits]
    denom = exps[0]
    for e in exps[1:]:
        denom = denom + e
    inv = pl.reciprocal(denom, approx=True)
    e_score = ent_list[0] * (exps[0] * inv)
    for t in range(1, NUM_STEPS):
        e_score = e_score + ent_list[t] * (exps[t] * inv)
    escore_ref[...] = e_score


# --------------------------------------------------------------------------
# Wrapper: padding to lane-dense shapes + the single pallas_call.
# --------------------------------------------------------------------------
def gfc_forward(params, heads, q_word_h, attention_mask, msubj, mrel, mobj):
    B, L, H = q_word_h.shape
    E = heads.shape[1]
    R = params['w_rel'].shape[1]
    T = msubj.shape[0]
    Ep, Rp, Tp = _ceil_mult(E, 128), _ceil_mult(R, 128), _ceil_mult(T, 128)

    qwh2 = q_word_h.astype(jnp.float32).reshape(B * L, H)
    mask3 = attention_mask.astype(jnp.float32).reshape(B, 1, L)
    heads_p = _pad2(heads.astype(jnp.float32), B, Ep)
    # Zero-padded one-hot structure matrices; 0/1 entries are exact in bf16.
    msubj_p = _pad2(msubj, Tp, Ep).astype(jnp.bfloat16)
    mrel_p = _pad2(mrel, Tp, Rp).astype(jnp.bfloat16)
    mobj_p = _pad2(mobj, Tp, Ep).astype(jnp.bfloat16)
    wrel_p = _pad2(params['w_rel'], H, Rp)
    brel_p = _pad2(params['b_rel'], 1, Rp)

    inputs = [qwh2, mask3, heads_p, msubj_p, mrel_p, mobj_p,
              params['w_key'], params['b_key'], params['w_hw'], params['b_hw'],
              wrel_p, brel_p, params['w_hop'], params['b_hop']]

    def full_spec(shape):
        n = len(shape)
        return pl.BlockSpec(shape, lambda i, _n=n: (0,) * _n)

    grid_spec = pltpu.PrefetchScalarGridSpec(
        num_scalar_prefetch=0,
        grid=(1,),
        in_specs=[full_spec(x.shape) for x in inputs],
        out_specs=full_spec((B, Ep)),
        scratch_shapes=[pltpu.VMEM((B * L, H), jnp.float32),   # hop state
                        pltpu.VMEM((B * L, H), jnp.float32),   # dist-ctx state
                        pltpu.VMEM((B, H), jnp.float32)],      # per-step ctx_h
    )
    e_score = pl.pallas_call(
        gfc_fused_kernel,
        out_shape=jax.ShapeDtypeStruct((B, Ep), jnp.float32),
        grid_spec=grid_spec,
        compiler_params=pltpu.CompilerParams(dimension_semantics=("arbitrary",)),
    )(*inputs)
    return e_score[:, :E]


# --------------------------------------------------------------------------
# Pure-JAX reference (same math as the torch module, XLA) for a sanity check
# --------------------------------------------------------------------------
def reference_forward(params, heads, q_word_h, attention_mask, msubj, mrel, mobj):
    hi = lax.Precision.HIGHEST
    B, L, H = q_word_h.shape
    mask = attention_mask.astype(jnp.float32)[:, None, :]
    hop = q_word_h
    dctx = jnp.zeros_like(q_word_h)
    last_e = heads
    ctx_list, ent_list = [], []
    for _ in range(NUM_STEPS):
        h_key = jnp.einsum('blh,hk->blk', hop, params['w_key'], precision=hi) + params['b_key']
        logits = jnp.einsum('bih,bjh->bij', q_word_h, h_key, precision=hi)
        q_dist = jax.nn.softmax(logits, axis=2)
        q_dist = q_dist * mask
        q_dist = q_dist / (jnp.sum(q_dist, axis=2, keepdims=True) + 1e-6)
        hop_ctx = jnp.einsum('bij,bjh->bih', q_dist, hop, precision=hi)
        z = jax.nn.sigmoid(
            jnp.einsum('blh,hk->blk', dctx, params['w_hw'], precision=hi) + params['b_hw'])
        zd = z * dctx
        hop = q_word_h + hop_ctx + zd
        dctx = hop_ctx + zd
        att = jnp.sum(q_dist, axis=1, keepdims=True)
        att = jax.nn.softmax(att, axis=2)
        att = att * mask
        att = att / (jnp.sum(att, axis=2, keepdims=True) + 1e-6)
        ctx_h = jnp.einsum('bij,bjh->bih', att, hop, precision=hi)[:, 0, :]
        rel = jax.nn.sigmoid(
            jnp.einsum('bh,hr->br', ctx_h, params['w_rel'], precision=hi) + params['b_rel'][0])
        e_sub = jnp.einsum('be,te->bt', last_e, msubj, precision=hi)
        r_rel = jnp.einsum('br,tr->bt', rel, mrel, precision=hi)
        out = jnp.einsum('bt,te->be', e_sub * r_rel, mobj, precision=hi)
        m = (out > 1.0).astype(jnp.float32)
        last_e = out / (m * out + (1.0 - m))
        ctx_list.append(ctx_h)
        ent_list.append(last_e)
    ctx_stack = jnp.stack(ctx_list, axis=1)
    hop_res = jnp.stack(ent_list, axis=1)
    logit = jnp.einsum('bth,h->bt', ctx_stack, params['w_hop'][0], precision=hi) \
        + params['b_hop'][0, 0]
    attn = jax.nn.softmax(logit, axis=1)
    return jnp.sum(hop_res * attn[:, :, None], axis=1)


def init_params(key, H, R):
    ks = jax.random.split(key, 8)
    s = 0.05
    return dict(
        w_key=s * jax.random.normal(ks[0], (H, H), jnp.float32),   # key_layer.weight^T
        b_key=s * jax.random.normal(ks[1], (1, H), jnp.float32),
        w_hw=s * jax.random.normal(ks[2], (H, H), jnp.float32),    # high_way linear
        b_hw=s * jax.random.normal(ks[3], (1, H), jnp.float32),
        w_rel=s * jax.random.normal(ks[4], (H, R), jnp.float32),   # rel_classifier
        b_rel=s * jax.random.normal(ks[5], (1, R), jnp.float32),
        w_hop=s * jax.random.normal(ks[6], (1, H), jnp.float32),   # hop_att_layer
        b_hop=s * jax.random.normal(ks[7], (1, 1), jnp.float32),
    )


if __name__ == "__main__":
    B, L, H, R, E, T = 2, 8, 128, 16, 64, 96   # batch, seq, hidden, relations, entities, triples
    key = jax.random.PRNGKey(0)
    kq, kh, kt, kp = jax.random.split(key, 4)
    params = init_params(kp, H, R)

    q_word_h = jax.random.normal(kq, (B, L, H), jnp.float32)        # stands in for BERT output
    heads = jax.nn.one_hot(jax.random.randint(kh, (B,), 0, E), E, dtype=jnp.float32)
    lengths = jnp.array([L, 5], dtype=jnp.int32)
    attention_mask = (jnp.arange(L)[None, :] < lengths[:, None]).astype(jnp.float32)

    triples = jnp.stack([
        jax.random.randint(kt, (T,), 0, E),
        jax.random.randint(jax.random.fold_in(kt, 1), (T,), 0, R),
        jax.random.randint(jax.random.fold_in(kt, 2), (T,), 0, E)], axis=1)
    msubj = jax.nn.one_hot(triples[:, 0], E, dtype=jnp.float32)     # (T, E)
    mrel = jax.nn.one_hot(triples[:, 1], R, dtype=jnp.float32)      # (T, R)
    mobj = jax.nn.one_hot(triples[:, 2], E, dtype=jnp.float32)      # (T, E)

    e_score = gfc_forward(params, heads, q_word_h, attention_mask, msubj, mrel, mobj)
    e_score = jax.block_until_ready(e_score)

    ref = reference_forward(params, heads, q_word_h, attention_mask, msubj, mrel, mobj)
    assert e_score.shape == (B, E)
    assert bool(jnp.all(jnp.isfinite(e_score)))
    # tolerance accounts for bf16 follow() operands + approx-EUP reciprocals
    assert bool(jnp.allclose(e_score, ref, rtol=2e-2, atol=2e-2))
    print("KERNEL_OK")
</pallas_src>

<mosaic_0001>
module attributes {stable_mosaic.version = 11 : i64} {
  func.func @gfc_fused_kernel(%arg0: i32, %arg1: memref<16x128xf32, #tpu.memory_space<vmem>>, %arg2: memref<2x1x8xf32, #tpu.memory_space<vmem>>, %arg3: memref<2x128xf32, #tpu.memory_space<vmem>>, %arg4: memref<128x128xbf16, #tpu.memory_space<vmem>>, %arg5: memref<128x128xbf16, #tpu.memory_space<vmem>>, %arg6: memref<128x128xbf16, #tpu.memory_space<vmem>>, %arg7: memref<128x128xf32, #tpu.memory_space<vmem>>, %arg8: memref<1x128xf32, #tpu.memory_space<vmem>>, %arg9: memref<128x128xf32, #tpu.memory_space<vmem>>, %arg10: memref<1x128xf32, #tpu.memory_space<vmem>>, %arg11: memref<128x128xf32, #tpu.memory_space<vmem>>, %arg12: memref<1x128xf32, #tpu.memory_space<vmem>>, %arg13: memref<1x128xf32, #tpu.memory_space<vmem>>, %arg14: memref<1x1xf32, #tpu.memory_space<vmem>>, %arg15: memref<2x128xf32, #tpu.memory_space<vmem>>, %arg16: memref<16x128xf32, #tpu.memory_space<vmem>>, %arg17: memref<16x128xf32, #tpu.memory_space<vmem>>, %arg18: memref<2x128xf32, #tpu.memory_space<vmem>>) attributes {dimension_semantics = [#tpu.dimension_semantics<arbitrary>], iteration_bounds = array<i64: 1>, scalar_prefetch = 0 : i64, scratch_operands = 3 : i64, tpu.core_type = #tpu.core_type<tc>, window_params = [{pipeline_mode = #tpu.pipeline_mode<synchronous>, transform_indices = @transform_0, window_bounds = array<i64: 16, 128>}, {pipeline_mode = #tpu.pipeline_mode<synchronous>, transform_indices = @transform_1, window_bounds = array<i64: 2, 1, 8>}, {pipeline_mode = #tpu.pipeline_mode<synchronous>, transform_indices = @transform_2, window_bounds = array<i64: 2, 128>}, {pipeline_mode = #tpu.pipeline_mode<synchronous>, transform_indices = @transform_3, window_bounds = array<i64: 128, 128>}, {pipeline_mode = #tpu.pipeline_mode<synchronous>, transform_indices = @transform_4, window_bounds = array<i64: 128, 128>}, {pipeline_mode = #tpu.pipeline_mode<synchronous>, transform_indices = @transform_5, window_bounds = array<i64: 128, 128>}, {pipeline_mode = #tpu.pipeline_mode<synchronous>, transform_indices = @transform_6, window_bounds = array<i64: 128, 128>}, {pipeline_mode = #tpu.pipeline_mode<synchronous>, transform_indices = @transform_7, window_bounds = array<i64: 1, 128>}, {pipeline_mode = #tpu.pipeline_mode<synchronous>, transform_indices = @transform_8, window_bounds = array<i64: 128, 128>}, {pipeline_mode = #tpu.pipeline_mode<synchronous>, transform_indices = @transform_9, window_bounds = array<i64: 1, 128>}, {pipeline_mode = #tpu.pipeline_mode<synchronous>, transform_indices = @transform_10, window_bounds = array<i64: 128, 128>}, {pipeline_mode = #tpu.pipeline_mode<synchronous>, transform_indices = @transform_11, window_bounds = array<i64: 1, 128>}, {pipeline_mode = #tpu.pipeline_mode<synchronous>, transform_indices = @transform_12, window_bounds = array<i64: 1, 128>}, {pipeline_mode = #tpu.pipeline_mode<synchronous>, transform_indices = @transform_13, window_bounds = array<i64: 1, 1>}, {pipeline_mode = #tpu.pipeline_mode<synchronous>, transform_indices = @transform_14, window_bounds = array<i64: 2, 128>}]} {
    %c0 = arith.constant 0 : index
    %c0_0 = arith.constant 0 : index
    %0 = vector.load %arg1[%c0, %c0_0] : memref<16x128xf32, #tpu.memory_space<vmem>>, vector<16x128xf32>
    %c0_1 = arith.constant 0 : index
    %c0_2 = arith.constant 0 : index
    %1 = vector.load %arg7[%c0_1, %c0_2] : memref<128x128xf32, #tpu.memory_space<vmem>>, vector<128x128xf32>
    %c0_3 = arith.constant 0 : index
    %c0_4 = arith.constant 0 : index
    %2 = vector.load %arg8[%c0_3, %c0_4] : memref<1x128xf32, #tpu.memory_space<vmem>>, vector<1x128xf32>
    %c0_5 = arith.constant 0 : index
    %c0_6 = arith.constant 0 : index
    %3 = vector.load %arg9[%c0_5, %c0_6] : memref<128x128xf32, #tpu.memory_space<vmem>>, vector<128x128xf32>
    %c0_7 = arith.constant 0 : index
    %c0_8 = arith.constant 0 : index
    %4 = vector.load %arg10[%c0_7, %c0_8] : memref<1x128xf32, #tpu.memory_space<vmem>>, vector<1x128xf32>
    %c0_9 = arith.constant 0 : index
    %c0_10 = arith.constant 0 : index
    %5 = vector.load %arg11[%c0_9, %c0_10] : memref<128x128xf32, #tpu.memory_space<vmem>>, vector<128x128xf32>
    %c0_11 = arith.constant 0 : index
    %c0_12 = arith.constant 0 : index
    %6 = vector.load %arg12[%c0_11, %c0_12] : memref<1x128xf32, #tpu.memory_space<vmem>>, vector<1x128xf32>
    %c0_13 = arith.constant 0 : index
    %c0_14 = arith.constant 0 : index
    %7 = vector.load %arg4[%c0_13, %c0_14] : memref<128x128xbf16, #tpu.memory_space<vmem>>, vector<128x128xbf16>
    %c0_15 = arith.constant 0 : index
    %c0_16 = arith.constant 0 : index
    %8 = vector.load %arg5[%c0_15, %c0_16] : memref<128x128xbf16, #tpu.memory_space<vmem>>, vector<128x128xbf16>
    %c0_17 = arith.constant 0 : index
    %c0_18 = arith.constant 0 : index
    %9 = vector.load %arg6[%c0_17, %c0_18] : memref<128x128xbf16, #tpu.memory_space<vmem>>, vector<128x128xbf16>
    %c0_19 = arith.constant 0 : index
    %c0_20 = arith.constant 0 : index
    %10 = vector.load %arg16[%c0_19, %c0_20] : memref<16x128xf32, #tpu.memory_space<vmem>>, vector<16x128xf32>
    tpu.vector_store %arg16[%c0_19, %c0_20], %0 {strides = array<i32>} : memref<16x128xf32, #tpu.memory_space<vmem>>, vector<16x128xf32>,
    %c0_21 = arith.constant 0 : index
    %c0_22 = arith.constant 0 : index
    %11 = vector.load %arg3[%c0_21, %c0_22] : memref<2x128xf32, #tpu.memory_space<vmem>>, vector<2x128xf32>
    %c0_23 = arith.constant 0 : index
    %c0_24 = arith.constant 0 : index
    %12 = vector.load %arg16[%c0_23, %c0_24] : memref<16x128xf32, #tpu.memory_space<vmem>>, vector<16x128xf32>
    %cst = arith.constant dense<0.000000e+00> : vector<16x128xf32>
    %13 = tpu.matmul %12, %1, %cst {dimension_numbers = #tpu.dot_dimension_numbers<[1], [0], [0], [1], [0, 0, 1, 1], [], []>} : vector<16x128xf32>, vector<128x128xf32>, vector<16x128xf32> -> vector<16x128xf32>
    %14 = vector.broadcast %2 : vector<1x128xf32> to vector<16x128xf32>
    %15 = arith.addf %13, %14 : vector<16x128xf32>
    %16 = vector.extract_strided_slice %0 {offsets = [0, 0], sizes = [8, 128], strides = [1, 1]} : vector<16x128xf32> to vector<8x128xf32>
    %17 = vector.extract_strided_slice %12 {offsets = [0, 0], sizes = [8, 128], strides = [1, 1]} : vector<16x128xf32> to vector<8x128xf32>
    %18 = vector.extract_strided_slice %15 {offsets = [0, 0], sizes = [8, 128], strides = [1, 1]} : vector<16x128xf32> to vector<8x128xf32>
    %c0_25 = arith.constant 0 : index
    %c0_26 = arith.constant 0 : index
    %c0_27 = arith.constant 0 : index
    %19 = vector.load %arg2[%c0_25, %c0_26, %c0_27] : memref<2x1x8xf32, #tpu.memory_space<vmem>>, vector<1x1x8xf32>
    %20 = vector.shape_cast %19 : vector<1x1x8xf32> to vector<1x8xf32>
    %cst_28 = arith.constant dense<0.000000e+00> : vector<8x8xf32>
    %21 = tpu.matmul %16, %18, %cst_28 {dimension_numbers = #tpu.dot_dimension_numbers<[1], [1], [0], [0], [0, 0, 1, 0], [], []>} : vector<8x128xf32>, vector<8x128xf32>, vector<8x8xf32> -> vector<8x8xf32>
    %cst_29 = arith.constant dense<0xFF800000> : vector<8xf32>
    %22 = vector.multi_reduction <maximumf>, %21, %cst_29 [1] : vector<8x8xf32> to vector<8xf32>
    %23 = vector.shape_cast %22 : vector<8xf32> to vector<8x1xf32>
    %24 = vector.broadcast %23 : vector<8x1xf32> to vector<8x8xf32>
    %25 = arith.subf %21, %24 : vector<8x8xf32>
    %26 = math.exp %25 : vector<8x8xf32>
    %cst_30 = arith.constant dense<0.000000e+00> : vector<8xf32>
    %27 = vector.multi_reduction <add>, %26, %cst_30 [1] : vector<8x8xf32> to vector<8xf32>
    %28 = vector.shape_cast %27 : vector<8xf32> to vector<8x1xf32>
    %29 = tpu.reciprocal %28 {approx = true} : vector<8x1xf32> -> vector<8x1xf32>
    %30 = vector.broadcast %29 : vector<8x1xf32> to vector<8x8xf32>
    %31 = arith.mulf %26, %30 : vector<8x8xf32>
    %32 = vector.broadcast %20 : vector<1x8xf32> to vector<8x8xf32>
    %33 = arith.mulf %31, %32 : vector<8x8xf32>
    %cst_31 = arith.constant dense<0.000000e+00> : vector<8xf32>
    %34 = vector.multi_reduction <add>, %33, %cst_31 [1] : vector<8x8xf32> to vector<8xf32>
    %35 = vector.shape_cast %34 : vector<8xf32> to vector<8x1xf32>
    %cst_32 = arith.constant 9.99999997E-7 : f32
    %36 = vector.broadcast %cst_32 : f32 to vector<8x1xf32>
    %37 = arith.addf %35, %36 : vector<8x1xf32>
    %38 = tpu.reciprocal %37 {approx = true} : vector<8x1xf32> -> vector<8x1xf32>
    %39 = vector.broadcast %38 : vector<8x1xf32> to vector<8x8xf32>
    %40 = arith.mulf %33, %39 : vector<8x8xf32>
    %cst_33 = arith.constant dense<0.000000e+00> : vector<8x128xf32>
    %41 = tpu.matmul %40, %17, %cst_33 {dimension_numbers = #tpu.dot_dimension_numbers<[1], [0], [0], [1], [0, 0, 1, 1], [], []>} : vector<8x8xf32>, vector<8x128xf32>, vector<8x128xf32> -> vector<8x128xf32>
    %42 = arith.addf %16, %41 : vector<8x128xf32>
    %c0_34 = arith.constant 0 : index
    %c0_35 = arith.constant 0 : index
    %43 = vector.load %arg16[%c0_34, %c0_35] : memref<16x128xf32, #tpu.memory_space<vmem>>, vector<8x128xf32>
    tpu.vector_store %arg16[%c0_34, %c0_35], %42 {strides = array<i32>} : memref<16x128xf32, #tpu.memory_space<vmem>>, vector<8x128xf32>,
    %c0_36 = arith.constant 0 : index
    %c0_37 = arith.constant 0 : index
    %44 = vector.load %arg17[%c0_36, %c0_37] : memref<16x128xf32, #tpu.memory_space<vmem>>, vector<8x128xf32>
    tpu.vector_store %arg17[%c0_36, %c0_37], %41 {strides = array<i32>} : memref<16x128xf32, #tpu.memory_space<vmem>>, vector<8x128xf32>,
    %cst_38 = arith.constant dense<0.000000e+00> : vector<8xf32>
    %45 = vector.multi_reduction <add>, %40, %cst_38 [0] : vector<8x8xf32> to vector<8xf32>
    %46 = vector.shape_cast %45 : vector<8xf32> to vector<1x8xf32>
    %cst_39 = arith.constant dense<0xFF800000> : vector<1xf32>
    %47 = vector.multi_reduction <maximumf>, %46, %cst_39 [1] : vector<1x8xf32> to vector<1xf32>
    %48 = vector.shape_cast %47 : vector<1xf32> to vector<1x1xf32>
    %49 = vector.broadcast %48 : vector<1x1xf32> to vector<1x8xf32>
    %50 = arith.subf %46, %49 : vector<1x8xf32>
    %51 = math.exp %50 : vector<1x8xf32>
    %cst_40 = arith.constant dense<0.000000e+00> : vector<1xf32>
    %52 = vector.multi_reduction <add>, %51, %cst_40 [1] : vector<1x8xf32> to vector<1xf32>
    %53 = vector.shape_cast %52 : vector<1xf32> to vector<1x1xf32>
    %54 = tpu.reciprocal %53 {approx = true} : vector<1x1xf32> -> vector<1x1xf32>
    %55 = vector.broadcast %54 : vector<1x1xf32> to vector<1x8xf32>
    %56 = arith.mulf %51, %55 : vector<1x8xf32>
    %57 = arith.mulf %56, %20 : vector<1x8xf32>
    %cst_41 = arith.constant dense<0.000000e+00> : vector<1xf32>
    %58 = vector.multi_reduction <add>, %57, %cst_41 [1] : vector<1x8xf32> to vector<1xf32>
    %59 = vector.shape_cast %58 : vector<1xf32> to vector<1x1xf32>
    %cst_42 = arith.constant 9.99999997E-7 : f32
    %60 = vector.broadcast %cst_42 : f32 to vector<1x1xf32>
    %61 = arith.addf %59, %60 : vector<1x1xf32>
    %62 = tpu.reciprocal %61 {approx = true} : vector<1x1xf32> -> vector<1x1xf32>
    %63 = vector.broadcast %62 : vector<1x1xf32> to vector<1x8xf32>
    %64 = arith.mulf %57, %63 : vector<1x8xf32>
    %cst_43 = arith.constant dense<0.000000e+00> : vector<1x128xf32>
    %65 = tpu.matmul %64, %42, %cst_43 {dimension_numbers = #tpu.dot_dimension_numbers<[1], [0], [0], [1], [0, 0, 1, 1], [], []>} : vector<1x8xf32>, vector<8x128xf32>, vector<1x128xf32> -> vector<1x128xf32>
    %c0_44 = arith.constant 0 : index
    %c0_45 = arith.constant 0 : index
    %66 = vector.load %arg18[%c0_44, %c0_45] : memref<2x128xf32, #tpu.memory_space<vmem>>, vector<1x128xf32>
    tpu.vector_store %arg18[%c0_44, %c0_45], %65 {strides = array<i32>} : memref<2x128xf32, #tpu.memory_space<vmem>>, vector<1x128xf32>,
    %67 = vector.extract_strided_slice %0 {offsets = [8, 0], sizes = [8, 128], strides = [1, 1]} : vector<16x128xf32> to vector<8x128xf32>
    %68 = vector.extract_strided_slice %12 {offsets = [8, 0], sizes = [8, 128], strides = [1, 1]} : vector<16x128xf32> to vector<8x128xf32>
    %69 = vector.extract_strided_slice %15 {offsets = [8, 0], sizes = [8, 128], strides = [1, 1]} : vector<16x128xf32> to vector<8x128xf32>
    %c1 = arith.constant 1 : index
    %c0_46 = arith.constant 0 : index
    %c0_47 = arith.constant 0 : index
    %70 = vector.load %arg2[%c1, %c0_46, %c0_47] : memref<2x1x8xf32, #tpu.memory_space<vmem>>, vector<1x1x8xf32>
    %71 = vector.shape_cast %70 : vector<1x1x8xf32> to vector<1x8xf32>
    %cst_48 = arith.constant dense<0.000000e+00> : vector<8x8xf32>
    %72 = tpu.matmul %67, %69, %cst_48 {dimension_numbers = #tpu.dot_dimension_numbers<[1], [1], [0], [0], [0, 0, 1, 0], [], []>} : vector<8x128xf32>, vector<8x128xf32>, vector<8x8xf32> -> vector<8x8xf32>
    %cst_49 = arith.constant dense<0xFF800000> : vector<8xf32>
    %73 = vector.multi_reduction <maximumf>, %72, %cst_49 [1] : vector<8x8xf32> to vector<8xf32>
    %74 = vector.shape_cast %73 : vector<8xf32> to vector<8x1xf32>
    %75 = vector.broadcast %74 : vector<8x1xf32> to vector<8x8xf32>
    %76 = arith.subf %72, %75 : vector<8x8xf32>
    %77 = math.exp %76 : vector<8x8xf32>
    %cst_50 = arith.constant dense<0.000000e+00> : vector<8xf32>
    %78 = vector.multi_reduction <add>, %77, %cst_50 [1] : vector<8x8xf32> to vector<8xf32>
    %79 = vector.shape_cast %78 : vector<8xf32> to vector<8x1xf32>
    %80 = tpu.reciprocal %79 {approx = true} : vector<8x1xf32> -> vector<8x1xf32>
    %81 = vector.broadcast %80 : vector<8x1xf32> to vector<8x8xf32>
    %82 = arith.mulf %77, %81 : vector<8x8xf32>
    %83 = vector.broadcast %71 : vector<1x8xf32> to vector<8x8xf32>
    %84 = arith.mulf %82, %83 : vector<8x8xf32>
    %cst_51 = arith.constant dense<0.000000e+00> : vector<8xf32>
    %85 = vector.multi_reduction <add>, %84, %cst_51 [1] : vector<8x8xf32> to vector<8xf32>
    %86 = vector.shape_cast %85 : vector<8xf32> to vector<8x1xf32>
    %cst_52 = arith.constant 9.99999997E-7 : f32
    %87 = vector.broadcast %cst_52 : f32 to vector<8x1xf32>
    %88 = arith.addf %86, %87 : vector<8x1xf32>
    %89 = tpu.reciprocal %88 {approx = true} : vector<8x1xf32> -> vector<8x1xf32>
    %90 = vector.broadcast %89 : vector<8x1xf32> to vector<8x8xf32>
    %91 = arith.mulf %84, %90 : vector<8x8xf32>
    %cst_53 = arith.constant dense<0.000000e+00> : vector<8x128xf32>
    %92 = tpu.matmul %91, %68, %cst_53 {dimension_numbers = #tpu.dot_dimension_numbers<[1], [0], [0], [1], [0, 0, 1, 1], [], []>} : vector<8x8xf32>, vector<8x128xf32>, vector<8x128xf32> -> vector<8x128xf32>
    %93 = arith.addf %67, %92 : vector<8x128xf32>
    %c8 = arith.constant 8 : index
    %c0_54 = arith.constant 0 : index
    %94 = vector.load %arg16[%c8, %c0_54] : memref<16x128xf32, #tpu.memory_space<vmem>>, vector<8x128xf32>
    tpu.vector_store %arg16[%c8, %c0_54], %93 {strides = array<i32>} : memref<16x128xf32, #tpu.memory_space<vmem>>, vector<8x128xf32>,
    %c8_55 = arith.constant 8 : index
    %c0_56 = arith.constant 0 : index
    %95 = vector.load %arg17[%c8_55, %c0_56] : memref<16x128xf32, #tpu.memory_space<vmem>>, vector<8x128xf32>
    tpu.vector_store %arg17[%c8_55, %c0_56], %92 {strides = array<i32>} : memref<16x128xf32, #tpu.memory_space<vmem>>, vector<8x128xf32>,
    %cst_57 = arith.constant dense<0.000000e+00> : vector<8xf32>
    %96 = vector.multi_reduction <add>, %91, %cst_57 [0] : vector<8x8xf32> to vector<8xf32>
    %97 = vector.shape_cast %96 : vector<8xf32> to vector<1x8xf32>
    %cst_58 = arith.constant dense<0xFF800000> : vector<1xf32>
    %98 = vector.multi_reduction <maximumf>, %97, %cst_58 [1] : vector<1x8xf32> to vector<1xf32>
    %99 = vector.shape_cast %98 : vector<1xf32> to vector<1x1xf32>
    %100 = vector.broadcast %99 : vector<1x1xf32> to vector<1x8xf32>
    %101 = arith.subf %97, %100 : vector<1x8xf32>
    %102 = math.exp %101 : vector<1x8xf32>
    %cst_59 = arith.constant dense<0.000000e+00> : vector<1xf32>
    %103 = vector.multi_reduction <add>, %102, %cst_59 [1] : vector<1x8xf32> to vector<1xf32>
    %104 = vector.shape_cast %103 : vector<1xf32> to vector<1x1xf32>
    %105 = tpu.reciprocal %104 {approx = true} : vector<1x1xf32> -> vector<1x1xf32>
    %106 = vector.broadcast %105 : vector<1x1xf32> to vector<1x8xf32>
    %107 = arith.mulf %102, %106 : vector<1x8xf32>
    %108 = arith.mulf %107, %71 : vector<1x8xf32>
    %cst_60 = arith.constant dense<0.000000e+00> : vector<1xf32>
    %109 = vector.multi_reduction <add>, %108, %cst_60 [1] : vector<1x8xf32> to vector<1xf32>
    %110 = vector.shape_cast %109 : vector<1xf32> to vector<1x1xf32>
    %cst_61 = arith.constant 9.99999997E-7 : f32
    %111 = vector.broadcast %cst_61 : f32 to vector<1x1xf32>
    %112 = arith.addf %110, %111 : vector<1x1xf32>
    %113 = tpu.reciprocal %112 {approx = true} : vector<1x1xf32> -> vector<1x1xf32>
    %114 = vector.broadcast %113 : vector<1x1xf32> to vector<1x8xf32>
    %115 = arith.mulf %108, %114 : vector<1x8xf32>
    %cst_62 = arith.constant dense<0.000000e+00> : vector<1x128xf32>
    %116 = tpu.matmul %115, %93, %cst_62 {dimension_numbers = #tpu.dot_dimension_numbers<[1], [0], [0], [1], [0, 0, 1, 1], [], []>} : vector<1x8xf32>, vector<8x128xf32>, vector<1x128xf32> -> vector<1x128xf32>
    %c1_63 = arith.constant 1 : index
    %c0_64 = arith.constant 0 : index
    %117 = vector.load %arg18[%c1_63, %c0_64] : memref<2x128xf32, #tpu.memory_space<vmem>>, vector<1x128xf32>
    tpu.vector_store %arg18[%c1_63, %c0_64], %116 {strides = array<i32>} : memref<2x128xf32, #tpu.memory_space<vmem>>, vector<1x128xf32>,
    %c0_65 = arith.constant 0 : index
    %c0_66 = arith.constant 0 : index
    %118 = vector.load %arg18[%c0_65, %c0_66] : memref<2x128xf32, #tpu.memory_space<vmem>>, vector<2x128xf32>
    %cst_67 = arith.constant dense<0.000000e+00> : vector<2x128xf32>
    %119 = tpu.matmul %118, %5, %cst_67 {dimension_numbers = #tpu.dot_dimension_numbers<[1], [0], [0], [1], [0, 0, 1, 1], [], []>} : vector<2x128xf32>, vector<128x128xf32>, vector<2x128xf32> -> vector<2x128xf32>
    %120 = vector.broadcast %6 : vector<1x128xf32> to vector<2x128xf32>
    %121 = arith.addf %119, %120 : vector<2x128xf32>
    %122 = arith.negf %121 : vector<2x128xf32>
    %123 = math.exp %122 : vector<2x128xf32>
    %cst_68 = arith.constant 1.000000e+00 : f32
    %124 = vector.broadcast %cst_68 : f32 to vector<2x128xf32>
    %125 = arith.addf %124, %123 : vector<2x128xf32>
    %126 = arith.divf %124, %125 : vector<2x128xf32>
    %127 = arith.truncf %11 : vector<2x128xf32> to vector<2x128xbf16>
    %cst_69 = arith.constant dense<0.000000e+00> : vector<2x128xf32>
    %128 = tpu.matmul %127, %7, %cst_69 {dimension_numbers = #tpu.dot_dimension_numbers<[1], [1], [0], [0], [0, 0, 1, 0], [], []>} : vector<2x128xbf16>, vector<128x128xbf16>, vector<2x128xf32> -> vector<2x128xf32>
    %129 = arith.truncf %126 : vector<2x128xf32> to vector<2x128xbf16>
    %cst_70 = arith.constant dense<0.000000e+00> : vector<2x128xf32>
    %130 = tpu.matmul %129, %8, %cst_70 {dimension_numbers = #tpu.dot_dimension_numbers<[1], [1], [0], [0], [0, 0, 1, 0], [], []>} : vector<2x128xbf16>, vector<128x128xbf16>, vector<2x128xf32> -> vector<2x128xf32>
    %131 = arith.mulf %128, %130 : vector<2x128xf32>
    %132 = arith.truncf %131 : vector<2x128xf32> to vector<2x128xbf16>
    %cst_71 = arith.constant dense<0.000000e+00> : vector<2x128xf32>
    %133 = tpu.matmul %132, %9, %cst_71 {dimension_numbers = #tpu.dot_dimension_numbers<[1], [0], [0], [1], [0, 0, 1, 1], [], []>} : vector<2x128xbf16>, vector<128x128xbf16>, vector<2x128xf32> -> vector<2x128xf32>
    %cst_72 = arith.constant 1.000000e+00 : f32
    %134 = vector.broadcast %cst_72 : f32 to vector<2x128xf32>
    %135 = arith.minimumf %133, %134 : vector<2x128xf32>
    %c0_73 = arith.constant 0 : index
    %c0_74 = arith.constant 0 : index
    %136 = vector.load %arg16[%c0_73, %c0_74] : memref<16x128xf32, #tpu.memory_space<vmem>>, vector<16x128xf32>
    %cst_75 = arith.constant dense<0.000000e+00> : vector<16x128xf32>
    %137 = tpu.matmul %136, %1, %cst_75 {dimension_numbers = #tpu.dot_dimension_numbers<[1], [0], [0], [1], [0, 0, 1, 1], [], []>} : vector<16x128xf32>, vector<128x128xf32>, vector<16x128xf32> -> vector<16x128xf32>
    %138 = vector.broadcast %2 : vector<1x128xf32> to vector<16x128xf32>
    %139 = arith.addf %137, %138 : vector<16x128xf32>
    %c0_76 = arith.constant 0 : index
    %c0_77 = arith.constant 0 : index
    %140 = vector.load %arg17[%c0_76, %c0_77] : memref<16x128xf32, #tpu.memory_space<vmem>>, vector<16x128xf32>
    %cst_78 = arith.constant dense<0.000000e+00> : vector<16x128xf32>
    %141 = tpu.matmul %140, %3, %cst_78 {dimension_numbers = #tpu.dot_dimension_numbers<[1], [0], [0], [1], [0, 0, 1, 1], [], []>} : vector<16x128xf32>, vector<128x128xf32>, vector<16x128xf32> -> vector<16x128xf32>
    %142 = vector.broadcast %4 : vector<1x128xf32> to vector<16x128xf32>
    %143 = arith.addf %141, %142 : vector<16x128xf32>
    %144 = arith.negf %143 : vector<16x128xf32>
    %145 = math.exp %144 : vector<16x128xf32>
    %cst_79 = arith.constant 1.000000e+00 : f32
    %146 = vector.broadcast %cst_79 : f32 to vector<16x128xf32>
    %147 = arith.addf %146, %145 : vector<16x128xf32>
    %148 = arith.divf %146, %147 : vector<16x128xf32>
    %149 = arith.mulf %148, %140 : vector<16x128xf32>
    %150 = vector.extract_strided_slice %0 {offsets = [0, 0], sizes = [8, 128], strides = [1, 1]} : vector<16x128xf32> to vector<8x128xf32>
    %151 = vector.extract_strided_slice %136 {offsets = [0, 0], sizes = [8, 128], strides = [1, 1]} : vector<16x128xf32> to vector<8x128xf32>
    %152 = vector.extract_strided_slice %139 {offsets = [0, 0], sizes = [8, 128], strides = [1, 1]} : vector<16x128xf32> to vector<8x128xf32>
    %c0_80 = arith.constant 0 : index
    %c0_81 = arith.constant 0 : index
    %c0_82 = arith.constant 0 : index
    %153 = vector.load %arg2[%c0_80, %c0_81, %c0_82] : memref<2x1x8xf32, #tpu.memory_space<vmem>>, vector<1x1x8xf32>
    %154 = vector.shape_cast %153 : vector<1x1x8xf32> to vector<1x8xf32>
    %cst_83 = arith.constant dense<0.000000e+00> : vector<8x8xf32>
    %155 = tpu.matmul %150, %152, %cst_83 {dimension_numbers = #tpu.dot_dimension_numbers<[1], [1], [0], [0], [0, 0, 1, 0], [], []>} : vector<8x128xf32>, vector<8x128xf32>, vector<8x8xf32> -> vector<8x8xf32>
    %cst_84 = arith.constant dense<0xFF800000> : vector<8xf32>
    %156 = vector.multi_reduction <maximumf>, %155, %cst_84 [1] : vector<8x8xf32> to vector<8xf32>
    %157 = vector.shape_cast %156 : vector<8xf32> to vector<8x1xf32>
    %158 = vector.broadcast %157 : vector<8x1xf32> to vector<8x8xf32>
    %159 = arith.subf %155, %158 : vector<8x8xf32>
    %160 = math.exp %159 : vector<8x8xf32>
    %cst_85 = arith.constant dense<0.000000e+00> : vector<8xf32>
    %161 = vector.multi_reduction <add>, %160, %cst_85 [1] : vector<8x8xf32> to vector<8xf32>
    %162 = vector.shape_cast %161 : vector<8xf32> to vector<8x1xf32>
    %163 = tpu.reciprocal %162 {approx = true} : vector<8x1xf32> -> vector<8x1xf32>
    %164 = vector.broadcast %163 : vector<8x1xf32> to vector<8x8xf32>
    %165 = arith.mulf %160, %164 : vector<8x8xf32>
    %166 = vector.broadcast %154 : vector<1x8xf32> to vector<8x8xf32>
    %167 = arith.mulf %165, %166 : vector<8x8xf32>
    %cst_86 = arith.constant dense<0.000000e+00> : vector<8xf32>
    %168 = vector.multi_reduction <add>, %167, %cst_86 [1] : vector<8x8xf32> to vector<8xf32>
    %169 = vector.shape_cast %168 : vector<8xf32> to vector<8x1xf32>
    %cst_87 = arith.constant 9.99999997E-7 : f32
    %170 = vector.broadcast %cst_87 : f32 to vector<8x1xf32>
    %171 = arith.addf %169, %170 : vector<8x1xf32>
    %172 = tpu.reciprocal %171 {approx = true} : vector<8x1xf32> -> vector<8x1xf32>
    %173 = vector.broadcast %172 : vector<8x1xf32> to vector<8x8xf32>
    %174 = arith.mulf %167, %173 : vector<8x8xf32>
    %cst_88 = arith.constant dense<0.000000e+00> : vector<8x128xf32>
    %175 = tpu.matmul %174, %151, %cst_88 {dimension_numbers = #tpu.dot_dimension_numbers<[1], [0], [0], [1], [0, 0, 1, 1], [], []>} : vector<8x8xf32>, vector<8x128xf32>, vector<8x128xf32> -> vector<8x128xf32>
    %176 = vector.extract_strided_slice %149 {offsets = [0, 0], sizes = [8, 128], strides = [1, 1]} : vector<16x128xf32> to vector<8x128xf32>
    %177 = arith.addf %150, %175 : vector<8x128xf32>
    %178 = arith.addf %177, %176 : vector<8x128xf32>
    %179 = arith.addf %175, %176 : vector<8x128xf32>
    %c0_89 = arith.constant 0 : index
    %c0_90 = arith.constant 0 : index
    %180 = vector.load %arg16[%c0_89, %c0_90] : memref<16x128xf32, #tpu.memory_space<vmem>>, vector<8x128xf32>
    tpu.vector_store %arg16[%c0_89, %c0_90], %178 {strides = array<i32>} : memref<16x128xf32, #tpu.memory_space<vmem>>, vector<8x128xf32>,
    %c0_91 = arith.constant 0 : index
    %c0_92 = arith.constant 0 : index
    %181 = vector.load %arg17[%c0_91, %c0_92] : memref<16x128xf32, #tpu.memory_space<vmem>>, vector<8x128xf32>
    tpu.vector_store %arg17[%c0_91, %c0_92], %179 {strides = array<i32>} : memref<16x128xf32, #tpu.memory_space<vmem>>, vector<8x128xf32>,
    %cst_93 = arith.constant dense<0.000000e+00> : vector<8xf32>
    %182 = vector.multi_reduction <add>, %174, %cst_93 [0] : vector<8x8xf32> to vector<8xf32>
    %183 = vector.shape_cast %182 : vector<8xf32> to vector<1x8xf32>
    %cst_94 = arith.constant dense<0xFF800000> : vector<1xf32>
    %184 = vector.multi_reduction <maximumf>, %183, %cst_94 [1] : vector<1x8xf32> to vector<1xf32>
    %185 = vector.shape_cast %184 : vector<1xf32> to vector<1x1xf32>
    %186 = vector.broadcast %185 : vector<1x1xf32> to vector<1x8xf32>
    %187 = arith.subf %183, %186 : vector<1x8xf32>
    %188 = math.exp %187 : vector<1x8xf32>
    %cst_95 = arith.constant dense<0.000000e+00> : vector<1xf32>
    %189 = vector.multi_reduction <add>, %188, %cst_95 [1] : vector<1x8xf32> to vector<1xf32>
    %190 = vector.shape_cast %189 : vector<1xf32> to vector<1x1xf32>
    %191 = tpu.reciprocal %190 {approx = true} : vector<1x1xf32> -> vector<1x1xf32>
    %192 = vector.broadcast %191 : vector<1x1xf32> to vector<1x8xf32>
    %193 = arith.mulf %188, %192 : vector<1x8xf32>
    %194 = arith.mulf %193, %154 : vector<1x8xf32>
    %cst_96 = arith.constant dense<0.000000e+00> : vector<1xf32>
    %195 = vector.multi_reduction <add>, %194, %cst_96 [1] : vector<1x8xf32> to vector<1xf32>
    %196 = vector.shape_cast %195 : vector<1xf32> to vector<1x1xf32>
    %cst_97 = arith.constant 9.99999997E-7 : f32
    %197 = vector.broadcast %cst_97 : f32 to vector<1x1xf32>
    %198 = arith.addf %196, %197 : vector<1x1xf32>
    %199 = tpu.reciprocal %198 {approx = true} : vector<1x1xf32> -> vector<1x1xf32>
    %200 = vector.broadcast %199 : vector<1x1xf32> to vector<1x8xf32>
    %201 = arith.mulf %194, %200 : vector<1x8xf32>
    %cst_98 = arith.constant dense<0.000000e+00> : vector<1x128xf32>
    %202 = tpu.matmul %201, %178, %cst_98 {dimension_numbers = #tpu.dot_dimension_numbers<[1], [0], [0], [1], [0, 0, 1, 1], [], []>} : vector<1x8xf32>, vector<8x128xf32>, vector<1x128xf32> -> vector<1x128xf32>
    %c0_99 = arith.constant 0 : index
    %c0_100 = arith.constant 0 : index
    %203 = vector.load %arg18[%c0_99, %c0_100] : memref<2x128xf32, #tpu.memory_space<vmem>>, vector<1x128xf32>
    tpu.vector_store %arg18[%c0_99, %c0_100], %202 {strides = array<i32>} : memref<2x128xf32, #tpu.memory_space<vmem>>, vector<1x128xf32>,
    %204 = vector.extract_strided_slice %0 {offsets = [8, 0], sizes = [8, 128], strides = [1, 1]} : vector<16x128xf32> to vector<8x128xf32>
    %205 = vector.extract_strided_slice %136 {offsets = [8, 0], sizes = [8, 128], strides = [1, 1]} : vector<16x128xf32> to vector<8x128xf32>
    %206 = vector.extract_strided_slice %139 {offsets = [8, 0], sizes = [8, 128], strides = [1, 1]} : vector<16x128xf32> to vector<8x128xf32>
    %c1_101 = arith.constant 1 : index
    %c0_102 = arith.constant 0 : index
    %c0_103 = arith.constant 0 : index
    %207 = vector.load %arg2[%c1_101, %c0_102, %c0_103] : memref<2x1x8xf32, #tpu.memory_space<vmem>>, vector<1x1x8xf32>
    %208 = vector.shape_cast %207 : vector<1x1x8xf32> to vector<1x8xf32>
    %cst_104 = arith.constant dense<0.000000e+00> : vector<8x8xf32>
    %209 = tpu.matmul %204, %206, %cst_104 {dimension_numbers = #tpu.dot_dimension_numbers<[1], [1], [0], [0], [0, 0, 1, 0], [], []>} : vector<8x128xf32>, vector<8x128xf32>, vector<8x8xf32> -> vector<8x8xf32>
    %cst_105 = arith.constant dense<0xFF800000> : vector<8xf32>
    %210 = vector.multi_reduction <maximumf>, %209, %cst_105 [1] : vector<8x8xf32> to vector<8xf32>
    %211 = vector.shape_cast %210 : vector<8xf32> to vector<8x1xf32>
    %212 = vector.broadcast %211 : vector<8x1xf32> to vector<8x8xf32>
    %213 = arith.subf %209, %212 : vector<8x8xf32>
    %214 = math.exp %213 : vector<8x8xf32>
    %cst_106 = arith.constant dense<0.000000e+00> : vector<8xf32>
    %215 = vector.multi_reduction <add>, %214, %cst_106 [1] : vector<8x8xf32> to vector<8xf32>
    %216 = vector.shape_cast %215 : vector<8xf32> to vector<8x1xf32>
    %217 = tpu.reciprocal %216 {approx = true} : vector<8x1xf32> -> vector<8x1xf32>
    %218 = vector.broadcast %217 : vector<8x1xf32> to vector<8x8xf32>
    %219 = arith.mulf %214, %218 : vector<8x8xf32>
    %220 = vector.broadcast %208 : vector<1x8xf32> to vector<8x8xf32>
    %221 = arith.mulf %219, %220 : vector<8x8xf32>
    %cst_107 = arith.constant dense<0.000000e+00> : vector<8xf32>
    %222 = vector.multi_reduction <add>, %221, %cst_107 [1] : vector<8x8xf32> to vector<8xf32>
    %223 = vector.shape_cast %222 : vector<8xf32> to vector<8x1xf32>
    %cst_108 = arith.constant 9.99999997E-7 : f32
    %224 = vector.broadcast %cst_108 : f32 to vector<8x1xf32>
    %225 = arith.addf %223, %224 : vector<8x1xf32>
    %226 = tpu.reciprocal %225 {approx = true} : vector<8x1xf32> -> vector<8x1xf32>
    %227 = vector.broadcast %226 : vector<8x1xf32> to vector<8x8xf32>
    %228 = arith.mulf %221, %227 : vector<8x8xf32>
    %cst_109 = arith.constant dense<0.000000e+00> : vector<8x128xf32>
    %229 = tpu.matmul %228, %205, %cst_109 {dimension_numbers = #tpu.dot_dimension_numbers<[1], [0], [0], [1], [0, 0, 1, 1], [], []>} : vector<8x8xf32>, vector<8x128xf32>, vector<8x128xf32> -> vector<8x128xf32>
    %230 = vector.extract_strided_slice %149 {offsets = [8, 0], sizes = [8, 128], strides = [1, 1]} : vector<16x128xf32> to vector<8x128xf32>
    %231 = arith.addf %204, %229 : vector<8x128xf32>
    %232 = arith.addf %231, %230 : vector<8x128xf32>
    %233 = arith.addf %229, %230 : vector<8x128xf32>
    %c8_110 = arith.constant 8 : index
    %c0_111 = arith.constant 0 : index
    %234 = vector.load %arg16[%c8_110, %c0_111] : memref<16x128xf32, #tpu.memory_space<vmem>>, vector<8x128xf32>
    tpu.vector_store %arg16[%c8_110, %c0_111], %232 {strides = array<i32>} : memref<16x128xf32, #tpu.memory_space<vmem>>, vector<8x128xf32>,
    %c8_112 = arith.constant 8 : index
    %c0_113 = arith.constant 0 : index
    %235 = vector.load %arg17[%c8_112, %c0_113] : memref<16x128xf32, #tpu.memory_space<vmem>>, vector<8x128xf32>
    tpu.vector_store %arg17[%c8_112, %c0_113], %233 {strides = array<i32>} : memref<16x128xf32, #tpu.memory_space<vmem>>, vector<8x128xf32>,
    %cst_114 = arith.constant dense<0.000000e+00> : vector<8xf32>
    %236 = vector.multi_reduction <add>, %228, %cst_114 [0] : vector<8x8xf32> to vector<8xf32>
    %237 = vector.shape_cast %236 : vector<8xf32> to vector<1x8xf32>
    %cst_115 = arith.constant dense<0xFF800000> : vector<1xf32>
    %238 = vector.multi_reduction <maximumf>, %237, %cst_115 [1] : vector<1x8xf32> to vector<1xf32>
    %239 = vector.shape_cast %238 : vector<1xf32> to vector<1x1xf32>
    %240 = vector.broadcast %239 : vector<1x1xf32> to vector<1x8xf32>
    %241 = arith.subf %237, %240 : vector<1x8xf32>
    %242 = math.exp %241 : vector<1x8xf32>
    %cst_116 = arith.constant dense<0.000000e+00> : vector<1xf32>
    %243 = vector.multi_reduction <add>, %242, %cst_116 [1] : vector<1x8xf32> to vector<1xf32>
    %244 = vector.shape_cast %243 : vector<1xf32> to vector<1x1xf32>
    %245 = tpu.reciprocal %244 {approx = true} : vector<1x1xf32> -> vector<1x1xf32>
    %246 = vector.broadcast %245 : vector<1x1xf32> to vector<1x8xf32>
    %247 = arith.mulf %242, %246 : vector<1x8xf32>
    %248 = arith.mulf %247, %208 : vector<1x8xf32>
    %cst_117 = arith.constant dense<0.000000e+00> : vector<1xf32>
    %249 = vector.multi_reduction <add>, %248, %cst_117 [1] : vector<1x8xf32> to vector<1xf32>
    %250 = vector.shape_cast %249 : vector<1xf32> to vector<1x1xf32>
    %cst_118 = arith.constant 9.99999997E-7 : f32
    %251 = vector.broadcast %cst_118 : f32 to vector<1x1xf32>
    %252 = arith.addf %250, %251 : vector<1x1xf32>
    %253 = tpu.reciprocal %252 {approx = true} : vector<1x1xf32> -> vector<1x1xf32>
    %254 = vector.broadcast %253 : vector<1x1xf32> to vector<1x8xf32>
    %255 = arith.mulf %248, %254 : vector<1x8xf32>
    %cst_119 = arith.constant dense<0.000000e+00> : vector<1x128xf32>
    %256 = tpu.matmul %255, %232, %cst_119 {dimension_numbers = #tpu.dot_dimension_numbers<[1], [0], [0], [1], [0, 0, 1, 1], [], []>} : vector<1x8xf32>, vector<8x128xf32>, vector<1x128xf32> -> vector<1x128xf32>
    %c1_120 = arith.constant 1 : index
    %c0_121 = arith.constant 0 : index
    %257 = vector.load %arg18[%c1_120, %c0_121] : memref<2x128xf32, #tpu.memory_space<vmem>>, vector<1x128xf32>
    tpu.vector_store %arg18[%c1_120, %c0_121], %256 {strides = array<i32>} : memref<2x128xf32, #tpu.memory_space<vmem>>, vector<1x128xf32>,
    %c0_122 = arith.constant 0 : index
    %c0_123 = arith.constant 0 : index
    %258 = vector.load %arg18[%c0_122, %c0_123] : memref<2x128xf32, #tpu.memory_space<vmem>>, vector<2x128xf32>
    %cst_124 = arith.constant dense<0.000000e+00> : vector<2x128xf32>
    %259 = tpu.matmul %258, %5, %cst_124 {dimension_numbers = #tpu.dot_dimension_numbers<[1], [0], [0], [1], [0, 0, 1, 1], [], []>} : vector<2x128xf32>, vector<128x128xf32>, vector<2x128xf32> -> vector<2x128xf32>
    %260 = vector.broadcast %6 : vector<1x128xf32> to vector<2x128xf32>
    %261 = arith.addf %259, %260 : vector<2x128xf32>
    %262 = arith.negf %261 : vector<2x128xf32>
    %263 = math.exp %262 : vector<2x128xf32>
    %cst_125 = arith.constant 1.000000e+00 : f32
    %264 = vector.broadcast %cst_125 : f32 to vector<2x128xf32>
    %265 = arith.addf %264, %263 : vector<2x128xf32>
    %266 = arith.divf %264, %265 : vector<2x128xf32>
    %267 = arith.truncf %135 : vector<2x128xf32> to vector<2x128xbf16>
    %cst_126 = arith.constant dense<0.000000e+00> : vector<2x128xf32>
    %268 = tpu.matmul %267, %7, %cst_126 {dimension_numbers = #tpu.dot_dimension_numbers<[1], [1], [0], [0], [0, 0, 1, 0], [], []>} : vector<2x128xbf16>, vector<128x128xbf16>, vector<2x128xf32> -> vector<2x128xf32>
    %269 = arith.truncf %266 : vector<2x128xf32> to vector<2x128xbf16>
    %cst_127 = arith.constant dense<0.000000e+00> : vector<2x128xf32>
    %270 = tpu.matmul %269, %8, %cst_127 {dimension_numbers = #tpu.dot_dimension_numbers<[1], [1], [0], [0], [0, 0, 1, 0], [], []>} : vector<2x128xbf16>, vector<128x128xbf16>, vector<2x128xf32> -> vector<2x128xf32>
    %271 = arith.mulf %268, %270 : vector<2x128xf32>
    %272 = arith.truncf %271 : vector<2x128xf32> to vector<2x128xbf16>
    %cst_128 = arith.constant dense<0.000000e+00> : vector<2x128xf32>
    %273 = tpu.matmul %272, %9, %cst_128 {dimension_numbers = #tpu.dot_dimension_numbers<[1], [0], [0], [1], [0, 0, 1, 1], [], []>} : vector<2x128xbf16>, vector<128x128xbf16>, vector<2x128xf32> -> vector<2x128xf32>
    %cst_129 = arith.constant 1.000000e+00 : f32
    %274 = vector.broadcast %cst_129 : f32 to vector<2x128xf32>
    %275 = arith.minimumf %273, %274 : vector<2x128xf32>
    %c0_130 = arith.constant 0 : index
    %c0_131 = arith.constant 0 : index
    %276 = vector.load %arg13[%c0_130, %c0_131] : memref<1x128xf32, #tpu.memory_space<vmem>>, vector<1x128xf32>
    %c0_132 = arith.constant 0 : index
    %c0_133 = arith.constant 0 : index
    %277 = vector.load %arg14[%c0_132, %c0_133] : memref<1x1xf32, #tpu.memory_space<vmem>>, vector<1x1xf32>
    %278 = vector.broadcast %276 : vector<1x128xf32> to vector<2x128xf32>
    %279 = arith.mulf %118, %278 : vector<2x128xf32>
    %cst_134 = arith.constant dense<0.000000e+00> : vector<2xf32>
    %280 = vector.multi_reduction <add>, %279, %cst_134 [1] : vector<2x128xf32> to vector<2xf32>
    %281 = vector.shape_cast %280 : vector<2xf32> to vector<2x1xf32>
    %282 = vector.broadcast %277 : vector<1x1xf32> to vector<2x1xf32>
    %283 = arith.addf %281, %282 : vector<2x1xf32>
    %284 = vector.broadcast %276 : vector<1x128xf32> to vector<2x128xf32>
    %285 = arith.mulf %258, %284 : vector<2x128xf32>
    %cst_135 = arith.constant dense<0.000000e+00> : vector<2xf32>
    %286 = vector.multi_reduction <add>, %285, %cst_135 [1] : vector<2x128xf32> to vector<2xf32>
    %287 = vector.shape_cast %286 : vector<2xf32> to vector<2x1xf32>
    %288 = vector.broadcast %277 : vector<1x1xf32> to vector<2x1xf32>
    %289 = arith.addf %287, %288 : vector<2x1xf32>
    %290 = arith.maximumf %283, %289 : vector<2x1xf32>
    %291 = arith.subf %283, %290 : vector<2x1xf32>
    %292 = math.exp %291 : vector<2x1xf32>
    %293 = arith.subf %289, %290 : vector<2x1xf32>
    %294 = math.exp %293 : vector<2x1xf32>
    %295 = arith.addf %292, %294 : vector<2x1xf32>
    %296 = tpu.reciprocal %295 {approx = true} : vector<2x1xf32> -> vector<2x1xf32>
    %297 = arith.mulf %292, %296 : vector<2x1xf32>
    %298 = vector.broadcast %297 : vector<2x1xf32> to vector<2x128xf32>
    %299 = arith.mulf %135, %298 : vector<2x128xf32>
    %300 = arith.mulf %294, %296 : vector<2x1xf32>
    %301 = vector.broadcast %300 : vector<2x1xf32> to vector<2x128xf32>
    %302 = arith.mulf %275, %301 : vector<2x128xf32>
    %303 = arith.addf %299, %302 : vector<2x128xf32>
    %c0_136 = arith.constant 0 : index
    %c0_137 = arith.constant 0 : index
    %304 = vector.load %arg15[%c0_136, %c0_137] : memref<2x128xf32, #tpu.memory_space<vmem>>, vector<2x128xf32>
    tpu.vector_store %arg15[%c0_136, %c0_137], %303 {strides = array<i32>} : memref<2x128xf32, #tpu.memory_space<vmem>>, vector<2x128xf32>,
    return
  }
  func.func @transform_0(%arg0: i32) -> (i32, i32) {
    %c0_i32 = arith.constant 0 : i32
    %c0_i32_0 = arith.constant 0 : i32
    %c0_i32_1 = arith.constant 0 : i32
    return %c0_i32, %c0_i32_0 : i32, i32
  }
  func.func @transform_1(%arg0: i32) -> (i32, i32, i32) {
    %c0_i32 = arith.constant 0 : i32
    %c0_i32_0 = arith.constant 0 : i32
    %c0_i32_1 = arith.constant 0 : i32
    %c0_i32_2 = arith.constant 0 : i32
    return %c0_i32, %c0_i32_0, %c0_i32_1 : i32, i32, i32
  }
  func.func @transform_2(%arg0: i32) -> (i32, i32) {
    %c0_i32 = arith.constant 0 : i32
    %c0_i32_0 = arith.constant 0 : i32
    %c0_i32_1 = arith.constant 0 : i32
    return %c0_i32, %c0_i32_0 : i32, i32
  }
  func.func @transform_3(%arg0: i32) -> (i32, i32) {
    %c0_i32 = arith.constant 0 : i32
    %c0_i32_0 = arith.constant 0 : i32
    %c0_i32_1 = arith.constant 0 : i32
    return %c0_i32, %c0_i32_0 : i32, i32
  }
  func.func @transform_4(%arg0: i32) -> (i32, i32) {
    %c0_i32 = arith.constant 0 : i32
    %c0_i32_0 = arith.constant 0 : i32
    %c0_i32_1 = arith.constant 0 : i32
    return %c0_i32, %c0_i32_0 : i32, i32
  }
  func.func @transform_5(%arg0: i32) -> (i32, i32) {
    %c0_i32 = arith.constant 0 : i32
    %c0_i32_0 = arith.constant 0 : i32
    %c0_i32_1 = arith.constant 0 : i32
    return %c0_i32, %c0_i32_0 : i32, i32
  }
  func.func @transform_6(%arg0: i32) -> (i32, i32) {
    %c0_i32 = arith.constant 0 : i32
    %c0_i32_0 = arith.constant 0 : i32
    %c0_i32_1 = arith.constant 0 : i32
    return %c0_i32, %c0_i32_0 : i32, i32
  }
  func.func @transform_7(%arg0: i32) -> (i32, i32) {
    %c0_i32 = arith.constant 0 : i32
    %c0_i32_0 = arith.constant 0 : i32
    %c0_i32_1 = arith.constant 0 : i32
    return %c0_i32, %c0_i32_0 : i32, i32
  }
  func.func @transform_8(%arg0: i32) -> (i32, i32) {
    %c0_i32 = arith.constant 0 : i32
    %c0_i32_0 = arith.constant 0 : i32
    %c0_i32_1 = arith.constant 0 : i32
    return %c0_i32, %c0_i32_0 : i32, i32
  }
  func.func @transform_9(%arg0: i32) -> (i32, i32) {
    %c0_i32 = arith.constant 0 : i32
    %c0_i32_0 = arith.constant 0 : i32
    %c0_i32_1 = arith.constant 0 : i32
    return %c0_i32, %c0_i32_0 : i32, i32
  }
  func.func @transform_10(%arg0: i32) -> (i32, i32) {
    %c0_i32 = arith.constant 0 : i32
    %c0_i32_0 = arith.constant 0 : i32
    %c0_i32_1 = arith.constant 0 : i32
    return %c0_i32, %c0_i32_0 : i32, i32
  }
  func.func @transform_11(%arg0: i32) -> (i32, i32) {
    %c0_i32 = arith.constant 0 : i32
    %c0_i32_0 = arith.constant 0 : i32
    %c0_i32_1 = arith.constant 0 : i32
    return %c0_i32, %c0_i32_0 : i32, i32
  }
  func.func @transform_12(%arg0: i32) -> (i32, i32) {
    %c0_i32 = arith.constant 0 : i32
    %c0_i32_0 = arith.constant 0 : i32
    %c0_i32_1 = arith.constant 0 : i32
    return %c0_i32, %c0_i32_0 : i32, i32
  }
  func.func @transform_13(%arg0: i32) -> (i32, i32) {
    %c0_i32 = arith.constant 0 : i32
    %c0_i32_0 = arith.constant 0 : i32
    %c0_i32_1 = arith.constant 0 : i32
    return %c0_i32, %c0_i32_0 : i32, i32
  }
  func.func @transform_14(%arg0: i32) -> (i32, i32) {
    %c0_i32 = arith.constant 0 : i32
    %c0_i32_0 = arith.constant 0 : i32
    %c0_i32_1 = arith.constant 0 : i32
    return %c0_i32, %c0_i32_0 : i32, i32
  }
}

</mosaic_0001>

<llo_original>
// kernel: tpu_custom_call.1
$region0: #{tpu_custom_call.1}
  #allocation0 [shape = 'u32[]', space=smem, size = 0x4, offset = 0x4, fixed_abs, tag = 'smem constant byte address 0x4 - core index']
  #allocation1 [shape = 'u32[144,128]{1,0:T(1,128)}', space=vmem, size = 0x12000, scoped, tag = 'internal scratch']
  #allocation2 [shape = 'f32[16,128]{1,0:T(8,128)}', space=vmem, size = 0x2000, scoped, tag = 'scratch operand']
  #allocation3 [shape = 'f32[16,128]{1,0:T(8,128)}', space=vmem, size = 0x2000, scoped, tag = 'scratch operand']
  #allocation4 [shape = 'f32[2,128]{1,0:T(2,128)}', space=vmem, size = 0x400, scoped, tag = 'scratch operand']
  #allocation5 [shape = 'f32[1,1]{1,0:T(1,128)S(1)}', space=vmem, size = 0x200, scoped, tag = 'scoped memory for tpu_custom_call.1']
  %s0 = inlined_call_operand.hbm [shape: f32[16,128], index: 0, kind: input, shape index: {}]
  %s1 = inlined_call_operand.vmem [shape: f32[2,1,8], index: 1, kind: input, shape index: {}]
  %s2 = inlined_call_operand.vmem [shape: f32[2,128], index: 2, kind: input, shape index: {}]
  %s3 = inlined_call_operand.hbm [shape: bf16[128,128], index: 3, kind: input, shape index: {}]
  %s4 = inlined_call_operand.hbm [shape: bf16[128,128], index: 4, kind: input, shape index: {}]
  %s5 = inlined_call_operand.hbm [shape: bf16[128,128], index: 5, kind: input, shape index: {}]
  %s6 = inlined_call_operand.hbm [shape: f32[128,128], index: 6, kind: input, shape index: {}]
  %s7 = inlined_call_operand.vmem [shape: f32[1,128], index: 7, kind: input, shape index: {}]
  %s8 = inlined_call_operand.hbm [shape: f32[128,128], index: 8, kind: input, shape index: {}]
  %s9 = inlined_call_operand.vmem [shape: f32[1,128], index: 9, kind: input, shape index: {}]
  %s10 = inlined_call_operand.hbm [shape: f32[128,128], index: 10, kind: input, shape index: {}]
  %s11 = inlined_call_operand.vmem [shape: f32[1,128], index: 11, kind: input, shape index: {}]
  %s12 = inlined_call_operand.vmem [shape: f32[1,128], index: 12, kind: input, shape index: {}]
  %s13 = inlined_call_operand.<no memory space> [shape: f32[1,1], index: 13, kind: input, shape index: {}]
  %s14 = inlined_call_operand.hbm [shape: f32[2,128], index: 14, kind: output, shape index: {}]
  %s15 = sld [smem:[#allocation0]]
  $region94: #{tpu_custom_call.1} parent=0
    _
  %s17 = ssub.s32 1, %s15
  %s18 = scalar_select 0, %s17, %s15
  %v19 = vstv %s13
  %20 = vst [vmem:[#allocation5] sm:$0x1] %v19
  $region1: #{tpu_custom_call.1} parent=0
    #allocation6 [shape = 'u8[8192]{0}', space=vmem, size = 0x2000, scoped, tag = 'input window, operand 0, single buffered']
    #allocation7 [shape = 's32[1]{0}', space=sflag, size = 0x4, scoped, tag = 'scoped memory for tpu_custom_call.1']
    #allocation8 [shape = 's32[1]{0}', space=sflag, size = 0x4, scoped, tag = 'scoped memory for tpu_custom_call.1']
    #allocation9 [shape = 'u8[32768]{0}', space=vmem, size = 0x8000, scoped, tag = 'input window, operand 3, single buffered']
    #allocation10 [shape = 's32[1]{0}', space=sflag, size = 0x4, scoped, tag = 'scoped memory for tpu_custom_call.1']
    #allocation11 [shape = 'u8[32768]{0}', space=vmem, size = 0x8000, scoped, tag = 'input window, operand 4, single buffered']
    #allocation12 [shape = 'u8[32768]{0}', space=vmem, size = 0x8000, scoped, tag = 'input window, operand 5, single buffered']
    #allocation13 [shape = 's32[1]{0}', space=sflag, size = 0x4, scoped, tag = 'scoped memory for tpu_custom_call.1']
    #allocation14 [shape = 'u8[65536]{0}', space=vmem, size = 0x10000, scoped, tag = 'input window, operand 6, single buffered']
    #allocation15 [shape = 'u8[65536]{0}', space=vmem, size = 0x10000, scoped, tag = 'input window, operand 8, single buffered']
    #allocation16 [shape = 's32[1]{0}', space=sflag, size = 0x4, scoped, tag = 'scoped memory for tpu_custom_call.1']
    #allocation17 [shape = 'u8[65536]{0}', space=vmem, size = 0x10000, scoped, tag = 'input window, operand 10, single buffered']
    #allocation18 [shape = 'u8[1024]{0}', space=vmem, size = 0x400, scoped, tag = 'output window, operand 0, single buffered']
    %21 = vsyncpa [#allocation7], 0
    %22 = vsyncpa [#allocation10], 0
    %23 = vsyncpa [#allocation13], 0
    %24 = vsyncpa [#allocation16], 0
    %25 = vsyncpa [#allocation8], 0
    // Predicated region
    $region2: #{tpu_custom_call.1} parent=1 // pred_check
      _
    $region3: #{tpu_custom_call.1} parent=1 // pred_check_branch
      %27 = sbr.rel (0) target = $region5
    $region4: #{tpu_custom_call.1} parent=1 // pred_region
      %s29 = ssub.s32 256, 256
      %30 = vsyncadd [#allocation7], %s29
      %s31 = sshll.u32 [#allocation6], 4
      %s32 = int_to_ptr.vmem [resolvable:$true] %s31
      %37 = dma.hbm_to_vmem [thread:$0]  %s0, 256, %s32, [#allocation7], 128, 128, 8
    $region5: #{tpu_custom_call.1} parent=1 // pred_fallthru
      _
    // Predicated region
    $region6: #{tpu_custom_call.1} parent=1 // pred_check
      _
    $region7: #{tpu_custom_call.1} parent=1 // pred_check_branch
      %39 = sbr.rel (0) target = $region9
    $region8: #{tpu_custom_call.1} parent=1 // pred_region
      _
    $region9: #{tpu_custom_call.1} parent=1 // pred_fallthru
      _
    // Predicated region
    $region10: #{tpu_custom_call.1} parent=1 // pred_check
      _
    $region11: #{tpu_custom_call.1} parent=1 // pred_check_branch
      %41 = sbr.rel (0) target = $region13
    $region12: #{tpu_custom_call.1} parent=1 // pred_region
      _
    $region13: #{tpu_custom_call.1} parent=1 // pred_fallthru
      _
    // Predicated region
    $region14: #{tpu_custom_call.1} parent=1 // pred_check
      _
    $region15: #{tpu_custom_call.1} parent=1 // pred_check_branch
      %43 = sbr.rel (0) target = $region17
    $region16: #{tpu_custom_call.1} parent=1 // pred_region
      %s45 = ssub.s32 1024, 1024
      %46 = vsyncadd [#allocation10], %s45
      %s47 = sshll.u32 [#allocation9], 4
      %s48 = int_to_ptr.vmem [resolvable:$true] %s47
      %53 = dma.hbm_to_vmem [thread:$0]  %s3, 1024, %s48, [#allocation10], 64, 64, 4
    $region17: #{tpu_custom_call.1} parent=1 // pred_fallthru
      _
    // Predicated region
    $region18: #{tpu_custom_call.1} parent=1 // pred_check
      _
    $region19: #{tpu_custom_call.1} parent=1 // pred_check_branch
      %55 = sbr.rel (0) target = $region21
    $region20: #{tpu_custom_call.1} parent=1 // pred_region
      %s57 = ssub.s32 1024, 1024
      %58 = vsyncadd [#allocation10], %s57
      %s59 = sshll.u32 [#allocation11], 4
      %s60 = int_to_ptr.vmem [resolvable:$true] %s59
      %65 = dma.hbm_to_vmem [thread:$0]  %s4, 1024, %s60, [#allocation10], 64, 64, 4
    $region21: #{tpu_custom_call.1} parent=1 // pred_fallthru
      _
    // Predicated region
    $region22: #{tpu_custom_call.1} parent=1 // pred_check
      _
    $region23: #{tpu_custom_call.1} parent=1 // pred_check_branch
      %67 = sbr.rel (0) target = $region25
    $region24: #{tpu_custom_call.1} parent=1 // pred_region
      %s69 = ssub.s32 1024, 1024
      %70 = vsyncadd [#allocation13], %s69
      %s71 = sshll.u32 [#allocation12], 4
      %s72 = int_to_ptr.vmem [resolvable:$true] %s71
      %77 = dma.hbm_to_vmem [thread:$0]  %s5, 1024, %s72, [#allocation13], 64, 64, 4
    $region25: #{tpu_custom_call.1} parent=1 // pred_fallthru
      _
    // Predicated region
    $region26: #{tpu_custom_call.1} parent=1 // pred_check
      _
    $region27: #{tpu_custom_call.1} parent=1 // pred_check_branch
      %79 = sbr.rel (0) target = $region29
    $region28: #{tpu_custom_call.1} parent=1 // pred_region
      %s81 = ssub.s32 2048, 2048
      %82 = vsyncadd [#allocation13], %s81
      %s83 = sshll.u32 [#allocation14], 4
      %s84 = int_to_ptr.vmem [resolvable:$true] %s83
      %89 = dma.hbm_to_vmem [thread:$0]  %s6, 2048, %s84, [#allocation13], 128, 128, 8
    $region29: #{tpu_custom_call.1} parent=1 // pred_fallthru
      _
    // Predicated region
    $region30: #{tpu_custom_call.1} parent=1 // pred_check
      _
    $region31: #{tpu_custom_call.1} parent=1 // pred_check_branch
      %91 = sbr.rel (0) target = $region33
    $region32: #{tpu_custom_call.1} parent=1 // pred_region
      _
    $region33: #{tpu_custom_call.1} parent=1 // pred_fallthru
      _
    // Predicated region
    $region34: #{tpu_custom_call.1} parent=1 // pred_check
      _
    $region35: #{tpu_custom_call.1} parent=1 // pred_check_branch
      %93 = sbr.rel (0) target = $region37
    $region36: #{tpu_custom_call.1} parent=1 // pred_region
      %s95 = ssub.s32 2048, 2048
      %96 = vsyncadd [#allocation16], %s95
      %s97 = sshll.u32 [#allocation15], 4
      %s98 = int_to_ptr.vmem [resolvable:$true] %s97
      %103 = dma.hbm_to_vmem [thread:$0]  %s8, 2048, %s98, [#allocation16], 128, 128, 8
    $region37: #{tpu_custom_call.1} parent=1 // pred_fallthru
      _
    // Predicated region
    $region38: #{tpu_custom_call.1} parent=1 // pred_check
      _
    $region39: #{tpu_custom_call.1} parent=1 // pred_check_branch
      %105 = sbr.rel (0) target = $region41
    $region40: #{tpu_custom_call.1} parent=1 // pred_region
      _
    $region41: #{tpu_custom_call.1} parent=1 // pred_fallthru
      _
    // Predicated region
    $region42: #{tpu_custom_call.1} parent=1 // pred_check
      _
    $region43: #{tpu_custom_call.1} parent=1 // pred_check_branch
      %107 = sbr.rel (0) target = $region45
    $region44: #{tpu_custom_call.1} parent=1 // pred_region
      %s109 = ssub.s32 2048, 2048
      %110 = vsyncadd [#allocation16], %s109
      %s111 = sshll.u32 [#allocation17], 4
      %s112 = int_to_ptr.vmem [resolvable:$true] %s111
      %117 = dma.hbm_to_vmem [thread:$0]  %s10, 2048, %s112, [#allocation16], 128, 128, 8
    $region45: #{tpu_custom_call.1} parent=1 // pred_fallthru
      _
    // Predicated region
    $region46: #{tpu_custom_call.1} parent=1 // pred_check
      _
    $region47: #{tpu_custom_call.1} parent=1 // pred_check_branch
      %119 = sbr.rel (0) target = $region49
    $region48: #{tpu_custom_call.1} parent=1 // pred_region
      _
    $region49: #{tpu_custom_call.1} parent=1 // pred_fallthru
      _
    // Predicated region
    $region50: #{tpu_custom_call.1} parent=1 // pred_check
      _
    $region51: #{tpu_custom_call.1} parent=1 // pred_check_branch
      %121 = sbr.rel (0) target = $region53
    $region52: #{tpu_custom_call.1} parent=1 // pred_region
      _
    $region53: #{tpu_custom_call.1} parent=1 // pred_fallthru
      _
    // Predicated region
    $region54: #{tpu_custom_call.1} parent=1 // pred_check
      _
    $region55: #{tpu_custom_call.1} parent=1 // pred_check_branch
      %123 = sbr.rel (0) target = $region57
    $region56: #{tpu_custom_call.1} parent=1 // pred_region
      _
    $region57: #{tpu_custom_call.1} parent=1 // pred_fallthru
      _
    // Predicated region
    $region58: #{tpu_custom_call.1} parent=1 // pred_check
      _
    $region59: #{tpu_custom_call.1} parent=1 // pred_check_branch
      %125 = sbr.rel (0) target = $region61
    $region60: #{tpu_custom_call.1} parent=1 // pred_region
      %126 = dma.done [#allocation7], 256
    $region61: #{tpu_custom_call.1} parent=1 // pred_fallthru
      _
    // Predicated region
    $region62: #{tpu_custom_call.1} parent=1 // pred_check
      _
    $region63: #{tpu_custom_call.1} parent=1 // pred_check_branch
      %128 = sbr.rel (0) target = $region65
    $region64: #{tpu_custom_call.1} parent=1 // pred_region
      %129 = dma.done [#allocation10], 1024
    $region65: #{tpu_custom_call.1} parent=1 // pred_fallthru
      _
    // Predicated region
    $region66: #{tpu_custom_call.1} parent=1 // pred_check
      _
    $region67: #{tpu_custom_call.1} parent=1 // pred_check_branch
      %131 = sbr.rel (0) target = $region69
    $region68: #{tpu_custom_call.1} parent=1 // pred_region
      %132 = dma.done [#allocation10], 1024
    $region69: #{tpu_custom_call.1} parent=1 // pred_fallthru
      _
    // Predicated region
    $region70: #{tpu_custom_call.1} parent=1 // pred_check
      _
    $region71: #{tpu_custom_call.1} parent=1 // pred_check_branch
      %134 = sbr.rel (0) target = $region73
    $region72: #{tpu_custom_call.1} parent=1 // pred_region
      %135 = dma.done [#allocation13], 1024
    $region73: #{tpu_custom_call.1} parent=1 // pred_fallthru
      _
    // Predicated region
    $region74: #{tpu_custom_call.1} parent=1 // pred_check
      _
    $region75: #{tpu_custom_call.1} parent=1 // pred_check_branch
      %137 = sbr.rel (0) target = $region77
    $region76: #{tpu_custom_call.1} parent=1 // pred_region
      %138 = dma.done [#allocation13], 2048
    $region77: #{tpu_custom_call.1} parent=1 // pred_fallthru
      _
    // Predicated region
    $region78: #{tpu_custom_call.1} parent=1 // pred_check
      _
    $region79: #{tpu_custom_call.1} parent=1 // pred_check_branch
      %140 = sbr.rel (0) target = $region81
    $region80: #{tpu_custom_call.1} parent=1 // pred_region
      %141 = dma.done [#allocation16], 2048
    $region81: #{tpu_custom_call.1} parent=1 // pred_fallthru
      _
    // Predicated region
    $region82: #{tpu_custom_call.1} parent=1 // pred_check
      _
    $region83: #{tpu_custom_call.1} parent=1 // pred_check_branch
      %143 = sbr.rel (0) target = $region85
    $region84: #{tpu_custom_call.1} parent=1 // pred_region
      %144 = dma.done [#allocation16], 2048
    $region85: #{tpu_custom_call.1} parent=1 // pred_fallthru
      _
    %v146 = vld [vmem:[#allocation6] sm:$0xff]
    %v147 = vld [vmem:[#allocation6 + $0x8] sm:$0xff]
    %v148 = vld [vmem:[#allocation14] sm:$0xff]
    %v149 = vld [vmem:[#allocation14 + $0x8] sm:$0xff]
    %v150 = vld [vmem:[#allocation14 + $0x10] sm:$0xff]
    %v151 = vld [vmem:[#allocation14 + $0x18] sm:$0xff]
    %v152 = vld [vmem:[#allocation14 + $0x20] sm:$0xff]
    %v153 = vld [vmem:[#allocation14 + $0x28] sm:$0xff]
    %v154 = vld [vmem:[#allocation14 + $0x30] sm:$0xff]
    %v155 = vld [vmem:[#allocation14 + $0x38] sm:$0xff]
    %v156 = vld [vmem:[#allocation14 + $0x40] sm:$0xff]
    %v157 = vld [vmem:[#allocation14 + $0x48] sm:$0xff]
    %v158 = vld [vmem:[#allocation14 + $0x50] sm:$0xff]
    %v159 = vld [vmem:[#allocation14 + $0x58] sm:$0xff]
    %v160 = vld [vmem:[#allocation14 + $0x60] sm:$0xff]
    %v161 = vld [vmem:[#allocation14 + $0x68] sm:$0xff]
    %v162 = vld [vmem:[#allocation14 + $0x70] sm:$0xff]
    %v163 = vld [vmem:[#allocation14 + $0x78] sm:$0xff]
    %v164 = vld [vmem:[%s7] sm:$0x1]
    %v165 = vld [vmem:[#allocation15] sm:$0xff]
    %v166 = vld [vmem:[#allocation15 + $0x8] sm:$0xff]
    %v167 = vld [vmem:[#allocation15 + $0x10] sm:$0xff]
    %v168 = vld [vmem:[#allocation15 + $0x18] sm:$0xff]
    %v169 = vld [vmem:[#allocation15 + $0x20] sm:$0xff]
    %v170 = vld [vmem:[#allocation15 + $0x28] sm:$0xff]
    %v171 = vld [vmem:[#allocation15 + $0x30] sm:$0xff]
    %v172 = vld [vmem:[#allocation15 + $0x38] sm:$0xff]
    %v173 = vld [vmem:[#allocation15 + $0x40] sm:$0xff]
    %v174 = vld [vmem:[#allocation15 + $0x48] sm:$0xff]
    %v175 = vld [vmem:[#allocation15 + $0x50] sm:$0xff]
    %v176 = vld [vmem:[#allocation15 + $0x58] sm:$0xff]
    %v177 = vld [vmem:[#allocation15 + $0x60] sm:$0xff]
    %v178 = vld [vmem:[#allocation15 + $0x68] sm:$0xff]
    %v179 = vld [vmem:[#allocation15 + $0x70] sm:$0xff]
    %v180 = vld [vmem:[#allocation15 + $0x78] sm:$0xff]
    %v181 = vld [vmem:[%s9] sm:$0x1]
    %v182 = vld [vmem:[#allocation17] sm:$0xff]
    %v183 = vld [vmem:[#allocation17 + $0x8] sm:$0xff]
    %v184 = vld [vmem:[#allocation17 + $0x10] sm:$0xff]
    %v185 = vld [vmem:[#allocation17 + $0x18] sm:$0xff]
    %v186 = vld [vmem:[#allocation17 + $0x20] sm:$0xff]
    %v187 = vld [vmem:[#allocation17 + $0x28] sm:$0xff]
    %v188 = vld [vmem:[#allocation17 + $0x30] sm:$0xff]
    %v189 = vld [vmem:[#allocation17 + $0x38] sm:$0xff]
    %v190 = vld [vmem:[#allocation17 + $0x40] sm:$0xff]
    %v191 = vld [vmem:[#allocation17 + $0x48] sm:$0xff]
    %v192 = vld [vmem:[#allocation17 + $0x50] sm:$0xff]
    %v193 = vld [vmem:[#allocation17 + $0x58] sm:$0xff]
    %v194 = vld [vmem:[#allocation17 + $0x60] sm:$0xff]
    %v195 = vld [vmem:[#allocation17 + $0x68] sm:$0xff]
    %v196 = vld [vmem:[#allocation17 + $0x70] sm:$0xff]
    %v197 = vld [vmem:[#allocation17 + $0x78] sm:$0xff]
    %v198 = vld [vmem:[%s11] sm:$0x1]
    %v199 = vld [vmem:[#allocation9] sm:$0xf]
    %v200 = vld [vmem:[#allocation9 + $0x4] sm:$0xf]
    %v201 = vld [vmem:[#allocation9 + $0x8] sm:$0xf]
    %v202 = vld [vmem:[#allocation9 + $0xc] sm:$0xf]
    %v203 = vld [vmem:[#allocation9 + $0x10] sm:$0xf]
    %v204 = vld [vmem:[#allocation9 + $0x14] sm:$0xf]
    %v205 = vld [vmem:[#allocation9 + $0x18] sm:$0xf]
    %v206 = vld [vmem:[#allocation9 + $0x1c] sm:$0xf]
    %v207 = vld [vmem:[#allocation9 + $0x20] sm:$0xf]
    %v208 = vld [vmem:[#allocation9 + $0x24] sm:$0xf]
    %v209 = vld [vmem:[#allocation9 + $0x28] sm:$0xf]
    %v210 = vld [vmem:[#allocation9 + $0x2c] sm:$0xf]
    %v211 = vld [vmem:[#allocation9 + $0x30] sm:$0xf]
    %v212 = vld [vmem:[#allocation9 + $0x34] sm:$0xf]
    %v213 = vld [vmem:[#allocation9 + $0x38] sm:$0xf]
    %v214 = vld [vmem:[#allocation9 + $0x3c] sm:$0xf]
    %v215 = vld [vmem:[#allocation11] sm:$0xf]
    %v216 = vld [vmem:[#allocation11 + $0x4] sm:$0xf]
    %v217 = vld [vmem:[#allocation11 + $0x8] sm:$0xf]
    %v218 = vld [vmem:[#allocation11 + $0xc] sm:$0xf]
    %v219 = vld [vmem:[#allocation11 + $0x10] sm:$0xf]
    %v220 = vld [vmem:[#allocation11 + $0x14] sm:$0xf]
    %v221 = vld [vmem:[#allocation11 + $0x18] sm:$0xf]
    %v222 = vld [vmem:[#allocation11 + $0x1c] sm:$0xf]
    %v223 = vld [vmem:[#allocation11 + $0x20] sm:$0xf]
    %v224 = vld [vmem:[#allocation11 + $0x24] sm:$0xf]
    %v225 = vld [vmem:[#allocation11 + $0x28] sm:$0xf]
    %v226 = vld [vmem:[#allocation11 + $0x2c] sm:$0xf]
    %v227 = vld [vmem:[#allocation11 + $0x30] sm:$0xf]
    %v228 = vld [vmem:[#allocation11 + $0x34] sm:$0xf]
    %v229 = vld [vmem:[#allocation11 + $0x38] sm:$0xf]
    %v230 = vld [vmem:[#allocation11 + $0x3c] sm:$0xf]
    %v231 = vld [vmem:[#allocation12] sm:$0xf]
    %v232 = vld [vmem:[#allocation12 + $0x4] sm:$0xf]
    %v233 = vld [vmem:[#allocation12 + $0x8] sm:$0xf]
    %v234 = vld [vmem:[#allocation12 + $0xc] sm:$0xf]
    %v235 = vld [vmem:[#allocation12 + $0x10] sm:$0xf]
    %v236 = vld [vmem:[#allocation12 + $0x14] sm:$0xf]
    %v237 = vld [vmem:[#allocation12 + $0x18] sm:$0xf]
    %v238 = vld [vmem:[#allocation12 + $0x1c] sm:$0xf]
    %v239 = vld [vmem:[#allocation12 + $0x20] sm:$0xf]
    %v240 = vld [vmem:[#allocation12 + $0x24] sm:$0xf]
    %v241 = vld [vmem:[#allocation12 + $0x28] sm:$0xf]
    %v242 = vld [vmem:[#allocation12 + $0x2c] sm:$0xf]
    %v243 = vld [vmem:[#allocation12 + $0x30] sm:$0xf]
    %v244 = vld [vmem:[#allocation12 + $0x34] sm:$0xf]
    %v245 = vld [vmem:[#allocation12 + $0x38] sm:$0xf]
    %v246 = vld [vmem:[#allocation12 + $0x3c] sm:$0xf]
    %247 = vst [vmem:[#allocation2] sm:$0xff] %v146
    %248 = vst [vmem:[#allocation2 + $0x8] sm:$0xff] %v147
    %v249 = vld [vmem:[%s2] sm:$0x3]
    %v250 = vld [vmem:[#allocation2] sm:$0xff]
    %v251 = vld [vmem:[#allocation2 + $0x8] sm:$0xff]
    %v253 = vlaneseq
    %v254 = vshrl.u32 %v253, 7
    %v255 = vsub.s32 0, %v254
    %v256 = vrot.slane %v164, %v255
    %258 = vmatprep.subr.mxu0 0.0
    %259 = vmatpush1.msra.mxu0 %v148
    %260 = vmatprep.subr.mxu0 0.0
    %261 = vmatpush1.msra.mxu0 %v149
    %262 = vmatprep.subr.mxu0 0.0
    %263 = vmatpush1.msra.mxu0 %v150
    %264 = vmatprep.subr.mxu0 0.0
    %265 = vmatpush1.msra.mxu0 %v151
    %266 = vmatprep.subr.mxu0 0.0
    %267 = vmatpush1.msra.mxu0 %v152
    %268 = vmatprep.subr.mxu0 0.0
    %269 = vmatpush1.msra.mxu0 %v153
    %270 = vmatprep.subr.mxu0 0.0
    %271 = vmatpush1.msra.mxu0 %v154
    %272 = vmatprep.subr.mxu0 0.0
    %273 = vmatpush1.msra.mxu0 %v155
    %274 = vmatprep.subr.mxu0 0.0
    %275 = vmatpush1.msra.mxu0 %v156
    %276 = vmatprep.subr.mxu0 0.0
    %277 = vmatpush1.msra.mxu0 %v157
    %278 = vmatprep.subr.mxu0 0.0
    %279 = vmatpush1.msra.mxu0 %v158
    %280 = vmatprep.subr.mxu0 0.0
    %281 = vmatpush1.msra.mxu0 %v159
    %282 = vmatprep.subr.mxu0 0.0
    %283 = vmatpush1.msra.mxu0 %v160
    %284 = vmatprep.subr.mxu0 0.0
    %285 = vmatpush1.msra.mxu0 %v161
    %286 = vmatprep.subr.mxu0 0.0
    %287 = vmatpush1.msra.mxu0 %v162
    %288 = vmatprep.subr.mxu0 0.0
    %289 = vmatpush1.msra.mxu0 %v163
    %290 = vmatprep.subr.mxu0 0.0
    %291 = vmatpush1.msra.mxu0 0.0
    %292 = vmatprep.subr.mxu0 0.0
    %293 = vmatpush1.msra.mxu0 0.0
    %294 = vmatprep.subr.mxu0 0.0
    %295 = vmatpush1.msra.mxu0 0.0
    %296 = vmatprep.subr.mxu0 0.0
    %297 = vmatpush1.msra.mxu0 0.0
    %298 = vmatprep.subr.mxu0 0.0
    %299 = vmatpush1.msra.mxu0 0.0
    %300 = vmatprep.subr.mxu0 0.0
    %301 = vmatpush1.msra.mxu0 0.0
    %302 = vmatprep.subr.mxu0 0.0
    %303 = vmatpush1.msra.mxu0 0.0
    %304 = vmatprep.subr.mxu0 0.0
    %305 = vmatpush1.msra.mxu0 0.0
    %306 = vmatprep.subr.mxu0 0.0
    %307 = vmatpush1.msra.mxu0 0.0
    %308 = vmatprep.subr.mxu0 0.0
    %309 = vmatpush1.msra.mxu0 0.0
    %310 = vmatprep.subr.mxu0 0.0
    %311 = vmatpush1.msra.mxu0 0.0
    %312 = vmatprep.subr.mxu0 0.0
    %313 = vmatpush1.msra.mxu0 0.0
    %314 = vmatprep.subr.mxu0 0.0
    %315 = vmatpush1.msra.mxu0 0.0
    %316 = vmatprep.subr.mxu0 0.0
    %317 = vmatpush1.msra.mxu0 0.0
    %318 = vmatprep.subr.mxu0 0.0
    %319 = vmatpush1.msra.mxu0 0.0
    %320 = vmatprep.subr.mxu0 0.0
    %321 = vmatpush1.msra.mxu0 0.0
    %322 = vmatprep.mubr.f32.mxu0 0.0
    %323 = vmatmul.mubr.f32.gmra.mrb[0].mxu0 %v250
    %v324 = vpop.f32.mrb[0].mxu0
    %v325 = vadd.f32 %v256, %v324
    %v326 = vpop.f32.mrb[0].mxu0
    %327 = vmatprep.mubr.f32.mxu0 0.0
    %328 = vmatmul.mubr.f32.gmra.mrb[0].mxu0 %v251
    %v329 = vpop.f32.mrb[0].mxu0
    %v330 = vadd.f32 %v256, %v329
    %v331 = vpop.f32.mrb[0].mxu0
    %332 = vdwg.mxu0
    %v333 = vld [vmem:[%s1] sm:$0x1]
    %334 = vmatprep.subr.mxu0 0.0
    %335 = vmatpush1.xpose.msra.mxu0 %v325
    %336 = vmatprep.subr.mxu0 0.0
    %337 = vmatpush1.xpose.msra.mxu0 0.0
    %338 = vmatprep.subr.mxu0 0.0
    %339 = vmatpush1.xpose.msra.mxu0 0.0
    %340 = vmatprep.subr.mxu0 0.0
    %341 = vmatpush1.xpose.msra.mxu0 0.0
    %342 = vmatprep.subr.mxu0 0.0
    %343 = vmatpush1.xpose.msra.mxu0 0.0
    %344 = vmatprep.subr.mxu0 0.0
    %345 = vmatpush1.xpose.msra.mxu0 0.0
    %346 = vmatprep.subr.mxu0 0.0
    %347 = vmatpush1.xpose.msra.mxu0 0.0
    %348 = vmatprep.subr.mxu0 0.0
    %349 = vmatpush1.xpose.msra.mxu0 0.0
    %350 = vmatprep.subr.mxu0 0.0
    %351 = vmatpush1.xpose.msra.mxu0 0.0
    %352 = vmatprep.subr.mxu0 0.0
    %353 = vmatpush1.xpose.msra.mxu0 0.0
    %354 = vmatprep.subr.mxu0 0.0
    %355 = vmatpush1.xpose.msra.mxu0 0.0
    %356 = vmatprep.subr.mxu0 0.0
    %357 = vmatpush1.xpose.msra.mxu0 0.0
    %358 = vmatprep.subr.mxu0 0.0
    %359 = vmatpush1.xpose.msra.mxu0 0.0
    %360 = vmatprep.subr.mxu0 0.0
    %361 = vmatpush1.xpose.msra.mxu0 0.0
    %362 = vmatprep.subr.mxu0 0.0
    %363 = vmatpush1.xpose.msra.mxu0 0.0
    %364 = vmatprep.subr.mxu0 0.0
    %365 = vmatpush1.xpose.msra.mxu0 0.0
    %366 = vmatprep.subr.mxu0 0.0
    %367 = vmatpush1.xpose.msra.mxu0 0.0
    %368 = vmatprep.subr.mxu0 0.0
    %369 = vmatpush1.xpose.msra.mxu0 0.0
    %370 = vmatprep.subr.mxu0 0.0
    %371 = vmatpush1.xpose.msra.mxu0 0.0
    %372 = vmatprep.subr.mxu0 0.0
    %373 = vmatpush1.xpose.msra.mxu0 0.0
    %374 = vmatprep.subr.mxu0 0.0
    %375 = vmatpush1.xpose.msra.mxu0 0.0
    %376 = vmatprep.subr.mxu0 0.0
    %377 = vmatpush1.xpose.msra.mxu0 0.0
    %378 = vmatprep.subr.mxu0 0.0
    %379 = vmatpush1.xpose.msra.mxu0 0.0
    %380 = vmatprep.subr.mxu0 0.0
    %381 = vmatpush1.xpose.msra.mxu0 0.0
    %382 = vmatprep.subr.mxu0 0.0
    %383 = vmatpush1.xpose.msra.mxu0 0.0
    %384 = vmatprep.subr.mxu0 0.0
    %385 = vmatpush1.xpose.msra.mxu0 0.0
    %386 = vmatprep.subr.mxu0 0.0
    %387 = vmatpush1.xpose.msra.mxu0 0.0
    %388 = vmatprep.subr.mxu0 0.0
    %389 = vmatpush1.xpose.msra.mxu0 0.0
    %390 = vmatprep.subr.mxu0 0.0
    %391 = vmatpush1.xpose.msra.mxu0 0.0
    %392 = vmatprep.subr.mxu0 0.0
    %393 = vmatpush1.xpose.msra.mxu0 0.0
    %394 = vmatprep.subr.mxu0 0.0
    %395 = vmatpush1.xpose.msra.mxu0 0.0
    %396 = vmatprep.subr.mxu0 0.0
    %397 = vmatpush1.xpose.msra.mxu0 0.0
    %398 = vmatprep.mubr.f32.mxu0 0.0
    %399 = vmatmul.mubr.f32.gmra.mrb[0].mxu0 %v146
    %v400 = vpop.f32.mrb[0].mxu0
    %v401 = vadd.f32 0.0, %v400
    %v402 = vpop.f32.mrb[0].mxu0
    %403 = vdwg.mxu0
    %vm404 = vcmask 64512
    %v405 = vsel %vm404, %v401, -inf
    %406 = vmax.xlane.f32.xlu0 %v405
    %v407 = vpop.xlane.xlu0 %406
    %v408 = vsub.f32 %v401, %v407
    %v409 = vmul.f32 %v408, 1.442695
    %v410 = vpow.pop %v409
    %v411 = vsel %vm404, %v410, 0.0
    %412 = vadd.xlane.f32.xlu0 %v411
    %v413 = vpop.xlane.xlu0 %412
    %v414 = vrcp.pop %v413
    %v415 = vmul.f32 %v410, %v414
    %v417 = vlaneseq
    %v418 = vshrl.u32 %v417, 7
    %v419 = vsub.s32 0, %v418
    %v420 = vrot.slane %v333, %v419
    %v422 = vmul.f32 %v415, %v420
    %v423 = vsel %vm404, %v422, 0.0
    %424 = vadd.xlane.f32.xlu0 %v423
    %v425 = vpop.xlane.xlu0 %424
    %v426 = vadd.f32 %v425, 1e-06
    %v427 = vrcp.pop %v426
    %v428 = vmul.f32 %v422, %v427
    %v430 = vsel %vm404, %v428, 0
    %432 = vmatprep.subr.mxu0 0.0
    %433 = vmatpush1.msra.mxu0 %v250
    %434 = vmatprep.subr.mxu0 0.0
    %435 = vmatpush1.msra.mxu0 0.0
    %436 = vmatprep.subr.mxu0 0.0
    %437 = vmatpush1.msra.mxu0 0.0
    %438 = vmatprep.subr.mxu0 0.0
    %439 = vmatpush1.msra.mxu0 0.0
    %440 = vmatprep.subr.mxu0 0.0
    %441 = vmatpush1.msra.mxu0 0.0
    %442 = vmatprep.subr.mxu0 0.0
    %443 = vmatpush1.msra.mxu0 0.0
    %444 = vmatprep.subr.mxu0 0.0
    %445 = vmatpush1.msra.mxu0 0.0
    %446 = vmatprep.subr.mxu0 0.0
    %447 = vmatpush1.msra.mxu0 0.0
    %448 = vmatprep.subr.mxu0 0.0
    %449 = vmatpush1.msra.mxu0 0.0
    %450 = vmatprep.subr.mxu0 0.0
    %451 = vmatpush1.msra.mxu0 0.0
    %452 = vmatprep.subr.mxu0 0.0
    %453 = vmatpush1.msra.mxu0 0.0
    %454 = vmatprep.subr.mxu0 0.0
    %455 = vmatpush1.msra.mxu0 0.0
    %456 = vmatprep.subr.mxu0 0.0
    %457 = vmatpush1.msra.mxu0 0.0
    %458 = vmatprep.subr.mxu0 0.0
    %459 = vmatpush1.msra.mxu0 0.0
    %460 = vmatprep.subr.mxu0 0.0
    %461 = vmatpush1.msra.mxu0 0.0
    %462 = vmatprep.subr.mxu0 0.0
    %463 = vmatpush1.msra.mxu0 0.0
    %464 = vmatprep.subr.mxu0 0.0
    %465 = vmatpush1.msra.mxu0 0.0
    %466 = vmatprep.subr.mxu0 0.0
    %467 = vmatpush1.msra.mxu0 0.0
    %468 = vmatprep.subr.mxu0 0.0
    %469 = vmatpush1.msra.mxu0 0.0
    %470 = vmatprep.subr.mxu0 0.0
    %471 = vmatpush1.msra.mxu0 0.0
    %472 = vmatprep.subr.mxu0 0.0
    %473 = vmatpush1.msra.mxu0 0.0
    %474 = vmatprep.subr.mxu0 0.0
    %475 = vmatpush1.msra.mxu0 0.0
    %476 = vmatprep.subr.mxu0 0.0
    %477 = vmatpush1.msra.mxu0 0.0
    %478 = vmatprep.subr.mxu0 0.0
    %479 = vmatpush1.msra.mxu0 0.0
    %480 = vmatprep.subr.mxu0 0.0
    %481 = vmatpush1.msra.mxu0 0.0
    %482 = vmatprep.subr.mxu0 0.0
    %483 = vmatpush1.msra.mxu0 0.0
    %484 = vmatprep.subr.mxu0 0.0
    %485 = vmatpush1.msra.mxu0 0.0
    %486 = vmatprep.subr.mxu0 0.0
    %487 = vmatpush1.msra.mxu0 0.0
    %488 = vmatprep.subr.mxu0 0.0
    %489 = vmatpush1.msra.mxu0 0.0
    %490 = vmatprep.subr.mxu0 0.0
    %491 = vmatpush1.msra.mxu0 0.0
    %492 = vmatprep.subr.mxu0 0.0
    %493 = vmatpush1.msra.mxu0 0.0
    %494 = vmatprep.subr.mxu0 0.0
    %495 = vmatpush1.msra.mxu0 0.0
    %496 = vmatprep.mubr.f32.mxu0 0.0
    %497 = vmatmul.mubr.f32.gmra.mrb[0].mxu0 %v430
    %v498 = vpop.f32.mrb[0].mxu0
    %v499 = vadd.f32 0.0, %v498
    %v500 = vpop.f32.mrb[0].mxu0
    %501 = vdwg.mxu0
    %v502 = vadd.f32 %v146, %v499
    %503 = vst [vmem:[#allocation2] sm:$0xff] %v502
    %504 = vst [vmem:[#allocation3] sm:$0xff] %v499
    %v505 = vsel %vm404, %v428, 0.0
    %v506 = vrot.slane %v505, 4
    %v507 = vadd.f32 %v505, %v506
    %v508 = vrot.slane %v507, 2
    %v509 = vadd.f32 %v507, %v508
    %v510 = vrot.slane %v509, 1
    %v511 = vadd.f32 %v509, %v510
    %v512 = vsel %vm404, %v511, -inf
    %513 = vmax.xlane.f32.xlu0 %v512
    %v514 = vpop.xlane.xlu0 %513
    %v515 = vsub.f32 %v511, %v514
    %v516 = vmul.f32 %v515, 1.442695
    %v517 = vpow.pop %v516
    %v518 = vsel %vm404, %v517, 0.0
    %519 = vadd.xlane.f32.xlu0 %v518
    %v520 = vpop.xlane.xlu0 %519
    %v521 = vrcp.pop %v520
    %v522 = vmul.f32 %v517, %v521
    %v523 = vmul.f32 %v522, %v333
    %vm524 = vcmask 57344
    %v525 = vsel %vm524, %v523, 0.0
    %526 = vadd.xlane.f32.xlu0 %v525
    %v527 = vpop.xlane.xlu0 %526
    %v528 = vadd.f32 %v527, 1e-06
    %v529 = vrcp.pop %v528
    %v530 = vmul.f32 %v523, %v529
    %v532 = vsel %vm404, %v530, 0
    %534 = vmatprep.subr.mxu0 0.0
    %535 = vmatpush1.msra.mxu0 %v502
    %536 = vmatprep.subr.mxu0 0.0
    %537 = vmatpush1.msra.mxu0 0.0
    %538 = vmatprep.subr.mxu0 0.0
    %539 = vmatpush1.msra.mxu0 0.0
    %540 = vmatprep.subr.mxu0 0.0
    %541 = vmatpush1.msra.mxu0 0.0
    %542 = vmatprep.subr.mxu0 0.0
    %543 = vmatpush1.msra.mxu0 0.0
    %544 = vmatprep.subr.mxu0 0.0
    %545 = vmatpush1.msra.mxu0 0.0
    %546 = vmatprep.subr.mxu0 0.0
    %547 = vmatpush1.msra.mxu0 0.0
    %548 = vmatprep.subr.mxu0 0.0
    %549 = vmatpush1.msra.mxu0 0.0
    %550 = vmatprep.subr.mxu0 0.0
    %551 = vmatpush1.msra.mxu0 0.0
    %552 = vmatprep.subr.mxu0 0.0
    %553 = vmatpush1.msra.mxu0 0.0
    %554 = vmatprep.subr.mxu0 0.0
    %555 = vmatpush1.msra.mxu0 0.0
    %556 = vmatprep.subr.mxu0 0.0
    %557 = vmatpush1.msra.mxu0 0.0
    %558 = vmatprep.subr.mxu0 0.0
    %559 = vmatpush1.msra.mxu0 0.0
    %560 = vmatprep.subr.mxu0 0.0
    %561 = vmatpush1.msra.mxu0 0.0
    %562 = vmatprep.subr.mxu0 0.0
    %563 = vmatpush1.msra.mxu0 0.0
    %564 = vmatprep.subr.mxu0 0.0
    %565 = vmatpush1.msra.mxu0 0.0
    %566 = vmatprep.subr.mxu0 0.0
    %567 = vmatpush1.msra.mxu0 0.0
    %568 = vmatprep.subr.mxu0 0.0
    %569 = vmatpush1.msra.mxu0 0.0
    %570 = vmatprep.subr.mxu0 0.0
    %571 = vmatpush1.msra.mxu0 0.0
    %572 = vmatprep.subr.mxu0 0.0
    %573 = vmatpush1.msra.mxu0 0.0
    %574 = vmatprep.subr.mxu0 0.0
    %575 = vmatpush1.msra.mxu0 0.0
    %576 = vmatprep.subr.mxu0 0.0
    %577 = vmatpush1.msra.mxu0 0.0
    %578 = vmatprep.subr.mxu0 0.0
    %579 = vmatpush1.msra.mxu0 0.0
    %580 = vmatprep.subr.mxu0 0.0
    %581 = vmatpush1.msra.mxu0 0.0
    %582 = vmatprep.subr.mxu0 0.0
    %583 = vmatpush1.msra.mxu0 0.0
    %584 = vmatprep.subr.mxu0 0.0
    %585 = vmatpush1.msra.mxu0 0.0
    %586 = vmatprep.subr.mxu0 0.0
    %587 = vmatpush1.msra.mxu0 0.0
    %588 = vmatprep.subr.mxu0 0.0
    %589 = vmatpush1.msra.mxu0 0.0
    %590 = vmatprep.subr.mxu0 0.0
    %591 = vmatpush1.msra.mxu0 0.0
    %592 = vmatprep.subr.mxu0 0.0
    %593 = vmatpush1.msra.mxu0 0.0
    %594 = vmatprep.subr.mxu0 0.0
    %595 = vmatpush1.msra.mxu0 0.0
    %596 = vmatprep.subr.mxu0 0.0
    %597 = vmatpush1.msra.mxu0 0.0
    %598 = vmatprep.mubr.f32.mxu0 0.0
    %599 = vmatmul.mubr.f32.gmra.mrb[0].mxu0 %v532
    %v600 = vpop.f32.mrb[0].mxu0
    %v601 = vadd.f32 0.0, %v600
    %v602 = vpop.f32.mrb[0].mxu0
    %603 = vdwg.mxu0
    %604 = vst [vmem:[#allocation4] sm:$0x1] %v601
    %s605 = scalar_lea.vmem %s1, 1
    %v606 = vld [vmem:[%s605] sm:$0x1]
    %607 = vmatprep.subr.mxu0 0.0
    %608 = vmatpush1.xpose.msra.mxu0 %v330
    %609 = vmatprep.subr.mxu0 0.0
    %610 = vmatpush1.xpose.msra.mxu0 0.0
    %611 = vmatprep.subr.mxu0 0.0
    %612 = vmatpush1.xpose.msra.mxu0 0.0
    %613 = vmatprep.subr.mxu0 0.0
    %614 = vmatpush1.xpose.msra.mxu0 0.0
    %615 = vmatprep.subr.mxu0 0.0
    %616 = vmatpush1.xpose.msra.mxu0 0.0
    %617 = vmatprep.subr.mxu0 0.0
    %618 = vmatpush1.xpose.msra.mxu0 0.0
    %619 = vmatprep.subr.mxu0 0.0
    %620 = vmatpush1.xpose.msra.mxu0 0.0
    %621 = vmatprep.subr.mxu0 0.0
    %622 = vmatpush1.xpose.msra.mxu0 0.0
    %623 = vmatprep.subr.mxu0 0.0
    %624 = vmatpush1.xpose.msra.mxu0 0.0
    %625 = vmatprep.subr.mxu0 0.0
    %626 = vmatpush1.xpose.msra.mxu0 0.0
    %627 = vmatprep.subr.mxu0 0.0
    %628 = vmatpush1.xpose.msra.mxu0 0.0
    %629 = vmatprep.subr.mxu0 0.0
    %630 = vmatpush1.xpose.msra.mxu0 0.0
    %631 = vmatprep.subr.mxu0 0.0
    %632 = vmatpush1.xpose.msra.mxu0 0.0
    %633 = vmatprep.subr.mxu0 0.0
    %634 = vmatpush1.xpose.msra.mxu0 0.0
    %635 = vmatprep.subr.mxu0 0.0
    %636 = vmatpush1.xpose.msra.mxu0 0.0
    %637 = vmatprep.subr.mxu0 0.0
    %638 = vmatpush1.xpose.msra.mxu0 0.0
    %639 = vmatprep.subr.mxu0 0.0
    %640 = vmatpush1.xpose.msra.mxu0 0.0
    %641 = vmatprep.subr.mxu0 0.0
    %642 = vmatpush1.xpose.msra.mxu0 0.0
    %643 = vmatprep.subr.mxu0 0.0
    %644 = vmatpush1.xpose.msra.mxu0 0.0
    %645 = vmatprep.subr.mxu0 0.0
    %646 = vmatpush1.xpose.msra.mxu0 0.0
    %647 = vmatprep.subr.mxu0 0.0
    %648 = vmatpush1.xpose.msra.mxu0 0.0
    %649 = vmatprep.subr.mxu0 0.0
    %650 = vmatpush1.xpose.msra.mxu0 0.0
    %651 = vmatprep.subr.mxu0 0.0
    %652 = vmatpush1.xpose.msra.mxu0 0.0
    %653 = vmatprep.subr.mxu0 0.0
    %654 = vmatpush1.xpose.msra.mxu0 0.0
    %655 = vmatprep.subr.mxu0 0.0
    %656 = vmatpush1.xpose.msra.mxu0 0.0
    %657 = vmatprep.subr.mxu0 0.0
    %658 = vmatpush1.xpose.msra.mxu0 0.0
    %659 = vmatprep.subr.mxu0 0.0
    %660 = vmatpush1.xpose.msra.mxu0 0.0
    %661 = vmatprep.subr.mxu0 0.0
    %662 = vmatpush1.xpose.msra.mxu0 0.0
    %663 = vmatprep.subr.mxu0 0.0
    %664 = vmatpush1.xpose.msra.mxu0 0.0
    %665 = vmatprep.subr.mxu0 0.0
    %666 = vmatpush1.xpose.msra.mxu0 0.0
    %667 = vmatprep.subr.mxu0 0.0
    %668 = vmatpush1.xpose.msra.mxu0 0.0
    %669 = vmatprep.subr.mxu0 0.0
    %670 = vmatpush1.xpose.msra.mxu0 0.0
    %671 = vmatprep.mubr.f32.mxu0 0.0
    %672 = vmatmul.mubr.f32.gmra.mrb[0].mxu0 %v147
    %v673 = vpop.f32.mrb[0].mxu0
    %v674 = vadd.f32 0.0, %v673
    %v675 = vpop.f32.mrb[0].mxu0
    %676 = vdwg.mxu0
    %v677 = vsel %vm404, %v674, -inf
    %678 = vmax.xlane.f32.xlu0 %v677
    %v679 = vpop.xlane.xlu0 %678
    %v680 = vsub.f32 %v674, %v679
    %v681 = vmul.f32 %v680, 1.442695
    %v682 = vpow.pop %v681
    %v683 = vsel %vm404, %v682, 0.0
    %684 = vadd.xlane.f32.xlu0 %v683
    %v685 = vpop.xlane.xlu0 %684
    %v686 = vrcp.pop %v685
    %v687 = vmul.f32 %v682, %v686
    %v689 = vlaneseq
    %v690 = vshrl.u32 %v689, 7
    %v691 = vsub.s32 0, %v690
    %v692 = vrot.slane %v606, %v691
    %v694 = vmul.f32 %v687, %v692
    %v695 = vsel %vm404, %v694, 0.0
    %696 = vadd.xlane.f32.xlu0 %v695
    %v697 = vpop.xlane.xlu0 %696
    %v698 = vadd.f32 %v697, 1e-06
    %v699 = vrcp.pop %v698
    %v700 = vmul.f32 %v694, %v699
    %v702 = vsel %vm404, %v700, 0
    %704 = vmatprep.subr.mxu0 0.0
    %705 = vmatpush1.msra.mxu0 %v251
    %706 = vmatprep.subr.mxu0 0.0
    %707 = vmatpush1.msra.mxu0 0.0
    %708 = vmatprep.subr.mxu0 0.0
    %709 = vmatpush1.msra.mxu0 0.0
    %710 = vmatprep.subr.mxu0 0.0
    %711 = vmatpush1.msra.mxu0 0.0
    %712 = vmatprep.subr.mxu0 0.0
    %713 = vmatpush1.msra.mxu0 0.0
    %714 = vmatprep.subr.mxu0 0.0
    %715 = vmatpush1.msra.mxu0 0.0
    %716 = vmatprep.subr.mxu0 0.0
    %717 = vmatpush1.msra.mxu0 0.0
    %718 = vmatprep.subr.mxu0 0.0
    %719 = vmatpush1.msra.mxu0 0.0
    %720 = vmatprep.subr.mxu0 0.0
    %721 = vmatpush1.msra.mxu0 0.0
    %722 = vmatprep.subr.mxu0 0.0
    %723 = vmatpush1.msra.mxu0 0.0
    %724 = vmatprep.subr.mxu0 0.0
    %725 = vmatpush1.msra.mxu0 0.0
    %726 = vmatprep.subr.mxu0 0.0
    %727 = vmatpush1.msra.mxu0 0.0
    %728 = vmatprep.subr.mxu0 0.0
    %729 = vmatpush1.msra.mxu0 0.0
    %730 = vmatprep.subr.mxu0 0.0
    %731 = vmatpush1.msra.mxu0 0.0
    %732 = vmatprep.subr.mxu0 0.0
    %733 = vmatpush1.msra.mxu0 0.0
    %734 = vmatprep.subr.mxu0 0.0
    %735 = vmatpush1.msra.mxu0 0.0
    %736 = vmatprep.subr.mxu0 0.0
    %737 = vmatpush1.msra.mxu0 0.0
    %738 = vmatprep.subr.mxu0 0.0
    %739 = vmatpush1.msra.mxu0 0.0
    %740 = vmatprep.subr.mxu0 0.0
    %741 = vmatpush1.msra.mxu0 0.0
    %742 = vmatprep.subr.mxu0 0.0
    %743 = vmatpush1.msra.mxu0 0.0
    %744 = vmatprep.subr.mxu0 0.0
    %745 = vmatpush1.msra.mxu0 0.0
    %746 = vmatprep.subr.mxu0 0.0
    %747 = vmatpush1.msra.mxu0 0.0
    %748 = vmatprep.subr.mxu0 0.0
    %749 = vmatpush1.msra.mxu0 0.0
    %750 = vmatprep.subr.mxu0 0.0
    %751 = vmatpush1.msra.mxu0 0.0
    %752 = vmatprep.subr.mxu0 0.0
    %753 = vmatpush1.msra.mxu0 0.0
    %754 = vmatprep.subr.mxu0 0.0
    %755 = vmatpush1.msra.mxu0 0.0
    %756 = vmatprep.subr.mxu0 0.0
    %757 = vmatpush1.msra.mxu0 0.0
    %758 = vmatprep.subr.mxu0 0.0
    %759 = vmatpush1.msra.mxu0 0.0
    %760 = vmatprep.subr.mxu0 0.0
    %761 = vmatpush1.msra.mxu0 0.0
    %762 = vmatprep.subr.mxu0 0.0
    %763 = vmatpush1.msra.mxu0 0.0
    %764 = vmatprep.subr.mxu0 0.0
    %765 = vmatpush1.msra.mxu0 0.0
    %766 = vmatprep.subr.mxu0 0.0
    %767 = vmatpush1.msra.mxu0 0.0
    %768 = vmatprep.mubr.f32.mxu0 0.0
    %769 = vmatmul.mubr.f32.gmra.mrb[0].mxu0 %v702
    %v770 = vpop.f32.mrb[0].mxu0
    %v771 = vadd.f32 0.0, %v770
    %v772 = vpop.f32.mrb[0].mxu0
    %773 = vdwg.mxu0
    %v774 = vadd.f32 %v147, %v771
    %775 = vst [vmem:[#allocation2 + $0x8] sm:$0xff] %v774
    %776 = vst [vmem:[#allocation3 + $0x8] sm:$0xff] %v771
    %v777 = vsel %vm404, %v700, 0.0
    %v778 = vrot.slane %v777, 4
    %v779 = vadd.f32 %v777, %v778
    %v780 = vrot.slane %v779, 2
    %v781 = vadd.f32 %v779, %v780
    %v782 = vrot.slane %v781, 1
    %v783 = vadd.f32 %v781, %v782
    %v784 = vsel %vm404, %v783, -inf
    %785 = vmax.xlane.f32.xlu0 %v784
    %v786 = vpop.xlane.xlu0 %785
    %v787 = vsub.f32 %v783, %v786
    %v788 = vmul.f32 %v787, 1.442695
    %v789 = vpow.pop %v788
    %v790 = vsel %vm404, %v789, 0.0
    %791 = vadd.xlane.f32.xlu0 %v790
    %v792 = vpop.xlane.xlu0 %791
    %v793 = vrcp.pop %v792
    %v794 = vmul.f32 %v789, %v793
    %v795 = vmul.f32 %v794, %v606
    %v796 = vsel %vm524, %v795, 0.0
    %797 = vadd.xlane.f32.xlu0 %v796
    %v798 = vpop.xlane.xlu0 %797
    %v799 = vadd.f32 %v798, 1e-06
    %v800 = vrcp.pop %v799
    %v801 = vmul.f32 %v795, %v800
    %v803 = vsel %vm404, %v801, 0
    %805 = vmatprep.subr.mxu0 0.0
    %806 = vmatpush1.msra.mxu0 %v774
    %807 = vmatprep.subr.mxu0 0.0
    %808 = vmatpush1.msra.mxu0 0.0
    %809 = vmatprep.subr.mxu0 0.0
    %810 = vmatpush1.msra.mxu0 0.0
    %811 = vmatprep.subr.mxu0 0.0
    %812 = vmatpush1.msra.mxu0 0.0
    %813 = vmatprep.subr.mxu0 0.0
    %814 = vmatpush1.msra.mxu0 0.0
    %815 = vmatprep.subr.mxu0 0.0
    %816 = vmatpush1.msra.mxu0 0.0
    %817 = vmatprep.subr.mxu0 0.0
    %818 = vmatpush1.msra.mxu0 0.0
    %819 = vmatprep.subr.mxu0 0.0
    %820 = vmatpush1.msra.mxu0 0.0
    %821 = vmatprep.subr.mxu0 0.0
    %822 = vmatpush1.msra.mxu0 0.0
    %823 = vmatprep.subr.mxu0 0.0
    %824 = vmatpush1.msra.mxu0 0.0
    %825 = vmatprep.subr.mxu0 0.0
    %826 = vmatpush1.msra.mxu0 0.0
    %827 = vmatprep.subr.mxu0 0.0
    %828 = vmatpush1.msra.mxu0 0.0
    %829 = vmatprep.subr.mxu0 0.0
    %830 = vmatpush1.msra.mxu0 0.0
    %831 = vmatprep.subr.mxu0 0.0
    %832 = vmatpush1.msra.mxu0 0.0
    %833 = vmatprep.subr.mxu0 0.0
    %834 = vmatpush1.msra.mxu0 0.0
    %835 = vmatprep.subr.mxu0 0.0
    %836 = vmatpush1.msra.mxu0 0.0
    %837 = vmatprep.subr.mxu0 0.0
    %838 = vmatpush1.msra.mxu0 0.0
    %839 = vmatprep.subr.mxu0 0.0
    %840 = vmatpush1.msra.mxu0 0.0
    %841 = vmatprep.subr.mxu0 0.0
    %842 = vmatpush1.msra.mxu0 0.0
    %843 = vmatprep.subr.mxu0 0.0
    %844 = vmatpush1.msra.mxu0 0.0
    %845 = vmatprep.subr.mxu0 0.0
    %846 = vmatpush1.msra.mxu0 0.0
    %847 = vmatprep.subr.mxu0 0.0
    %848 = vmatpush1.msra.mxu0 0.0
    %849 = vmatprep.subr.mxu0 0.0
    %850 = vmatpush1.msra.mxu0 0.0
    %851 = vmatprep.subr.mxu0 0.0
    %852 = vmatpush1.msra.mxu0 0.0
    %853 = vmatprep.subr.mxu0 0.0
    %854 = vmatpush1.msra.mxu0 0.0
    %855 = vmatprep.subr.mxu0 0.0
    %856 = vmatpush1.msra.mxu0 0.0
    %857 = vmatprep.subr.mxu0 0.0
    %858 = vmatpush1.msra.mxu0 0.0
    %859 = vmatprep.subr.mxu0 0.0
    %860 = vmatpush1.msra.mxu0 0.0
    %861 = vmatprep.subr.mxu0 0.0
    %862 = vmatpush1.msra.mxu0 0.0
    %863 = vmatprep.subr.mxu0 0.0
    %864 = vmatpush1.msra.mxu0 0.0
    %865 = vmatprep.subr.mxu0 0.0
    %866 = vmatpush1.msra.mxu0 0.0
    %867 = vmatprep.subr.mxu0 0.0
    %868 = vmatpush1.msra.mxu0 0.0
    %869 = vmatprep.mubr.f32.mxu0 0.0
    %870 = vmatmul.mubr.f32.gmra.mrb[0].mxu0 %v803
    %v871 = vpop.f32.mrb[0].mxu0
    %v872 = vadd.f32 0.0, %v871
    %v873 = vpop.f32.mrb[0].mxu0
    %874 = vdwg.mxu0
    %875 = vst [vmem:[#allocation4 + $0x1] sm:$0x1] %v872
    %v876 = vld [vmem:[#allocation4] sm:$0x3]
    %v878 = vlaneseq
    %v879 = vshrl.u32 %v878, 7
    %v880 = vsub.s32 0, %v879
    %v881 = vrot.slane %v198, %v880
    %883 = vmatprep.subr.mxu0 0.0
    %884 = vmatpush1.msra.mxu0 %v182
    %885 = vmatprep.subr.mxu0 0.0
    %886 = vmatpush1.msra.mxu0 %v183
    %887 = vmatprep.subr.mxu0 0.0
    %888 = vmatpush1.msra.mxu0 %v184
    %889 = vmatprep.subr.mxu0 0.0
    %890 = vmatpush1.msra.mxu0 %v185
    %891 = vmatprep.subr.mxu0 0.0
    %892 = vmatpush1.msra.mxu0 %v186
    %893 = vmatprep.subr.mxu0 0.0
    %894 = vmatpush1.msra.mxu0 %v187
    %895 = vmatprep.subr.mxu0 0.0
    %896 = vmatpush1.msra.mxu0 %v188
    %897 = vmatprep.subr.mxu0 0.0
    %898 = vmatpush1.msra.mxu0 %v189
    %899 = vmatprep.subr.mxu0 0.0
    %900 = vmatpush1.msra.mxu0 %v190
    %901 = vmatprep.subr.mxu0 0.0
    %902 = vmatpush1.msra.mxu0 %v191
    %903 = vmatprep.subr.mxu0 0.0
    %904 = vmatpush1.msra.mxu0 %v192
    %905 = vmatprep.subr.mxu0 0.0
    %906 = vmatpush1.msra.mxu0 %v193
    %907 = vmatprep.subr.mxu0 0.0
    %908 = vmatpush1.msra.mxu0 %v194
    %909 = vmatprep.subr.mxu0 0.0
    %910 = vmatpush1.msra.mxu0 %v195
    %911 = vmatprep.subr.mxu0 0.0
    %912 = vmatpush1.msra.mxu0 %v196
    %913 = vmatprep.subr.mxu0 0.0
    %914 = vmatpush1.msra.mxu0 %v197
    %915 = vmatprep.subr.mxu0 0.0
    %916 = vmatpush1.msra.mxu0 0.0
    %917 = vmatprep.subr.mxu0 0.0
    %918 = vmatpush1.msra.mxu0 0.0
    %919 = vmatprep.subr.mxu0 0.0
    %920 = vmatpush1.msra.mxu0 0.0
    %921 = vmatprep.subr.mxu0 0.0
    %922 = vmatpush1.msra.mxu0 0.0
    %923 = vmatprep.subr.mxu0 0.0
    %924 = vmatpush1.msra.mxu0 0.0
    %925 = vmatprep.subr.mxu0 0.0
    %926 = vmatpush1.msra.mxu0 0.0
    %927 = vmatprep.subr.mxu0 0.0
    %928 = vmatpush1.msra.mxu0 0.0
    %929 = vmatprep.subr.mxu0 0.0
    %930 = vmatpush1.msra.mxu0 0.0
    %931 = vmatprep.subr.mxu0 0.0
    %932 = vmatpush1.msra.mxu0 0.0
    %933 = vmatprep.subr.mxu0 0.0
    %934 = vmatpush1.msra.mxu0 0.0
    %935 = vmatprep.subr.mxu0 0.0
    %936 = vmatpush1.msra.mxu0 0.0
    %937 = vmatprep.subr.mxu0 0.0
    %938 = vmatpush1.msra.mxu0 0.0
    %939 = vmatprep.subr.mxu0 0.0
    %940 = vmatpush1.msra.mxu0 0.0
    %941 = vmatprep.subr.mxu0 0.0
    %942 = vmatpush1.msra.mxu0 0.0
    %943 = vmatprep.subr.mxu0 0.0
    %944 = vmatpush1.msra.mxu0 0.0
    %945 = vmatprep.subr.mxu0 0.0
    %946 = vmatpush1.msra.mxu0 0.0
    %947 = vmatprep.mubr.f32.mxu0 0.0
    %948 = vmatmul.mubr.f32.gmra.mrb[0].mxu0 %v876
    %v949 = vpop.f32.mrb[0].mxu0
    %v950 = vadd.f32 %v881, %v949
    %v951 = vpop.f32.mrb[0].mxu0
    %952 = vdwg.mxu0
    %v953 = vxor.u32 %v950, 2147483648
    %v954 = vmul.f32 %v953, 1.442695
    %v955 = vpow.pop %v954
    %v956 = vadd.f32 %v955, 1.0
    %v957 = vrcp.pop %v956
    %v958 = vmul.f32 1.0, %v957
    %v959 = vpack.c.bf16 %v249, %v249
    %v976 = vunpack.c.l.b16 %v199
    %v977 = vunpack.c.l.b16 %v200
    %v978 = vunpack.c.l.b16 %v201
    %v979 = vunpack.c.l.b16 %v202
    %v980 = vunpack.c.l.b16 %v203
    %v981 = vunpack.c.l.b16 %v204
    %v982 = vunpack.c.l.b16 %v205
    %v983 = vunpack.c.l.b16 %v206
    %v984 = vunpack.c.l.b16 %v207
    %v985 = vunpack.c.l.b16 %v208
    %v986 = vunpack.c.l.b16 %v209
    %v987 = vunpack.c.l.b16 %v210
    %v988 = vunpack.c.l.b16 %v211
    %v989 = vunpack.c.l.b16 %v212
    %v990 = vunpack.c.l.b16 %v213
    %v991 = vunpack.c.l.b16 %v214
    %v992 = vpack.c.b16 %v977, %v976
    %v993 = vpack.c.b16 %v979, %v978
    %v994 = vpack.c.b16 %v981, %v980
    %v995 = vpack.c.b16 %v983, %v982
    %v996 = vpack.c.b16 %v985, %v984
    %v997 = vpack.c.b16 %v987, %v986
    %v998 = vpack.c.b16 %v989, %v988
    %v999 = vpack.c.b16 %v991, %v990
    %1008 = vmatprep.subr.bf16.mxu0 0
    %1009 = vmatpush1.bf16.xpose.msra.mxu0 %v992
    %1010 = vmatprep.subr.bf16.mxu0 0
    %1011 = vmatpush1.bf16.xpose.msra.mxu0 %v993
    %1012 = vmatprep.subr.bf16.mxu0 0
    %1013 = vmatpush1.bf16.xpose.msra.mxu0 %v994
    %1014 = vmatprep.subr.bf16.mxu0 0
    %1015 = vmatpush1.bf16.xpose.msra.mxu0 %v995
    %1016 = vmatprep.subr.bf16.mxu0 0
    %1017 = vmatpush1.bf16.xpose.msra.mxu0 %v996
    %1018 = vmatprep.subr.bf16.mxu0 0
    %1019 = vmatpush1.bf16.xpose.msra.mxu0 %v997
    %1020 = vmatprep.subr.bf16.mxu0 0
    %1021 = vmatpush1.bf16.xpose.msra.mxu0 %v998
    %1022 = vmatprep.subr.bf16.mxu0 0
    %1023 = vmatpush1.bf16.xpose.msra.mxu0 %v999
    %1024 = vmatprep.subr.bf16.mxu0 0
    %1025 = vmatpush1.bf16.xpose.msra.mxu0 0
    %1026 = vmatprep.subr.bf16.mxu0 0
    %1027 = vmatpush1.bf16.xpose.msra.mxu0 0
    %1028 = vmatprep.subr.bf16.mxu0 0
    %1029 = vmatpush1.bf16.xpose.msra.mxu0 0
    %1030 = vmatprep.subr.bf16.mxu0 0
    %1031 = vmatpush1.bf16.xpose.msra.mxu0 0
    %1032 = vmatprep.subr.bf16.mxu0 0
    %1033 = vmatpush1.bf16.xpose.msra.mxu0 0
    %1034 = vmatprep.subr.bf16.mxu0 0
    %1035 = vmatpush1.bf16.xpose.msra.mxu0 0
    %1036 = vmatprep.subr.bf16.mxu0 0
    %1037 = vmatpush1.bf16.xpose.msra.mxu0 0
    %1038 = vmatprep.subr.bf16.mxu0 0
    %1039 = vmatpush1.bf16.xpose.msra.mxu0 0
    %1040 = vmatprep.mubr.bf16.mxu0 0
    %1041 = vmatmul.mubr.bf16.gmra.mrb[0].mxu0 %v959
    %v1042 = vpop.f32.mrb[0].mxu0
    %v1043 = vadd.f32 0.0, %v1042
    %v1044 = vpop.f32.mrb[0].mxu0
    %v1045 = vpop.f32.mrb[0].mxu0
    %v1046 = vpop.f32.mrb[0].mxu0
    %1047 = vdwg.mxu0
    %v1048 = vpack.c.bf16 %v958, %v958
    %v1065 = vunpack.c.l.b16 %v215
    %v1066 = vunpack.c.l.b16 %v216
    %v1067 = vunpack.c.l.b16 %v217
    %v1068 = vunpack.c.l.b16 %v218
    %v1069 = vunpack.c.l.b16 %v219
    %v1070 = vunpack.c.l.b16 %v220
    %v1071 = vunpack.c.l.b16 %v221
    %v1072 = vunpack.c.l.b16 %v222
    %v1073 = vunpack.c.l.b16 %v223
    %v1074 = vunpack.c.l.b16 %v224
    %v1075 = vunpack.c.l.b16 %v225
    %v1076 = vunpack.c.l.b16 %v226
    %v1077 = vunpack.c.l.b16 %v227
    %v1078 = vunpack.c.l.b16 %v228
    %v1079 = vunpack.c.l.b16 %v229
    %v1080 = vunpack.c.l.b16 %v230
    %v1081 = vpack.c.b16 %v1066, %v1065
    %v1082 = vpack.c.b16 %v1068, %v1067
    %v1083 = vpack.c.b16 %v1070, %v1069
    %v1084 = vpack.c.b16 %v1072, %v1071
    %v1085 = vpack.c.b16 %v1074, %v1073
    %v1086 = vpack.c.b16 %v1076, %v1075
    %v1087 = vpack.c.b16 %v1078, %v1077
    %v1088 = vpack.c.b16 %v1080, %v1079
    %1097 = vmatprep.subr.bf16.mxu0 0
    %1098 = vmatpush1.bf16.xpose.msra.mxu0 %v1081
    %1099 = vmatprep.subr.bf16.mxu0 0
    %1100 = vmatpush1.bf16.xpose.msra.mxu0 %v1082
    %1101 = vmatprep.subr.bf16.mxu0 0
    %1102 = vmatpush1.bf16.xpose.msra.mxu0 %v1083
    %1103 = vmatprep.subr.bf16.mxu0 0
    %1104 = vmatpush1.bf16.xpose.msra.mxu0 %v1084
    %1105 = vmatprep.subr.bf16.mxu0 0
    %1106 = vmatpush1.bf16.xpose.msra.mxu0 %v1085
    %1107 = vmatprep.subr.bf16.mxu0 0
    %1108 = vmatpush1.bf16.xpose.msra.mxu0 %v1086
    %1109 = vmatprep.subr.bf16.mxu0 0
    %1110 = vmatpush1.bf16.xpose.msra.mxu0 %v1087
    %1111 = vmatprep.subr.bf16.mxu0 0
    %1112 = vmatpush1.bf16.xpose.msra.mxu0 %v1088
    %1113 = vmatprep.subr.bf16.mxu0 0
    %1114 = vmatpush1.bf16.xpose.msra.mxu0 0
    %1115 = vmatprep.subr.bf16.mxu0 0
    %1116 = vmatpush1.bf16.xpose.msra.mxu0 0
    %1117 = vmatprep.subr.bf16.mxu0 0
    %1118 = vmatpush1.bf16.xpose.msra.mxu0 0
    %1119 = vmatprep.subr.bf16.mxu0 0
    %1120 = vmatpush1.bf16.xpose.msra.mxu0 0
    %1121 = vmatprep.subr.bf16.mxu0 0
    %1122 = vmatpush1.bf16.xpose.msra.mxu0 0
    %1123 = vmatprep.subr.bf16.mxu0 0
    %1124 = vmatpush1.bf16.xpose.msra.mxu0 0
    %1125 = vmatprep.subr.bf16.mxu0 0
    %1126 = vmatpush1.bf16.xpose.msra.mxu0 0
    %1127 = vmatprep.subr.bf16.mxu0 0
    %1128 = vmatpush1.bf16.xpose.msra.mxu0 0
    %1129 = vmatprep.mubr.bf16.mxu0 0
    %1130 = vmatmul.mubr.bf16.gmra.mrb[0].mxu0 %v1048
    %v1131 = vpop.f32.mrb[0].mxu0
    %v1132 = vadd.f32 0.0, %v1131
    %v1133 = vpop.f32.mrb[0].mxu0
    %v1134 = vpop.f32.mrb[0].mxu0
    %v1135 = vpop.f32.mrb[0].mxu0
    %1136 = vdwg.mxu0
    %v1137 = vmul.f32 %v1043, %v1132
    %v1138 = vpack.c.bf16 %v1137, %v1137
    %v1155 = vunpack.c.l.b16 %v231
    %v1156 = vunpack.c.l.b16 %v232
    %v1157 = vunpack.c.l.b16 %v233
    %v1158 = vunpack.c.l.b16 %v234
    %v1159 = vunpack.c.l.b16 %v235
    %v1160 = vunpack.c.l.b16 %v236
    %v1161 = vunpack.c.l.b16 %v237
    %v1162 = vunpack.c.l.b16 %v238
    %v1163 = vunpack.c.l.b16 %v239
    %v1164 = vunpack.c.l.b16 %v240
    %v1165 = vunpack.c.l.b16 %v241
    %v1166 = vunpack.c.l.b16 %v242
    %v1167 = vunpack.c.l.b16 %v243
    %v1168 = vunpack.c.l.b16 %v244
    %v1169 = vunpack.c.l.b16 %v245
    %v1170 = vunpack.c.l.b16 %v246
    %v1171 = vpack.c.b16 %v1156, %v1155
    %v1172 = vpack.c.b16 %v1158, %v1157
    %v1173 = vpack.c.b16 %v1160, %v1159
    %v1174 = vpack.c.b16 %v1162, %v1161
    %v1175 = vpack.c.b16 %v1164, %v1163
    %v1176 = vpack.c.b16 %v1166, %v1165
    %v1177 = vpack.c.b16 %v1168, %v1167
    %v1178 = vpack.c.b16 %v1170, %v1169
    %1187 = vmatprep.subr.bf16.mxu0 0
    %1188 = vmatpush1.bf16.msra.mxu0 %v1171
    %1189 = vmatprep.subr.bf16.mxu0 0
    %1190 = vmatpush1.bf16.msra.mxu0 %v1172
    %1191 = vmatprep.subr.bf16.mxu0 0
    %1192 = vmatpush1.bf16.msra.mxu0 %v1173
    %1193 = vmatprep.subr.bf16.mxu0 0
    %1194 = vmatpush1.bf16.msra.mxu0 %v1174
    %1195 = vmatprep.subr.bf16.mxu0 0
    %1196 = vmatpush1.bf16.msra.mxu0 %v1175
    %1197 = vmatprep.subr.bf16.mxu0 0
    %1198 = vmatpush1.bf16.msra.mxu0 %v1176
    %1199 = vmatprep.subr.bf16.mxu0 0
    %1200 = vmatpush1.bf16.msra.mxu0 %v1177
    %1201 = vmatprep.subr.bf16.mxu0 0
    %1202 = vmatpush1.bf16.msra.mxu0 %v1178
    %1203 = vmatprep.subr.bf16.mxu0 0
    %1204 = vmatpush1.bf16.msra.mxu0 0
    %1205 = vmatprep.subr.bf16.mxu0 0
    %1206 = vmatpush1.bf16.msra.mxu0 0
    %1207 = vmatprep.subr.bf16.mxu0 0
    %1208 = vmatpush1.bf16.msra.mxu0 0
    %1209 = vmatprep.subr.bf16.mxu0 0
    %1210 = vmatpush1.bf16.msra.mxu0 0
    %1211 = vmatprep.subr.bf16.mxu0 0
    %1212 = vmatpush1.bf16.msra.mxu0 0
    %1213 = vmatprep.subr.bf16.mxu0 0
    %1214 = vmatpush1.bf16.msra.mxu0 0
    %1215 = vmatprep.subr.bf16.mxu0 0
    %1216 = vmatpush1.bf16.msra.mxu0 0
    %1217 = vmatprep.subr.bf16.mxu0 0
    %1218 = vmatpush1.bf16.msra.mxu0 0
    %1219 = vmatprep.mubr.bf16.mxu0 0
    %1220 = vmatmul.mubr.bf16.gmra.mrb[0].mxu0 %v1138
    %v1221 = vpop.f32.mrb[0].mxu0
    %v1222 = vadd.f32 0.0, %v1221
    %v1223 = vpop.f32.mrb[0].mxu0
    %v1224 = vpop.f32.mrb[0].mxu0
    %v1225 = vpop.f32.mrb[0].mxu0
    %1226 = vdwg.mxu0
    %v1227 = vmin.f32 %v1222, 1.0
    %v1228 = vld [vmem:[#allocation2] sm:$0xff]
    %v1229 = vld [vmem:[#allocation2 + $0x8] sm:$0xff]
    %1230 = vmatprep.subr.mxu0 0.0
    %1231 = vmatpush1.msra.mxu0 %v148
    %1232 = vmatprep.subr.mxu0 0.0
    %1233 = vmatpush1.msra.mxu0 %v149
    %1234 = vmatprep.subr.mxu0 0.0
    %1235 = vmatpush1.msra.mxu0 %v150
    %1236 = vmatprep.subr.mxu0 0.0
    %1237 = vmatpush1.msra.mxu0 %v151
    %1238 = vmatprep.subr.mxu0 0.0
    %1239 = vmatpush1.msra.mxu0 %v152
    %1240 = vmatprep.subr.mxu0 0.0
    %1241 = vmatpush1.msra.mxu0 %v153
    %1242 = vmatprep.subr.mxu0 0.0
    %1243 = vmatpush1.msra.mxu0 %v154
    %1244 = vmatprep.subr.mxu0 0.0
    %1245 = vmatpush1.msra.mxu0 %v155
    %1246 = vmatprep.subr.mxu0 0.0
    %1247 = vmatpush1.msra.mxu0 %v156
    %1248 = vmatprep.subr.mxu0 0.0
    %1249 = vmatpush1.msra.mxu0 %v157
    %1250 = vmatprep.subr.mxu0 0.0
    %1251 = vmatpush1.msra.mxu0 %v158
    %1252 = vmatprep.subr.mxu0 0.0
    %1253 = vmatpush1.msra.mxu0 %v159
    %1254 = vmatprep.subr.mxu0 0.0
    %1255 = vmatpush1.msra.mxu0 %v160
    %1256 = vmatprep.subr.mxu0 0.0
    %1257 = vmatpush1.msra.mxu0 %v161
    %1258 = vmatprep.subr.mxu0 0.0
    %1259 = vmatpush1.msra.mxu0 %v162
    %1260 = vmatprep.subr.mxu0 0.0
    %1261 = vmatpush1.msra.mxu0 %v163
    %1262 = vmatprep.subr.mxu0 0.0
    %1263 = vmatpush1.msra.mxu0 0.0
    %1264 = vmatprep.subr.mxu0 0.0
    %1265 = vmatpush1.msra.mxu0 0.0
    %1266 = vmatprep.subr.mxu0 0.0
    %1267 = vmatpush1.msra.mxu0 0.0
    %1268 = vmatprep.subr.mxu0 0.0
    %1269 = vmatpush1.msra.mxu0 0.0
    %1270 = vmatprep.subr.mxu0 0.0
    %1271 = vmatpush1.msra.mxu0 0.0
    %1272 = vmatprep.subr.mxu0 0.0
    %1273 = vmatpush1.msra.mxu0 0.0
    %1274 = vmatprep.subr.mxu0 0.0
    %1275 = vmatpush1.msra.mxu0 0.0
    %1276 = vmatprep.subr.mxu0 0.0
    %1277 = vmatpush1.msra.mxu0 0.0
    %1278 = vmatprep.subr.mxu0 0.0
    %1279 = vmatpush1.msra.mxu0 0.0
    %1280 = vmatprep.subr.mxu0 0.0
    %1281 = vmatpush1.msra.mxu0 0.0
    %1282 = vmatprep.subr.mxu0 0.0
    %1283 = vmatpush1.msra.mxu0 0.0
    %1284 = vmatprep.subr.mxu0 0.0
    %1285 = vmatpush1.msra.mxu0 0.0
    %1286 = vmatprep.subr.mxu0 0.0
    %1287 = vmatpush1.msra.mxu0 0.0
    %1288 = vmatprep.subr.mxu0 0.0
    %1289 = vmatpush1.msra.mxu0 0.0
    %1290 = vmatprep.subr.mxu0 0.0
    %1291 = vmatpush1.msra.mxu0 0.0
    %1292 = vmatprep.subr.mxu0 0.0
    %1293 = vmatpush1.msra.mxu0 0.0
    %1294 = vmatprep.mubr.f32.mxu0 0.0
    %1295 = vmatmul.mubr.f32.gmra.mrb[0].mxu0 %v1228
    %v1296 = vpop.f32.mrb[0].mxu0
    %v1297 = vadd.f32 %v256, %v1296
    %v1298 = vpop.f32.mrb[0].mxu0
    %1299 = vmatprep.mubr.f32.mxu0 0.0
    %1300 = vmatmul.mubr.f32.gmra.mrb[0].mxu0 %v1229
    %v1301 = vpop.f32.mrb[0].mxu0
    %v1302 = vadd.f32 %v256, %v1301
    %v1303 = vpop.f32.mrb[0].mxu0
    %1304 = vdwg.mxu0
    %v1305 = vld [vmem:[#allocation3] sm:$0xff]
    %v1306 = vld [vmem:[#allocation3 + $0x8] sm:$0xff]
    %v1308 = vlaneseq
    %v1309 = vshrl.u32 %v1308, 7
    %v1310 = vsub.s32 0, %v1309
    %v1311 = vrot.slane %v181, %v1310
    %1313 = vmatprep.subr.mxu0 0.0
    %1314 = vmatpush1.msra.mxu0 %v165
    %1315 = vmatprep.subr.mxu0 0.0
    %1316 = vmatpush1.msra.mxu0 %v166
    %1317 = vmatprep.subr.mxu0 0.0
    %1318 = vmatpush1.msra.mxu0 %v167
    %1319 = vmatprep.subr.mxu0 0.0
    %1320 = vmatpush1.msra.mxu0 %v168
    %1321 = vmatprep.subr.mxu0 0.0
    %1322 = vmatpush1.msra.mxu0 %v169
    %1323 = vmatprep.subr.mxu0 0.0
    %1324 = vmatpush1.msra.mxu0 %v170
    %1325 = vmatprep.subr.mxu0 0.0
    %1326 = vmatpush1.msra.mxu0 %v171
    %1327 = vmatprep.subr.mxu0 0.0
    %1328 = vmatpush1.msra.mxu0 %v172
    %1329 = vmatprep.subr.mxu0 0.0
    %1330 = vmatpush1.msra.mxu0 %v173
    %1331 = vmatprep.subr.mxu0 0.0
    %1332 = vmatpush1.msra.mxu0 %v174
    %1333 = vmatprep.subr.mxu0 0.0
    %1334 = vmatpush1.msra.mxu0 %v175
    %1335 = vmatprep.subr.mxu0 0.0
    %1336 = vmatpush1.msra.mxu0 %v176
    %1337 = vmatprep.subr.mxu0 0.0
    %1338 = vmatpush1.msra.mxu0 %v177
    %1339 = vmatprep.subr.mxu0 0.0
    %1340 = vmatpush1.msra.mxu0 %v178
    %1341 = vmatprep.subr.mxu0 0.0
    %1342 = vmatpush1.msra.mxu0 %v179
    %1343 = vmatprep.subr.mxu0 0.0
    %1344 = vmatpush1.msra.mxu0 %v180
    %1345 = vmatprep.subr.mxu0 0.0
    %1346 = vmatpush1.msra.mxu0 0.0
    %1347 = vmatprep.subr.mxu0 0.0
    %1348 = vmatpush1.msra.mxu0 0.0
    %1349 = vmatprep.subr.mxu0 0.0
    %1350 = vmatpush1.msra.mxu0 0.0
    %1351 = vmatprep.subr.mxu0 0.0
    %1352 = vmatpush1.msra.mxu0 0.0
    %1353 = vmatprep.subr.mxu0 0.0
    %1354 = vmatpush1.msra.mxu0 0.0
    %1355 = vmatprep.subr.mxu0 0.0
    %1356 = vmatpush1.msra.mxu0 0.0
    %1357 = vmatprep.subr.mxu0 0.0
    %1358 = vmatpush1.msra.mxu0 0.0
    %1359 = vmatprep.subr.mxu0 0.0
    %1360 = vmatpush1.msra.mxu0 0.0
    %1361 = vmatprep.subr.mxu0 0.0
    %1362 = vmatpush1.msra.mxu0 0.0
    %1363 = vmatprep.subr.mxu0 0.0
    %1364 = vmatpush1.msra.mxu0 0.0
    %1365 = vmatprep.subr.mxu0 0.0
    %1366 = vmatpush1.msra.mxu0 0.0
    %1367 = vmatprep.subr.mxu0 0.0
    %1368 = vmatpush1.msra.mxu0 0.0
    %1369 = vmatprep.subr.mxu0 0.0
    %1370 = vmatpush1.msra.mxu0 0.0
    %1371 = vmatprep.subr.mxu0 0.0
    %1372 = vmatpush1.msra.mxu0 0.0
    %1373 = vmatprep.subr.mxu0 0.0
    %1374 = vmatpush1.msra.mxu0 0.0
    %1375 = vmatprep.subr.mxu0 0.0
    %1376 = vmatpush1.msra.mxu0 0.0
    %1377 = vmatprep.mubr.f32.mxu0 0.0
    %1378 = vmatmul.mubr.f32.gmra.mrb[0].mxu0 %v1305
    %v1379 = vpop.f32.mrb[0].mxu0
    %v1380 = vadd.f32 %v1311, %v1379
    %v1381 = vpop.f32.mrb[0].mxu0
    %1382 = vmatprep.mubr.f32.mxu0 0.0
    %1383 = vmatmul.mubr.f32.gmra.mrb[0].mxu0 %v1306
    %v1384 = vpop.f32.mrb[0].mxu0
    %v1385 = vadd.f32 %v1311, %v1384
    %v1386 = vpop.f32.mrb[0].mxu0
    %1387 = vdwg.mxu0
    %v1388 = vxor.u32 %v1380, 2147483648
    %v1389 = vxor.u32 %v1385, 2147483648
    %v1390 = vmul.f32 %v1388, 1.442695
    %v1391 = vpow.pop %v1390
    %v1392 = vmul.f32 %v1389, 1.442695
    %v1393 = vpow.pop %v1392
    %v1394 = vadd.f32 %v1391, 1.0
    %v1395 = vadd.f32 %v1393, 1.0
    %v1396 = vrcp.pop %v1394
    %v1397 = vmul.f32 1.0, %v1396
    %v1398 = vrcp.pop %v1395
    %v1399 = vmul.f32 1.0, %v1398
    %v1400 = vmul.f32 %v1397, %v1305
    %v1401 = vmul.f32 %v1399, %v1306
    %v1402 = vld [vmem:[%s1] sm:$0x1]
    %1403 = vmatprep.subr.mxu0 0.0
    %1404 = vmatpush1.xpose.msra.mxu0 %v1297
    %1405 = vmatprep.subr.mxu0 0.0
    %1406 = vmatpush1.xpose.msra.mxu0 0.0
    %1407 = vmatprep.subr.mxu0 0.0
    %1408 = vmatpush1.xpose.msra.mxu0 0.0
    %1409 = vmatprep.subr.mxu0 0.0
    %1410 = vmatpush1.xpose.msra.mxu0 0.0
    %1411 = vmatprep.subr.mxu0 0.0
    %1412 = vmatpush1.xpose.msra.mxu0 0.0
    %1413 = vmatprep.subr.mxu0 0.0
    %1414 = vmatpush1.xpose.msra.mxu0 0.0
    %1415 = vmatprep.subr.mxu0 0.0
    %1416 = vmatpush1.xpose.msra.mxu0 0.0
    %1417 = vmatprep.subr.mxu0 0.0
    %1418 = vmatpush1.xpose.msra.mxu0 0.0
    %1419 = vmatprep.subr.mxu0 0.0
    %1420 = vmatpush1.xpose.msra.mxu0 0.0
    %1421 = vmatprep.subr.mxu0 0.0
    %1422 = vmatpush1.xpose.msra.mxu0 0.0
    %1423 = vmatprep.subr.mxu0 0.0
    %1424 = vmatpush1.xpose.msra.mxu0 0.0
    %1425 = vmatprep.subr.mxu0 0.0
    %1426 = vmatpush1.xpose.msra.mxu0 0.0
    %1427 = vmatprep.subr.mxu0 0.0
    %1428 = vmatpush1.xpose.msra.mxu0 0.0
    %1429 = vmatprep.subr.mxu0 0.0
    %1430 = vmatpush1.xpose.msra.mxu0 0.0
    %1431 = vmatprep.subr.mxu0 0.0
    %1432 = vmatpush1.xpose.msra.mxu0 0.0
    %1433 = vmatprep.subr.mxu0 0.0
    %1434 = vmatpush1.xpose.msra.mxu0 0.0
    %1435 = vmatprep.subr.mxu0 0.0
    %1436 = vmatpush1.xpose.msra.mxu0 0.0
    %1437 = vmatprep.subr.mxu0 0.0
    %1438 = vmatpush1.xpose.msra.mxu0 0.0
    %1439 = vmatprep.subr.mxu0 0.0
    %1440 = vmatpush1.xpose.msra.mxu0 0.0
    %1441 = vmatprep.subr.mxu0 0.0
    %1442 = vmatpush1.xpose.msra.mxu0 0.0
    %1443 = vmatprep.subr.mxu0 0.0
    %1444 = vmatpush1.xpose.msra.mxu0 0.0
    %1445 = vmatprep.subr.mxu0 0.0
    %1446 = vmatpush1.xpose.msra.mxu0 0.0
    %1447 = vmatprep.subr.mxu0 0.0
    %1448 = vmatpush1.xpose.msra.mxu0 0.0
    %1449 = vmatprep.subr.mxu0 0.0
    %1450 = vmatpush1.xpose.msra.mxu0 0.0
    %1451 = vmatprep.subr.mxu0 0.0
    %1452 = vmatpush1.xpose.msra.mxu0 0.0
    %1453 = vmatprep.subr.mxu0 0.0
    %1454 = vmatpush1.xpose.msra.mxu0 0.0
    %1455 = vmatprep.subr.mxu0 0.0
    %1456 = vmatpush1.xpose.msra.mxu0 0.0
    %1457 = vmatprep.subr.mxu0 0.0
    %1458 = vmatpush1.xpose.msra.mxu0 0.0
    %1459 = vmatprep.subr.mxu0 0.0
    %1460 = vmatpush1.xpose.msra.mxu0 0.0
    %1461 = vmatprep.subr.mxu0 0.0
    %1462 = vmatpush1.xpose.msra.mxu0 0.0
    %1463 = vmatprep.subr.mxu0 0.0
    %1464 = vmatpush1.xpose.msra.mxu0 0.0
    %1465 = vmatprep.subr.mxu0 0.0
    %1466 = vmatpush1.xpose.msra.mxu0 0.0
    %1467 = vmatprep.mubr.f32.mxu0 0.0
    %1468 = vmatmul.mubr.f32.gmra.mrb[0].mxu0 %v146
    %v1469 = vpop.f32.mrb[0].mxu0
    %v1470 = vadd.f32 0.0, %v1469
    %v1471 = vpop.f32.mrb[0].mxu0
    %1472 = vdwg.mxu0
    %v1473 = vsel %vm404, %v1470, -inf
    %1474 = vmax.xlane.f32.xlu0 %v1473
    %v1475 = vpop.xlane.xlu0 %1474
    %v1476 = vsub.f32 %v1470, %v1475
    %v1477 = vmul.f32 %v1476, 1.442695
    %v1478 = vpow.pop %v1477
    %v1479 = vsel %vm404, %v1478, 0.0
    %1480 = vadd.xlane.f32.xlu0 %v1479
    %v1481 = vpop.xlane.xlu0 %1480
    %v1482 = vrcp.pop %v1481
    %v1483 = vmul.f32 %v1478, %v1482
    %v1485 = vlaneseq
    %v1486 = vshrl.u32 %v1485, 7
    %v1487 = vsub.s32 0, %v1486
    %v1488 = vrot.slane %v1402, %v1487
    %v1490 = vmul.f32 %v1483, %v1488
    %v1491 = vsel %vm404, %v1490, 0.0
    %1492 = vadd.xlane.f32.xlu0 %v1491
    %v1493 = vpop.xlane.xlu0 %1492
    %v1494 = vadd.f32 %v1493, 1e-06
    %v1495 = vrcp.pop %v1494
    %v1496 = vmul.f32 %v1490, %v1495
    %v1498 = vsel %vm404, %v1496, 0
    %1500 = vmatprep.subr.mxu0 0.0
    %1501 = vmatpush1.msra.mxu0 %v1228
    %1502 = vmatprep.subr.mxu0 0.0
    %1503 = vmatpush1.msra.mxu0 0.0
    %1504 = vmatprep.subr.mxu0 0.0
    %1505 = vmatpush1.msra.mxu0 0.0
    %1506 = vmatprep.subr.mxu0 0.0
    %1507 = vmatpush1.msra.mxu0 0.0
    %1508 = vmatprep.subr.mxu0 0.0
    %1509 = vmatpush1.msra.mxu0 0.0
    %1510 = vmatprep.subr.mxu0 0.0
    %1511 = vmatpush1.msra.mxu0 0.0
    %1512 = vmatprep.subr.mxu0 0.0
    %1513 = vmatpush1.msra.mxu0 0.0
    %1514 = vmatprep.subr.mxu0 0.0
    %1515 = vmatpush1.msra.mxu0 0.0
    %1516 = vmatprep.subr.mxu0 0.0
    %1517 = vmatpush1.msra.mxu0 0.0
    %1518 = vmatprep.subr.mxu0 0.0
    %1519 = vmatpush1.msra.mxu0 0.0
    %1520 = vmatprep.subr.mxu0 0.0
    %1521 = vmatpush1.msra.mxu0 0.0
    %1522 = vmatprep.subr.mxu0 0.0
    %1523 = vmatpush1.msra.mxu0 0.0
    %1524 = vmatprep.subr.mxu0 0.0
    %1525 = vmatpush1.msra.mxu0 0.0
    %1526 = vmatprep.subr.mxu0 0.0
    %1527 = vmatpush1.msra.mxu0 0.0
    %1528 = vmatprep.subr.mxu0 0.0
    %1529 = vmatpush1.msra.mxu0 0.0
    %1530 = vmatprep.subr.mxu0 0.0
    %1531 = vmatpush1.msra.mxu0 0.0
    %1532 = vmatprep.subr.mxu0 0.0
    %1533 = vmatpush1.msra.mxu0 0.0
    %1534 = vmatprep.subr.mxu0 0.0
    %1535 = vmatpush1.msra.mxu0 0.0
    %1536 = vmatprep.subr.mxu0 0.0
    %1537 = vmatpush1.msra.mxu0 0.0
    %1538 = vmatprep.subr.mxu0 0.0
    %1539 = vmatpush1.msra.mxu0 0.0
    %1540 = vmatprep.subr.mxu0 0.0
    %1541 = vmatpush1.msra.mxu0 0.0
    %1542 = vmatprep.subr.mxu0 0.0
    %1543 = vmatpush1.msra.mxu0 0.0
    %1544 = vmatprep.subr.mxu0 0.0
    %1545 = vmatpush1.msra.mxu0 0.0
    %1546 = vmatprep.subr.mxu0 0.0
    %1547 = vmatpush1.msra.mxu0 0.0
    %1548 = vmatprep.subr.mxu0 0.0
    %1549 = vmatpush1.msra.mxu0 0.0
    %1550 = vmatprep.subr.mxu0 0.0
    %1551 = vmatpush1.msra.mxu0 0.0
    %1552 = vmatprep.subr.mxu0 0.0
    %1553 = vmatpush1.msra.mxu0 0.0
    %1554 = vmatprep.subr.mxu0 0.0
    %1555 = vmatpush1.msra.mxu0 0.0
    %1556 = vmatprep.subr.mxu0 0.0
    %1557 = vmatpush1.msra.mxu0 0.0
    %1558 = vmatprep.subr.mxu0 0.0
    %1559 = vmatpush1.msra.mxu0 0.0
    %1560 = vmatprep.subr.mxu0 0.0
    %1561 = vmatpush1.msra.mxu0 0.0
    %1562 = vmatprep.subr.mxu0 0.0
    %1563 = vmatpush1.msra.mxu0 0.0
    %1564 = vmatprep.mubr.f32.mxu0 0.0
    %1565 = vmatmul.mubr.f32.gmra.mrb[0].mxu0 %v1498
    %v1566 = vpop.f32.mrb[0].mxu0
    %v1567 = vadd.f32 0.0, %v1566
    %v1568 = vpop.f32.mrb[0].mxu0
    %1569 = vdwg.mxu0
    %v1570 = vadd.f32 %v146, %v1567
    %v1571 = vadd.f32 %v1570, %v1400
    %v1572 = vadd.f32 %v1567, %v1400
    %1573 = vst [vmem:[#allocation2] sm:$0xff] %v1571
    %1574 = vst [vmem:[#allocation3] sm:$0xff] %v1572
    %v1575 = vsel %vm404, %v1496, 0.0
    %v1576 = vrot.slane %v1575, 4
    %v1577 = vadd.f32 %v1575, %v1576
    %v1578 = vrot.slane %v1577, 2
    %v1579 = vadd.f32 %v1577, %v1578
    %v1580 = vrot.slane %v1579, 1
    %v1581 = vadd.f32 %v1579, %v1580
    %v1582 = vsel %vm404, %v1581, -inf
    %1583 = vmax.xlane.f32.xlu0 %v1582
    %v1584 = vpop.xlane.xlu0 %1583
    %v1585 = vsub.f32 %v1581, %v1584
    %v1586 = vmul.f32 %v1585, 1.442695
    %v1587 = vpow.pop %v1586
    %v1588 = vsel %vm404, %v1587, 0.0
    %1589 = vadd.xlane.f32.xlu0 %v1588
    %v1590 = vpop.xlane.xlu0 %1589
    %v1591 = vrcp.pop %v1590
    %v1592 = vmul.f32 %v1587, %v1591
    %v1593 = vmul.f32 %v1592, %v1402
    %v1594 = vsel %vm524, %v1593, 0.0
    %1595 = vadd.xlane.f32.xlu0 %v1594
    %v1596 = vpop.xlane.xlu0 %1595
    %v1597 = vadd.f32 %v1596, 1e-06
    %v1598 = vrcp.pop %v1597
    %v1599 = vmul.f32 %v1593, %v1598
    %v1601 = vsel %vm404, %v1599, 0
    %1603 = vmatprep.subr.mxu0 0.0
    %1604 = vmatpush1.msra.mxu0 %v1571
    %1605 = vmatprep.subr.mxu0 0.0
    %1606 = vmatpush1.msra.mxu0 0.0
    %1607 = vmatprep.subr.mxu0 0.0
    %1608 = vmatpush1.msra.mxu0 0.0
    %1609 = vmatprep.subr.mxu0 0.0
    %1610 = vmatpush1.msra.mxu0 0.0
    %1611 = vmatprep.subr.mxu0 0.0
    %1612 = vmatpush1.msra.mxu0 0.0
    %1613 = vmatprep.subr.mxu0 0.0
    %1614 = vmatpush1.msra.mxu0 0.0
    %1615 = vmatprep.subr.mxu0 0.0
    %1616 = vmatpush1.msra.mxu0 0.0
    %1617 = vmatprep.subr.mxu0 0.0
    %1618 = vmatpush1.msra.mxu0 0.0
    %1619 = vmatprep.subr.mxu0 0.0
    %1620 = vmatpush1.msra.mxu0 0.0
    %1621 = vmatprep.subr.mxu0 0.0
    %1622 = vmatpush1.msra.mxu0 0.0
    %1623 = vmatprep.subr.mxu0 0.0
    %1624 = vmatpush1.msra.mxu0 0.0
    %1625 = vmatprep.subr.mxu0 0.0
    %1626 = vmatpush1.msra.mxu0 0.0
    %1627 = vmatprep.subr.mxu0 0.0
    %1628 = vmatpush1.msra.mxu0 0.0
    %1629 = vmatprep.subr.mxu0 0.0
    %1630 = vmatpush1.msra.mxu0 0.0
    %1631 = vmatprep.subr.mxu0 0.0
    %1632 = vmatpush1.msra.mxu0 0.0
    %1633 = vmatprep.subr.mxu0 0.0
    %1634 = vmatpush1.msra.mxu0 0.0
    %1635 = vmatprep.subr.mxu0 0.0
    %1636 = vmatpush1.msra.mxu0 0.0
    %1637 = vmatprep.subr.mxu0 0.0
    %1638 = vmatpush1.msra.mxu0 0.0
    %1639 = vmatprep.subr.mxu0 0.0
    %1640 = vmatpush1.msra.mxu0 0.0
    %1641 = vmatprep.subr.mxu0 0.0
    %1642 = vmatpush1.msra.mxu0 0.0
    %1643 = vmatprep.subr.mxu0 0.0
    %1644 = vmatpush1.msra.mxu0 0.0
    %1645 = vmatprep.subr.mxu0 0.0
    %1646 = vmatpush1.msra.mxu0 0.0
    %1647 = vmatprep.subr.mxu0 0.0
    %1648 = vmatpush1.msra.mxu0 0.0
    %1649 = vmatprep.subr.mxu0 0.0
    %1650 = vmatpush1.msra.mxu0 0.0
    %1651 = vmatprep.subr.mxu0 0.0
    %1652 = vmatpush1.msra.mxu0 0.0
    %1653 = vmatprep.subr.mxu0 0.0
    %1654 = vmatpush1.msra.mxu0 0.0
    %1655 = vmatprep.subr.mxu0 0.0
    %1656 = vmatpush1.msra.mxu0 0.0
    %1657 = vmatprep.subr.mxu0 0.0
    %1658 = vmatpush1.msra.mxu0 0.0
    %1659 = vmatprep.subr.mxu0 0.0
    %1660 = vmatpush1.msra.mxu0 0.0
    %1661 = vmatprep.subr.mxu0 0.0
    %1662 = vmatpush1.msra.mxu0 0.0
    %1663 = vmatprep.subr.mxu0 0.0
    %1664 = vmatpush1.msra.mxu0 0.0
    %1665 = vmatprep.subr.mxu0 0.0
    %1666 = vmatpush1.msra.mxu0 0.0
    %1667 = vmatprep.mubr.f32.mxu0 0.0
    %1668 = vmatmul.mubr.f32.gmra.mrb[0].mxu0 %v1601
    %v1669 = vpop.f32.mrb[0].mxu0
    %v1670 = vadd.f32 0.0, %v1669
    %v1671 = vpop.f32.mrb[0].mxu0
    %1672 = vdwg.mxu0
    %1673 = vst [vmem:[#allocation4] sm:$0x1] %v1670
    %v1674 = vld [vmem:[%s605] sm:$0x1]
    %1675 = vmatprep.subr.mxu0 0.0
    %1676 = vmatpush1.xpose.msra.mxu0 %v1302
    %1677 = vmatprep.subr.mxu0 0.0
    %1678 = vmatpush1.xpose.msra.mxu0 0.0
    %1679 = vmatprep.subr.mxu0 0.0
    %1680 = vmatpush1.xpose.msra.mxu0 0.0
    %1681 = vmatprep.subr.mxu0 0.0
    %1682 = vmatpush1.xpose.msra.mxu0 0.0
    %1683 = vmatprep.subr.mxu0 0.0
    %1684 = vmatpush1.xpose.msra.mxu0 0.0
    %1685 = vmatprep.subr.mxu0 0.0
    %1686 = vmatpush1.xpose.msra.mxu0 0.0
    %1687 = vmatprep.subr.mxu0 0.0
    %1688 = vmatpush1.xpose.msra.mxu0 0.0
    %1689 = vmatprep.subr.mxu0 0.0
    %1690 = vmatpush1.xpose.msra.mxu0 0.0
    %1691 = vmatprep.subr.mxu0 0.0
    %1692 = vmatpush1.xpose.msra.mxu0 0.0
    %1693 = vmatprep.subr.mxu0 0.0
    %1694 = vmatpush1.xpose.msra.mxu0 0.0
    %1695 = vmatprep.subr.mxu0 0.0
    %1696 = vmatpush1.xpose.msra.mxu0 0.0
    %1697 = vmatprep.subr.mxu0 0.0
    %1698 = vmatpush1.xpose.msra.mxu0 0.0
    %1699 = vmatprep.subr.mxu0 0.0
    %1700 = vmatpush1.xpose.msra.mxu0 0.0
    %1701 = vmatprep.subr.mxu0 0.0
    %1702 = vmatpush1.xpose.msra.mxu0 0.0
    %1703 = vmatprep.subr.mxu0 0.0
    %1704 = vmatpush1.xpose.msra.mxu0 0.0
    %1705 = vmatprep.subr.mxu0 0.0
    %1706 = vmatpush1.xpose.msra.mxu0 0.0
    %1707 = vmatprep.subr.mxu0 0.0
    %1708 = vmatpush1.xpose.msra.mxu0 0.0
    %1709 = vmatprep.subr.mxu0 0.0
    %1710 = vmatpush1.xpose.msra.mxu0 0.0
    %1711 = vmatprep.subr.mxu0 0.0
    %1712 = vmatpush1.xpose.msra.mxu0 0.0
    %1713 = vmatprep.subr.mxu0 0.0
    %1714 = vmatpush1.xpose.msra.mxu0 0.0
    %1715 = vmatprep.subr.mxu0 0.0
    %1716 = vmatpush1.xpose.msra.mxu0 0.0
    %1717 = vmatprep.subr.mxu0 0.0
    %1718 = vmatpush1.xpose.msra.mxu0 0.0
    %1719 = vmatprep.subr.mxu0 0.0
    %1720 = vmatpush1.xpose.msra.mxu0 0.0
    %1721 = vmatprep.subr.mxu0 0.0
    %1722 = vmatpush1.xpose.msra.mxu0 0.0
    %1723 = vmatprep.subr.mxu0 0.0
    %1724 = vmatpush1.xpose.msra.mxu0 0.0
    %1725 = vmatprep.subr.mxu0 0.0
    %1726 = vmatpush1.xpose.msra.mxu0 0.0
    %1727 = vmatprep.subr.mxu0 0.0
    %1728 = vmatpush1.xpose.msra.mxu0 0.0
    %1729 = vmatprep.subr.mxu0 0.0
    %1730 = vmatpush1.xpose.msra.mxu0 0.0
    %1731 = vmatprep.subr.mxu0 0.0
    %1732 = vmatpush1.xpose.msra.mxu0 0.0
    %1733 = vmatprep.subr.mxu0 0.0
    %1734 = vmatpush1.xpose.msra.mxu0 0.0
    %1735 = vmatprep.subr.mxu0 0.0
    %1736 = vmatpush1.xpose.msra.mxu0 0.0
    %1737 = vmatprep.subr.mxu0 0.0
    %1738 = vmatpush1.xpose.msra.mxu0 0.0
    %1739 = vmatprep.mubr.f32.mxu0 0.0
    %1740 = vmatmul.mubr.f32.gmra.mrb[0].mxu0 %v147
    %v1741 = vpop.f32.mrb[0].mxu0
    %v1742 = vadd.f32 0.0, %v1741
    %v1743 = vpop.f32.mrb[0].mxu0
    %1744 = vdwg.mxu0
    %v1745 = vsel %vm404, %v1742, -inf
    %1746 = vmax.xlane.f32.xlu0 %v1745
    %v1747 = vpop.xlane.xlu0 %1746
    %v1748 = vsub.f32 %v1742, %v1747
    %v1749 = vmul.f32 %v1748, 1.442695
    %v1750 = vpow.pop %v1749
    %v1751 = vsel %vm404, %v1750, 0.0
    %1752 = vadd.xlane.f32.xlu0 %v1751
    %v1753 = vpop.xlane.xlu0 %1752
    %v1754 = vrcp.pop %v1753
    %v1755 = vmul.f32 %v1750, %v1754
    %v1757 = vlaneseq
    %v1758 = vshrl.u32 %v1757, 7
    %v1759 = vsub.s32 0, %v1758
    %v1760 = vrot.slane %v1674, %v1759
    %v1762 = vmul.f32 %v1755, %v1760
    %v1763 = vsel %vm404, %v1762, 0.0
    %1764 = vadd.xlane.f32.xlu0 %v1763
    %v1765 = vpop.xlane.xlu0 %1764
    %v1766 = vadd.f32 %v1765, 1e-06
    %v1767 = vrcp.pop %v1766
    %v1768 = vmul.f32 %v1762, %v1767
    %v1770 = vsel %vm404, %v1768, 0
    %1772 = vmatprep.subr.mxu0 0.0
    %1773 = vmatpush1.msra.mxu0 %v1229
    %1774 = vmatprep.subr.mxu0 0.0
    %1775 = vmatpush1.msra.mxu0 0.0
    %1776 = vmatprep.subr.mxu0 0.0
    %1777 = vmatpush1.msra.mxu0 0.0
    %1778 = vmatprep.subr.mxu0 0.0
    %1779 = vmatpush1.msra.mxu0 0.0
    %1780 = vmatprep.subr.mxu0 0.0
    %1781 = vmatpush1.msra.mxu0 0.0
    %1782 = vmatprep.subr.mxu0 0.0
    %1783 = vmatpush1.msra.mxu0 0.0
    %1784 = vmatprep.subr.mxu0 0.0
    %1785 = vmatpush1.msra.mxu0 0.0
    %1786 = vmatprep.subr.mxu0 0.0
    %1787 = vmatpush1.msra.mxu0 0.0
    %1788 = vmatprep.subr.mxu0 0.0
    %1789 = vmatpush1.msra.mxu0 0.0
    %1790 = vmatprep.subr.mxu0 0.0
    %1791 = vmatpush1.msra.mxu0 0.0
    %1792 = vmatprep.subr.mxu0 0.0
    %1793 = vmatpush1.msra.mxu0 0.0
    %1794 = vmatprep.subr.mxu0 0.0
    %1795 = vmatpush1.msra.mxu0 0.0
    %1796 = vmatprep.subr.mxu0 0.0
    %1797 = vmatpush1.msra.mxu0 0.0
    %1798 = vmatprep.subr.mxu0 0.0
    %1799 = vmatpush1.msra.mxu0 0.0
    %1800 = vmatprep.subr.mxu0 0.0
    %1801 = vmatpush1.msra.mxu0 0.0
    %1802 = vmatprep.subr.mxu0 0.0
    %1803 = vmatpush1.msra.mxu0 0.0
    %1804 = vmatprep.subr.mxu0 0.0
    %1805 = vmatpush1.msra.mxu0 0.0
    %1806 = vmatprep.subr.mxu0 0.0
    %1807 = vmatpush1.msra.mxu0 0.0
    %1808 = vmatprep.subr.mxu0 0.0
    %1809 = vmatpush1.msra.mxu0 0.0
    %1810 = vmatprep.subr.mxu0 0.0
    %1811 = vmatpush1.msra.mxu0 0.0
    %1812 = vmatprep.subr.mxu0 0.0
    %1813 = vmatpush1.msra.mxu0 0.0
    %1814 = vmatprep.subr.mxu0 0.0
    %1815 = vmatpush1.msra.mxu0 0.0
    %1816 = vmatprep.subr.mxu0 0.0
    %1817 = vmatpush1.msra.mxu0 0.0
    %1818 = vmatprep.subr.mxu0 0.0
    %1819 = vmatpush1.msra.mxu0 0.0
    %1820 = vmatprep.subr.mxu0 0.0
    %1821 = vmatpush1.msra.mxu0 0.0
    %1822 = vmatprep.subr.mxu0 0.0
    %1823 = vmatpush1.msra.mxu0 0.0
    %1824 = vmatprep.subr.mxu0 0.0
    %1825 = vmatpush1.msra.mxu0 0.0
    %1826 = vmatprep.subr.mxu0 0.0
    %1827 = vmatpush1.msra.mxu0 0.0
    %1828 = vmatprep.subr.mxu0 0.0
    %1829 = vmatpush1.msra.mxu0 0.0
    %1830 = vmatprep.subr.mxu0 0.0
    %1831 = vmatpush1.msra.mxu0 0.0
    %1832 = vmatprep.subr.mxu0 0.0
    %1833 = vmatpush1.msra.mxu0 0.0
    %1834 = vmatprep.subr.mxu0 0.0
    %1835 = vmatpush1.msra.mxu0 0.0
    %1836 = vmatprep.mubr.f32.mxu0 0.0
    %1837 = vmatmul.mubr.f32.gmra.mrb[0].mxu0 %v1770
    %v1838 = vpop.f32.mrb[0].mxu0
    %v1839 = vadd.f32 0.0, %v1838
    %v1840 = vpop.f32.mrb[0].mxu0
    %1841 = vdwg.mxu0
    %v1842 = vadd.f32 %v147, %v1839
    %v1843 = vadd.f32 %v1842, %v1401
    %v1844 = vadd.f32 %v1839, %v1401
    %1845 = vst [vmem:[#allocation2 + $0x8] sm:$0xff] %v1843
    %1846 = vst [vmem:[#allocation3 + $0x8] sm:$0xff] %v1844
    %v1847 = vsel %vm404, %v1768, 0.0
    %v1848 = vrot.slane %v1847, 4
    %v1849 = vadd.f32 %v1847, %v1848
    %v1850 = vrot.slane %v1849, 2
    %v1851 = vadd.f32 %v1849, %v1850
    %v1852 = vrot.slane %v1851, 1
    %v1853 = vadd.f32 %v1851, %v1852
    %v1854 = vsel %vm404, %v1853, -inf
    %1855 = vmax.xlane.f32.xlu0 %v1854
    %v1856 = vpop.xlane.xlu0 %1855
    %v1857 = vsub.f32 %v1853, %v1856
    %v1858 = vmul.f32 %v1857, 1.442695
    %v1859 = vpow.pop %v1858
    %v1860 = vsel %vm404, %v1859, 0.0
    %1861 = vadd.xlane.f32.xlu0 %v1860
    %v1862 = vpop.xlane.xlu0 %1861
    %v1863 = vrcp.pop %v1862
    %v1864 = vmul.f32 %v1859, %v1863
    %v1865 = vmul.f32 %v1864, %v1674
    %v1866 = vsel %vm524, %v1865, 0.0
    %1867 = vadd.xlane.f32.xlu0 %v1866
    %v1868 = vpop.xlane.xlu0 %1867
    %v1869 = vadd.f32 %v1868, 1e-06
    %v1870 = vrcp.pop %v1869
    %v1871 = vmul.f32 %v1865, %v1870
    %v1873 = vsel %vm404, %v1871, 0
    %1875 = vmatprep.subr.mxu0 0.0
    %1876 = vmatpush1.msra.mxu0 %v1843
    %1877 = vmatprep.subr.mxu0 0.0
    %1878 = vmatpush1.msra.mxu0 0.0
    %1879 = vmatprep.subr.mxu0 0.0
    %1880 = vmatpush1.msra.mxu0 0.0
    %1881 = vmatprep.subr.mxu0 0.0
    %1882 = vmatpush1.msra.mxu0 0.0
    %1883 = vmatprep.subr.mxu0 0.0
    %1884 = vmatpush1.msra.mxu0 0.0
    %1885 = vmatprep.subr.mxu0 0.0
    %1886 = vmatpush1.msra.mxu0 0.0
    %1887 = vmatprep.subr.mxu0 0.0
    %1888 = vmatpush1.msra.mxu0 0.0
    %1889 = vmatprep.subr.mxu0 0.0
    %1890 = vmatpush1.msra.mxu0 0.0
    %1891 = vmatprep.subr.mxu0 0.0
    %1892 = vmatpush1.msra.mxu0 0.0
    %1893 = vmatprep.subr.mxu0 0.0
    %1894 = vmatpush1.msra.mxu0 0.0
    %1895 = vmatprep.subr.mxu0 0.0
    %1896 = vmatpush1.msra.mxu0 0.0
    %1897 = vmatprep.subr.mxu0 0.0
    %1898 = vmatpush1.msra.mxu0 0.0
    %1899 = vmatprep.subr.mxu0 0.0
    %1900 = vmatpush1.msra.mxu0 0.0
    %1901 = vmatprep.subr.mxu0 0.0
    %1902 = vmatpush1.msra.mxu0 0.0
    %1903 = vmatprep.subr.mxu0 0.0
    %1904 = vmatpush1.msra.mxu0 0.0
    %1905 = vmatprep.subr.mxu0 0.0
    %1906 = vmatpush1.msra.mxu0 0.0
    %1907 = vmatprep.subr.mxu0 0.0
    %1908 = vmatpush1.msra.mxu0 0.0
    %1909 = vmatprep.subr.mxu0 0.0
    %1910 = vmatpush1.msra.mxu0 0.0
    %1911 = vmatprep.subr.mxu0 0.0
    %1912 = vmatpush1.msra.mxu0 0.0
    %1913 = vmatprep.subr.mxu0 0.0
    %1914 = vmatpush1.msra.mxu0 0.0
    %1915 = vmatprep.subr.mxu0 0.0
    %1916 = vmatpush1.msra.mxu0 0.0
    %1917 = vmatprep.subr.mxu0 0.0
    %1918 = vmatpush1.msra.mxu0 0.0
    %1919 = vmatprep.subr.mxu0 0.0
    %1920 = vmatpush1.msra.mxu0 0.0
    %1921 = vmatprep.subr.mxu0 0.0
    %1922 = vmatpush1.msra.mxu0 0.0
    %1923 = vmatprep.subr.mxu0 0.0
    %1924 = vmatpush1.msra.mxu0 0.0
    %1925 = vmatprep.subr.mxu0 0.0
    %1926 = vmatpush1.msra.mxu0 0.0
    %1927 = vmatprep.subr.mxu0 0.0
    %1928 = vmatpush1.msra.mxu0 0.0
    %1929 = vmatprep.subr.mxu0 0.0
    %1930 = vmatpush1.msra.mxu0 0.0
    %1931 = vmatprep.subr.mxu0 0.0
    %1932 = vmatpush1.msra.mxu0 0.0
    %1933 = vmatprep.subr.mxu0 0.0
    %1934 = vmatpush1.msra.mxu0 0.0
    %1935 = vmatprep.subr.mxu0 0.0
    %1936 = vmatpush1.msra.mxu0 0.0
    %1937 = vmatprep.subr.mxu0 0.0
    %1938 = vmatpush1.msra.mxu0 0.0
    %1939 = vmatprep.mubr.f32.mxu0 0.0
    %1940 = vmatmul.mubr.f32.gmra.mrb[0].mxu0 %v1873
    %v1941 = vpop.f32.mrb[0].mxu0
    %v1942 = vadd.f32 0.0, %v1941
    %v1943 = vpop.f32.mrb[0].mxu0
    %1944 = vdwg.mxu0
    %1945 = vst [vmem:[#allocation4 + $0x1] sm:$0x1] %v1942
    %v1946 = vld [vmem:[#allocation4] sm:$0x3]
    %1947 = vmatprep.subr.mxu0 0.0
    %1948 = vmatpush1.msra.mxu0 %v182
    %1949 = vmatprep.subr.mxu0 0.0
    %1950 = vmatpush1.msra.mxu0 %v183
    %1951 = vmatprep.subr.mxu0 0.0
    %1952 = vmatpush1.msra.mxu0 %v184
    %1953 = vmatprep.subr.mxu0 0.0
    %1954 = vmatpush1.msra.mxu0 %v185
    %1955 = vmatprep.subr.mxu0 0.0
    %1956 = vmatpush1.msra.mxu0 %v186
    %1957 = vmatprep.subr.mxu0 0.0
    %1958 = vmatpush1.msra.mxu0 %v187
    %1959 = vmatprep.subr.mxu0 0.0
    %1960 = vmatpush1.msra.mxu0 %v188
    %1961 = vmatprep.subr.mxu0 0.0
    %1962 = vmatpush1.msra.mxu0 %v189
    %1963 = vmatprep.subr.mxu0 0.0
    %1964 = vmatpush1.msra.mxu0 %v190
    %1965 = vmatprep.subr.mxu0 0.0
    %1966 = vmatpush1.msra.mxu0 %v191
    %1967 = vmatprep.subr.mxu0 0.0
    %1968 = vmatpush1.msra.mxu0 %v192
    %1969 = vmatprep.subr.mxu0 0.0
    %1970 = vmatpush1.msra.mxu0 %v193
    %1971 = vmatprep.subr.mxu0 0.0
    %1972 = vmatpush1.msra.mxu0 %v194
    %1973 = vmatprep.subr.mxu0 0.0
    %1974 = vmatpush1.msra.mxu0 %v195
    %1975 = vmatprep.subr.mxu0 0.0
    %1976 = vmatpush1.msra.mxu0 %v196
    %1977 = vmatprep.subr.mxu0 0.0
    %1978 = vmatpush1.msra.mxu0 %v197
    %1979 = vmatprep.subr.mxu0 0.0
    %1980 = vmatpush1.msra.mxu0 0.0
    %1981 = vmatprep.subr.mxu0 0.0
    %1982 = vmatpush1.msra.mxu0 0.0
    %1983 = vmatprep.subr.mxu0 0.0
    %1984 = vmatpush1.msra.mxu0 0.0
    %1985 = vmatprep.subr.mxu0 0.0
    %1986 = vmatpush1.msra.mxu0 0.0
    %1987 = vmatprep.subr.mxu0 0.0
    %1988 = vmatpush1.msra.mxu0 0.0
    %1989 = vmatprep.subr.mxu0 0.0
    %1990 = vmatpush1.msra.mxu0 0.0
    %1991 = vmatprep.subr.mxu0 0.0
    %1992 = vmatpush1.msra.mxu0 0.0
    %1993 = vmatprep.subr.mxu0 0.0
    %1994 = vmatpush1.msra.mxu0 0.0
    %1995 = vmatprep.subr.mxu0 0.0
    %1996 = vmatpush1.msra.mxu0 0.0
    %1997 = vmatprep.subr.mxu0 0.0
    %1998 = vmatpush1.msra.mxu0 0.0
    %1999 = vmatprep.subr.mxu0 0.0
    %2000 = vmatpush1.msra.mxu0 0.0
    %2001 = vmatprep.subr.mxu0 0.0
    %2002 = vmatpush1.msra.mxu0 0.0
    %2003 = vmatprep.subr.mxu0 0.0
    %2004 = vmatpush1.msra.mxu0 0.0
    %2005 = vmatprep.subr.mxu0 0.0
    %2006 = vmatpush1.msra.mxu0 0.0
    %2007 = vmatprep.subr.mxu0 0.0
    %2008 = vmatpush1.msra.mxu0 0.0
    %2009 = vmatprep.subr.mxu0 0.0
    %2010 = vmatpush1.msra.mxu0 0.0
    %2011 = vmatprep.mubr.f32.mxu0 0.0
    %2012 = vmatmul.mubr.f32.gmra.mrb[0].mxu0 %v1946
    %v2013 = vpop.f32.mrb[0].mxu0
    %v2014 = vadd.f32 %v881, %v2013
    %v2015 = vpop.f32.mrb[0].mxu0
    %2016 = vdwg.mxu0
    %v2017 = vxor.u32 %v2014, 2147483648
    %v2018 = vmul.f32 %v2017, 1.442695
    %v2019 = vpow.pop %v2018
    %v2020 = vadd.f32 %v2019, 1.0
    %v2021 = vrcp.pop %v2020
    %v2022 = vmul.f32 1.0, %v2021
    %v2023 = vpack.c.bf16 %v1227, %v1227
    %2024 = vmatprep.subr.bf16.mxu0 0
    %2025 = vmatpush1.bf16.xpose.msra.mxu0 %v992
    %2026 = vmatprep.subr.bf16.mxu0 0
    %2027 = vmatpush1.bf16.xpose.msra.mxu0 %v993
    %2028 = vmatprep.subr.bf16.mxu0 0
    %2029 = vmatpush1.bf16.xpose.msra.mxu0 %v994
    %2030 = vmatprep.subr.bf16.mxu0 0
    %2031 = vmatpush1.bf16.xpose.msra.mxu0 %v995
    %2032 = vmatprep.subr.bf16.mxu0 0
    %2033 = vmatpush1.bf16.xpose.msra.mxu0 %v996
    %2034 = vmatprep.subr.bf16.mxu0 0
    %2035 = vmatpush1.bf16.xpose.msra.mxu0 %v997
    %2036 = vmatprep.subr.bf16.mxu0 0
    %2037 = vmatpush1.bf16.xpose.msra.mxu0 %v998
    %2038 = vmatprep.subr.bf16.mxu0 0
    %2039 = vmatpush1.bf16.xpose.msra.mxu0 %v999
    %2040 = vmatprep.subr.bf16.mxu0 0
    %2041 = vmatpush1.bf16.xpose.msra.mxu0 0
    %2042 = vmatprep.subr.bf16.mxu0 0
    %2043 = vmatpush1.bf16.xpose.msra.mxu0 0
    %2044 = vmatprep.subr.bf16.mxu0 0
    %2045 = vmatpush1.bf16.xpose.msra.mxu0 0
    %2046 = vmatprep.subr.bf16.mxu0 0
    %2047 = vmatpush1.bf16.xpose.msra.mxu0 0
    %2048 = vmatprep.subr.bf16.mxu0 0
    %2049 = vmatpush1.bf16.xpose.msra.mxu0 0
    %2050 = vmatprep.subr.bf16.mxu0 0
    %2051 = vmatpush1.bf16.xpose.msra.mxu0 0
    %2052 = vmatprep.subr.bf16.mxu0 0
    %2053 = vmatpush1.bf16.xpose.msra.mxu0 0
    %2054 = vmatprep.subr.bf16.mxu0 0
    %2055 = vmatpush1.bf16.xpose.msra.mxu0 0
    %2056 = vmatprep.mubr.bf16.mxu0 0
    %2057 = vmatmul.mubr.bf16.gmra.mrb[0].mxu0 %v2023
    %v2058 = vpop.f32.mrb[0].mxu0
    %v2059 = vadd.f32 0.0, %v2058
    %v2060 = vpop.f32.mrb[0].mxu0
    %v2061 = vpop.f32.mrb[0].mxu0
    %v2062 = vpop.f32.mrb[0].mxu0
    %2063 = vdwg.mxu0
    %v2064 = vpack.c.bf16 %v2022, %v2022
    %2065 = vmatprep.subr.bf16.mxu0 0
    %2066 = vmatpush1.bf16.xpose.msra.mxu0 %v1081
    %2067 = vmatprep.subr.bf16.mxu0 0
    %2068 = vmatpush1.bf16.xpose.msra.mxu0 %v1082
    %2069 = vmatprep.subr.bf16.mxu0 0
    %2070 = vmatpush1.bf16.xpose.msra.mxu0 %v1083
    %2071 = vmatprep.subr.bf16.mxu0 0
    %2072 = vmatpush1.bf16.xpose.msra.mxu0 %v1084
    %2073 = vmatprep.subr.bf16.mxu0 0
    %2074 = vmatpush1.bf16.xpose.msra.mxu0 %v1085
    %2075 = vmatprep.subr.bf16.mxu0 0
    %2076 = vmatpush1.bf16.xpose.msra.mxu0 %v1086
    %2077 = vmatprep.subr.bf16.mxu0 0
    %2078 = vmatpush1.bf16.xpose.msra.mxu0 %v1087
    %2079 = vmatprep.subr.bf16.mxu0 0
    %2080 = vmatpush1.bf16.xpose.msra.mxu0 %v1088
    %2081 = vmatprep.subr.bf16.mxu0 0
    %2082 = vmatpush1.bf16.xpose.msra.mxu0 0
    %2083 = vmatprep.subr.bf16.mxu0 0
    %2084 = vmatpush1.bf16.xpose.msra.mxu0 0
    %2085 = vmatprep.subr.bf16.mxu0 0
    %2086 = vmatpush1.bf16.xpose.msra.mxu0 0
    %2087 = vmatprep.subr.bf16.mxu0 0
    %2088 = vmatpush1.bf16.xpose.msra.mxu0 0
    %2089 = vmatprep.subr.bf16.mxu0 0
    %2090 = vmatpush1.bf16.xpose.msra.mxu0 0
    %2091 = vmatprep.subr.bf16.mxu0 0
    %2092 = vmatpush1.bf16.xpose.msra.mxu0 0
    %2093 = vmatprep.subr.bf16.mxu0 0
    %2094 = vmatpush1.bf16.xpose.msra.mxu0 0
    %2095 = vmatprep.subr.bf16.mxu0 0
    %2096 = vmatpush1.bf16.xpose.msra.mxu0 0
    %2097 = vmatprep.mubr.bf16.mxu0 0
    %2098 = vmatmul.mubr.bf16.gmra.mrb[0].mxu0 %v2064
    %v2099 = vpop.f32.mrb[0].mxu0
    %v2100 = vadd.f32 0.0, %v2099
    %v2101 = vpop.f32.mrb[0].mxu0
    %v2102 = vpop.f32.mrb[0].mxu0
    %v2103 = vpop.f32.mrb[0].mxu0
    %2104 = vdwg.mxu0
    %v2105 = vmul.f32 %v2059, %v2100
    %v2106 = vpack.c.bf16 %v2105, %v2105
    %2107 = vmatprep.subr.bf16.mxu0 0
    %2108 = vmatpush1.bf16.msra.mxu0 %v1171
    %2109 = vmatprep.subr.bf16.mxu0 0
    %2110 = vmatpush1.bf16.msra.mxu0 %v1172
    %2111 = vmatprep.subr.bf16.mxu0 0
    %2112 = vmatpush1.bf16.msra.mxu0 %v1173
    %2113 = vmatprep.subr.bf16.mxu0 0
    %2114 = vmatpush1.bf16.msra.mxu0 %v1174
    %2115 = vmatprep.subr.bf16.mxu0 0
    %2116 = vmatpush1.bf16.msra.mxu0 %v1175
    %2117 = vmatprep.subr.bf16.mxu0 0
    %2118 = vmatpush1.bf16.msra.mxu0 %v1176
    %2119 = vmatprep.subr.bf16.mxu0 0
    %2120 = vmatpush1.bf16.msra.mxu0 %v1177
    %2121 = vmatprep.subr.bf16.mxu0 0
    %2122 = vmatpush1.bf16.msra.mxu0 %v1178
    %2123 = vmatprep.subr.bf16.mxu0 0
    %2124 = vmatpush1.bf16.msra.mxu0 0
    %2125 = vmatprep.subr.bf16.mxu0 0
    %2126 = vmatpush1.bf16.msra.mxu0 0
    %2127 = vmatprep.subr.bf16.mxu0 0
    %2128 = vmatpush1.bf16.msra.mxu0 0
    %2129 = vmatprep.subr.bf16.mxu0 0
    %2130 = vmatpush1.bf16.msra.mxu0 0
    %2131 = vmatprep.subr.bf16.mxu0 0
    %2132 = vmatpush1.bf16.msra.mxu0 0
    %2133 = vmatprep.subr.bf16.mxu0 0
    %2134 = vmatpush1.bf16.msra.mxu0 0
    %2135 = vmatprep.subr.bf16.mxu0 0
    %2136 = vmatpush1.bf16.msra.mxu0 0
    %2137 = vmatprep.subr.bf16.mxu0 0
    %2138 = vmatpush1.bf16.msra.mxu0 0
    %2139 = vmatprep.mubr.bf16.mxu0 0
    %2140 = vmatmul.mubr.bf16.gmra.mrb[0].mxu0 %v2106
    %v2141 = vpop.f32.mrb[0].mxu0
    %v2142 = vadd.f32 0.0, %v2141
    %v2143 = vpop.f32.mrb[0].mxu0
    %v2144 = vpop.f32.mrb[0].mxu0
    %v2145 = vpop.f32.mrb[0].mxu0
    %2146 = vdwg.mxu0
    %v2147 = vmin.f32 %v2142, 1.0
    %v2148 = vld [vmem:[%s12] sm:$0x1]
    %v2149 = vld [vmem:[#allocation5] sm:$0x1]
    %v2151 = vlaneseq
    %v2152 = vshrl.u32 %v2151, 7
    %v2153 = vsub.s32 0, %v2152
    %v2154 = vrot.slane %v2148, %v2153
    %v2156 = vmul.f32 %v876, %v2154
    %vm2157 = vcmask 1041408
    %v2158 = vsel %vm2157, %v2156, 0.0
    %2159 = vadd.xlane.f32.xlu0 %v2158
    %v2160 = vpop.xlane.xlu0 %2159
    %v2162 = vlaneseq
    %v2163 = vshrl.u32 %v2162, 7
    %v2164 = vsub.s32 0, %v2163
    %v2165 = vrot.slane %v2149, %v2164
    %v2167 = vadd.f32 %v2160, %v2165
    %v2168 = vmul.f32 %v1946, %v2154
    %v2169 = vsel %vm2157, %v2168, 0.0
    %2170 = vadd.xlane.f32.xlu0 %v2169
    %v2171 = vpop.xlane.xlu0 %2170
    %v2172 = vadd.f32 %v2171, %v2165
    %v2173 = vmax.f32 %v2167, %v2172
    %v2174 = vsub.f32 %v2167, %v2173
    %v2175 = vmul.f32 %v2174, 1.442695
    %v2176 = vpow.pop %v2175
    %v2177 = vsub.f32 %v2172, %v2173
    %v2178 = vmul.f32 %v2177, 1.442695
    %v2179 = vpow.pop %v2178
    %v2180 = vadd.f32 %v2176, %v2179
    %v2181 = vrcp.pop %v2180
    %v2182 = vmul.f32 %v2176, %v2181
    %2184 = vset.pattern.permute.xlu0 0
    %2185 = vperm.xlu0 %2184, %v2182
    %v2186 = vpop.permute.xlu0 %2185
    %v2188 = vmul.f32 %v1227, %v2186
    %v2189 = vmul.f32 %v2179, %v2181
    %2191 = vset.pattern.permute.xlu0 0
    %2192 = vperm.xlu0 %2191, %v2189
    %v2193 = vpop.permute.xlu0 %2192
    %v2195 = vmul.f32 %v2147, %v2193
    %v2196 = vadd.f32 %v2188, %v2195
    %2197 = vst [vmem:[#allocation18] sm:$0x3] %v2196
    // Predicated region
    $region86: #{tpu_custom_call.1} parent=1 // pred_check
      _
    $region87: #{tpu_custom_call.1} parent=1 // pred_check_branch
      %2199 = sbr.rel (0) target = $region89
    $region88: #{tpu_custom_call.1} parent=1 // pred_region
      %s2201 = ssub.s32 32, 32
      %2202 = vsyncadd [#allocation8], %s2201
      %s2204 = sshll.u32 [#allocation18], 4
      %s2205 = int_to_ptr.vmem [resolvable:$true] %s2204
      %2207 = dma.vmem_to_hbm [thread:$0]  %s2205, 32, %s14, [#allocation8]
    $region89: #{tpu_custom_call.1} parent=1 // pred_fallthru
      _
    // Predicated region
    $region90: #{tpu_custom_call.1} parent=1 // pred_check
      _
    $region91: #{tpu_custom_call.1} parent=1 // pred_check_branch
      %2209 = sbr.rel (0) target = $region93
    $region92: #{tpu_custom_call.1} parent=1 // pred_region
      %2210 = dma.done [#allocation8], 32
    $region93: #{tpu_custom_call.1} parent=1 // pred_fallthru
      _
    %2211 = vsyncpa [#allocation7], 1
    %2212 = vsyncpa [#allocation10], 1
    %2213 = vsyncpa [#allocation13], 1
    %2214 = vsyncpa [#allocation16], 1
    %2215 = vsyncpa [#allocation8], 1

</llo_original>
